<compile_context>
chip_gen: v7x
topology: tpu7x:2x2x1
jax: 0.10.0
libtpu: 0.0.40
codegen_flags: <defaults>
</compile_context>

<pallas_src>
import math
import functools

import numpy as np
import jax
import jax.numpy as jnp
from jax.experimental import pallas as pl
from jax.experimental.pallas import tpu as pltpu


def _sigmoid(x):
    # tanh-based logistic: uses the EUP, identical math in kernel and reference.
    return 0.5 * (jnp.tanh(0.5 * x) + 1.0)


def _cell_kernel(x_ref, h_ref, wurx_ref, wurh_ref, wqx_ref, wqh_ref,
                 w1_ref, w2_ref, wh_ref, vec_ref, out_ref, *,
                 batch_block, seq, hidden_dim, head_num, head_dim, eps, newton):
    f32 = jnp.float32
    Hd, hd, hn, S, BC = hidden_dim, head_dim, head_num, seq, batch_block

    xi = x_ref[...].astype(f32)            # [R, I]   flattened (chunk*S) rows
    xh = h_ref[...].astype(f32)            # [R, Hd]
    vec = vec_ref[...]                     # [9, 4Hd] packed bias/LN slab (one DMA)

    b_ur  = vec[0:1, :2 * Hd]
    b_qkv = vec[1:2, :3 * Hd]
    b1    = vec[2:3, :4 * Hd]
    b2    = vec[3:4, :Hd]
    g1    = vec[4:5, :Hd]
    be1   = vec[5:6, :Hd]
    g2    = vec[6:7, :Hd]
    be2   = vec[7:8, :Hd]
    bh    = vec[8:9, :Hd]

    # ---- GRU gates: split-weight form (== cat([x,h]) @ W_ur), no lane concat ----
    ur = (jnp.dot(xi, wurx_ref[...], preferred_element_type=f32)
          + jnp.dot(xh, wurh_ref[...], preferred_element_type=f32) + b_ur)        # [R, 2Hd]
    z = _sigmoid(ur[:, :Hd])
    r = _sigmoid(ur[:, Hd:2 * Hd])

    # ---- fused q|k|v projection of ix = cat[x, r*h], again via split weights ----
    p = (jnp.dot(xi, wqx_ref[...], preferred_element_type=f32)
         + jnp.dot(r * xh, wqh_ref[...], preferred_element_type=f32) + b_qkv)     # [R, 3Hd]

    # ---- multi-head attention: loop over heads only, batch over the chunk ----
    p3 = p.reshape(BC, S, 3 * Hd)          # leading-dim split only (layout preserving, S%8==0)
    inv_scale = 1.0 / math.sqrt(hd)
    parts = []
    for h in range(hn):                    # static unroll over heads (hn small)
        qh = p3[:, :, h * hd:(h + 1) * hd] * inv_scale                 # [BC, S, hd]
        kh = p3[:, :, Hd + h * hd:Hd + (h + 1) * hd]                   # [BC, S, hd]
        vh = p3[:, :, 2 * Hd + h * hd:2 * Hd + (h + 1) * hd]           # [BC, S, hd]

        # QK^T and attw.V via dot_general contraction specs — no transposes.
        s = jnp.einsum('bqd,bkd->bqk', qh, kh, preferred_element_type=f32)   # [BC, S, S]
        s = s - jnp.max(s, axis=-1, keepdims=True)
        e = jnp.exp(s)
        denom = jnp.sum(e, axis=-1, keepdims=True)
        rinv = pl.reciprocal(denom, approx=True)       # EUP slot (otherwise idle)
        if newton:
            rinv = rinv * (2.0 - denom * rinv)         # one Newton step -> f32 accuracy
        attw = e * rinv
        ctx_h = jnp.einsum('bqk,bkd->bqd', attw, vh, preferred_element_type=f32)  # [BC, S, hd]
        parts.append(ctx_h.reshape(BC * S, hd))
    ctx = jnp.concatenate(parts, axis=-1)              # [R, Hd]

    # ---- residual with pq, LayerNorm 1 ----
    xa = ctx + p[:, :Hd]
    mu = jnp.mean(xa, axis=-1, keepdims=True)
    var = jnp.mean((xa - mu) ** 2, axis=-1, keepdims=True)
    xa = (xa - mu) * jax.lax.rsqrt(var + eps) * g1 + be1

    # ---- feed-forward + residual + LayerNorm 2 (on the flattened [R, Hd] rows) ----
    hid = jnp.tanh(jnp.dot(xa, w1_ref[...], preferred_element_type=f32) + b1)
    ff = jnp.dot(hid, w2_ref[...], preferred_element_type=f32) + b2
    y = ff + xa
    mu2 = jnp.mean(y, axis=-1, keepdims=True)
    var2 = jnp.mean((y - mu2) ** 2, axis=-1, keepdims=True)
    y = (y - mu2) * jax.lax.rsqrt(var2 + eps) * g2 + be2

    # ---- candidate projection + GRU blend ----
    h_cand = jnp.tanh(jnp.dot(y, wh_ref[...], preferred_element_type=f32) + bh)
    out_ref[...] = ((1.0 - z) * xh + z * h_cand).astype(out_ref.dtype)


def state_graph_gru_cell(x, hx, params, *, head_num=4, eps=1e-5, batch_block=None,
                         approx_softmax_newton=True):
    """x: [B, S, input_dim], hx: [B, S, hidden_dim] -> h_next: [B, S, hidden_dim].

    batch_block: batches folded into one grid step. Default B (single grid step —
    best on the single-TensorCore v5e/v6e). On v7x pass batch_block=B//2 so the two
    "parallel" grid steps land on the two TensorCores.
    """
    B, S, I = x.shape
    Hd = hx.shape[-1]
    assert Hd % head_num == 0
    hd = Hd // head_num

    if batch_block is None:
        batch_block = B                     # single grid step by default
    assert B % batch_block == 0
    n_chunks = B // batch_block
    R = batch_block * S

    # Fuse + split weights once in the wrapper (trace-time, tiny):
    #   cat([x, h]) @ W  ==  x @ W[:I] + h @ W[I:]   — kills the in-kernel lane concats.
    w_ur = jnp.concatenate([params["wu"], params["wr"]], axis=1)                    # [Din, 2Hd]
    wqkv = jnp.concatenate([params["wq"], params["wk"], params["wv"]], axis=1)      # [Din, 3Hd]
    wur_x, wur_h = w_ur[:I], w_ur[I:]
    wqkv_x, wqkv_h = wqkv[:I], wqkv[I:]

    # Pack all small bias / LayerNorm vectors into one lane-dense slab -> one DMA.
    LW = 4 * Hd
    def row(v):
        v = v.reshape(1, -1)
        return jnp.pad(v, ((0, 0), (0, LW - v.shape[1])))
    vecs = jnp.concatenate([
        row(jnp.concatenate([params["bu"], params["br"]], axis=0)),                 # 0: b_ur
        row(jnp.concatenate([params["bq"], params["bk"], params["bv"]], axis=0)),   # 1: b_qkv
        row(params["b1"]),                                                          # 2
        row(params["b2"]),                                                          # 3
        row(params["g1"]),                                                          # 4
        row(params["be1"]),                                                         # 5
        row(params["g2"]),                                                          # 6
        row(params["be2"]),                                                         # 7
        row(params["bh"]),                                                          # 8
    ], axis=0)                                                                      # [9, 4Hd]

    x2d = x.reshape(B * S, I)
    h2d = hx.reshape(B * S, Hd)

    kern = functools.partial(_cell_kernel, batch_block=batch_block, seq=S,
                             hidden_dim=Hd, head_num=head_num, head_dim=hd, eps=eps,
                             newton=approx_softmax_newton)

    full = lambda shp: pl.BlockSpec(shp, lambda c: (0, 0))
    out2d = pl.pallas_call(
        kern,
        out_shape=jax.ShapeDtypeStruct((B * S, Hd), jnp.float32),
        grid=(n_chunks,),
        in_specs=[
            pl.BlockSpec((R, I), lambda c: (c, 0)),      # input rows for this chunk
            pl.BlockSpec((R, Hd), lambda c: (c, 0)),     # hidden rows for this chunk
            full((I, 2 * Hd)),                           # gate weights, x part
            full((Hd, 2 * Hd)),                          # gate weights, h part
            full((I, 3 * Hd)),                           # q|k|v weights, x part
            full((Hd, 3 * Hd)),                          # q|k|v weights, h part
            full((Hd, 4 * Hd)),                          # ff w1
            full((4 * Hd, Hd)),                          # ff w2
            full((Hd, Hd)),                              # proj_h weight
            full((9, LW)),                               # packed bias/LN slab
        ],
        out_specs=pl.BlockSpec((R, Hd), lambda c: (c, 0)),
        compiler_params=pltpu.CompilerParams(dimension_semantics=("parallel",)),
    )(x2d, h2d, wur_x, wur_h, wqkv_x, wqkv_h,
      params["w1"], params["w2"], params["wh"], vecs)
    return out2d.reshape(B, S, Hd)


def state_graph_gru_cell_ref(x, hx, params, *, head_num=4, eps=1e-5):
    """Pure-JAX reference mirroring the PyTorch forward (eval mode, mask=None)."""
    B, S, _ = x.shape
    Hd = hx.shape[-1]
    hd = Hd // head_num

    cat = jnp.concatenate([x, hx], axis=-1)
    z = _sigmoid(cat @ params["wu"] + params["bu"])
    r = _sigmoid(cat @ params["wr"] + params["br"])
    ix = jnp.concatenate([x, r * hx], axis=-1)

    pq = ix @ params["wq"] + params["bq"]
    pk = ix @ params["wk"] + params["bk"]
    pv = ix @ params["wv"] + params["bv"]

    def heads(t):
        return t.reshape(B, S, head_num, hd).transpose(0, 2, 1, 3)

    qh, kh, vh = heads(pq), heads(pk), heads(pv)
    s = jnp.einsum("bhqd,bhkd->bhqk", qh, kh) / math.sqrt(hd)
    s = s - jnp.max(s, axis=-1, keepdims=True)
    e = jnp.exp(s)
    att = e / jnp.sum(e, axis=-1, keepdims=True)
    ctx = jnp.einsum("bhqk,bhkd->bhqd", att, vh).transpose(0, 2, 1, 3).reshape(B, S, Hd)

    def ln(t, g, b):
        mu = jnp.mean(t, axis=-1, keepdims=True)
        var = jnp.mean((t - mu) ** 2, axis=-1, keepdims=True)
        return (t - mu) * jax.lax.rsqrt(var + eps) * g + b

    xa = ln(ctx + pq, params["g1"], params["be1"])
    ff = jnp.tanh(xa @ params["w1"] + params["b1"]) @ params["w2"] + params["b2"]
    xa = ln(ff + xa, params["g2"], params["be2"])
    h_cand = jnp.tanh(xa @ params["wh"] + params["bh"])
    return (1.0 - z) * hx + z * h_cand


if __name__ == "__main__":
    B, S = 4, 8                      # batch, entity_size
    input_dim, hidden_dim, head_num = 16, 32, 4
    Din = input_dim + hidden_dim

    key = jax.random.PRNGKey(0)
    stdv = 1.0 / math.sqrt(hidden_dim)   # mirrors reset_parameters (uniform(-stdv, stdv))

    shapes = {
        "wu": (Din, hidden_dim), "bu": (hidden_dim,),
        "wr": (Din, hidden_dim), "br": (hidden_dim,),
        "wq": (Din, hidden_dim), "bq": (hidden_dim,),
        "wk": (Din, hidden_dim), "bk": (hidden_dim,),
        "wv": (Din, hidden_dim), "bv": (hidden_dim,),
        "w1": (hidden_dim, 4 * hidden_dim), "b1": (4 * hidden_dim,),
        "w2": (4 * hidden_dim, hidden_dim), "b2": (hidden_dim,),
        "g1": (hidden_dim,), "be1": (hidden_dim,),
        "g2": (hidden_dim,), "be2": (hidden_dim,),
        "wh": (hidden_dim, hidden_dim), "bh": (hidden_dim,),
    }
    keys = jax.random.split(key, len(shapes) + 2)
    params = {name: jax.random.uniform(k, shp, jnp.float32, -stdv, stdv)
              for (name, shp), k in zip(shapes.items(), keys[:len(shapes)])}

    x = jax.random.normal(keys[-2], (B, S, input_dim), jnp.float32)
    hx = jax.random.normal(keys[-1], (B, S, hidden_dim), jnp.float32)

    h_next = state_graph_gru_cell(x, hx, params, head_num=head_num)
    jax.block_until_ready(h_next)

    h_ref = state_graph_gru_cell_ref(x, hx, params, head_num=head_num)
    np.testing.assert_allclose(np.asarray(h_next), np.asarray(h_ref), rtol=2e-4, atol=2e-4)

    print("KERNEL_OK")
</pallas_src>

<mosaic_0001>
module attributes {stable_mosaic.version = 11 : i64} {
  func.func @_cell_kernel(%arg0: i32, %arg1: memref<32x16xf32, #tpu.memory_space<vmem>>, %arg2: memref<32x32xf32, #tpu.memory_space<vmem>>, %arg3: memref<16x64xf32, #tpu.memory_space<vmem>>, %arg4: memref<32x64xf32, #tpu.memory_space<vmem>>, %arg5: memref<16x96xf32, #tpu.memory_space<vmem>>, %arg6: memref<32x96xf32, #tpu.memory_space<vmem>>, %arg7: memref<32x128xf32, #tpu.memory_space<vmem>>, %arg8: memref<128x32xf32, #tpu.memory_space<vmem>>, %arg9: memref<32x32xf32, #tpu.memory_space<vmem>>, %arg10: memref<9x128xf32, #tpu.memory_space<vmem>>, %arg11: memref<32x32xf32, #tpu.memory_space<vmem>>) attributes {dimension_semantics = [#tpu.dimension_semantics<parallel>], iteration_bounds = array<i64: 1>, scalar_prefetch = 0 : i64, scratch_operands = 0 : i64, tpu.core_type = #tpu.core_type<tc>, window_params = [{transform_indices = @transform_0, window_bounds = array<i64: 32, 16>}, {transform_indices = @transform_1, window_bounds = array<i64: 32, 32>}, {pipeline_mode = #tpu.pipeline_mode<synchronous>, transform_indices = @transform_2, window_bounds = array<i64: 16, 64>}, {pipeline_mode = #tpu.pipeline_mode<synchronous>, transform_indices = @transform_3, window_bounds = array<i64: 32, 64>}, {pipeline_mode = #tpu.pipeline_mode<synchronous>, transform_indices = @transform_4, window_bounds = array<i64: 16, 96>}, {pipeline_mode = #tpu.pipeline_mode<synchronous>, transform_indices = @transform_5, window_bounds = array<i64: 32, 96>}, {pipeline_mode = #tpu.pipeline_mode<synchronous>, transform_indices = @transform_6, window_bounds = array<i64: 32, 128>}, {pipeline_mode = #tpu.pipeline_mode<synchronous>, transform_indices = @transform_7, window_bounds = array<i64: 128, 32>}, {pipeline_mode = #tpu.pipeline_mode<synchronous>, transform_indices = @transform_8, window_bounds = array<i64: 32, 32>}, {pipeline_mode = #tpu.pipeline_mode<synchronous>, transform_indices = @transform_9, window_bounds = array<i64: 9, 128>}, {transform_indices = @transform_10, window_bounds = array<i64: 32, 32>}]} {
    %c0 = arith.constant 0 : index
    %c0_0 = arith.constant 0 : index
    %0 = vector.load %arg1[%c0, %c0_0] : memref<32x16xf32, #tpu.memory_space<vmem>>, vector<32x16xf32>
    %c0_1 = arith.constant 0 : index
    %c0_2 = arith.constant 0 : index
    %1 = vector.load %arg2[%c0_1, %c0_2] : memref<32x32xf32, #tpu.memory_space<vmem>>, vector<32x32xf32>
    %c0_3 = arith.constant 0 : index
    %c0_4 = arith.constant 0 : index
    %2 = vector.load %arg10[%c0_3, %c0_4] : memref<9x128xf32, #tpu.memory_space<vmem>>, vector<9x128xf32>
    %3 = vector.extract_strided_slice %2 {offsets = [0, 0], sizes = [1, 64], strides = [1, 1]} : vector<9x128xf32> to vector<1x64xf32>
    %4 = vector.extract_strided_slice %2 {offsets = [1, 0], sizes = [1, 96], strides = [1, 1]} : vector<9x128xf32> to vector<1x96xf32>
    %5 = vector.extract_strided_slice %2 {offsets = [2, 0], sizes = [1, 128], strides = [1, 1]} : vector<9x128xf32> to vector<1x128xf32>
    %6 = vector.extract_strided_slice %2 {offsets = [3, 0], sizes = [1, 32], strides = [1, 1]} : vector<9x128xf32> to vector<1x32xf32>
    %7 = vector.extract_strided_slice %2 {offsets = [4, 0], sizes = [1, 32], strides = [1, 1]} : vector<9x128xf32> to vector<1x32xf32>
    %8 = vector.extract_strided_slice %2 {offsets = [5, 0], sizes = [1, 32], strides = [1, 1]} : vector<9x128xf32> to vector<1x32xf32>
    %9 = vector.extract_strided_slice %2 {offsets = [6, 0], sizes = [1, 32], strides = [1, 1]} : vector<9x128xf32> to vector<1x32xf32>
    %10 = vector.extract_strided_slice %2 {offsets = [7, 0], sizes = [1, 32], strides = [1, 1]} : vector<9x128xf32> to vector<1x32xf32>
    %11 = vector.extract_strided_slice %2 {offsets = [8, 0], sizes = [1, 32], strides = [1, 1]} : vector<9x128xf32> to vector<1x32xf32>
    %c0_5 = arith.constant 0 : index
    %c0_6 = arith.constant 0 : index
    %12 = vector.load %arg3[%c0_5, %c0_6] : memref<16x64xf32, #tpu.memory_space<vmem>>, vector<16x64xf32>
    %cst = arith.constant dense<0.000000e+00> : vector<32x64xf32>
    %13 = tpu.matmul %0, %12, %cst {dimension_numbers = #tpu.dot_dimension_numbers<[1], [0], [0], [1], [0, 0, 1, 1], [], []>} : vector<32x16xf32>, vector<16x64xf32>, vector<32x64xf32> -> vector<32x64xf32>
    %c0_7 = arith.constant 0 : index
    %c0_8 = arith.constant 0 : index
    %14 = vector.load %arg4[%c0_7, %c0_8] : memref<32x64xf32, #tpu.memory_space<vmem>>, vector<32x64xf32>
    %cst_9 = arith.constant dense<0.000000e+00> : vector<32x64xf32>
    %15 = tpu.matmul %1, %14, %cst_9 {dimension_numbers = #tpu.dot_dimension_numbers<[1], [0], [0], [1], [0, 0, 1, 1], [], []>} : vector<32x32xf32>, vector<32x64xf32>, vector<32x64xf32> -> vector<32x64xf32>
    %16 = arith.addf %13, %15 : vector<32x64xf32>
    %17 = vector.broadcast %3 : vector<1x64xf32> to vector<32x64xf32>
    %18 = arith.addf %16, %17 : vector<32x64xf32>
    %19 = vector.extract_strided_slice %18 {offsets = [0, 0], sizes = [32, 32], strides = [1, 1]} : vector<32x64xf32> to vector<32x32xf32>
    %cst_10 = arith.constant 5.000000e-01 : f32
    %20 = vector.broadcast %cst_10 : f32 to vector<32x32xf32>
    %21 = arith.mulf %20, %19 : vector<32x32xf32>
    %22 = math.tanh %21 : vector<32x32xf32>
    %cst_11 = arith.constant 1.000000e+00 : f32
    %23 = vector.broadcast %cst_11 : f32 to vector<32x32xf32>
    %24 = arith.addf %22, %23 : vector<32x32xf32>
    %cst_12 = arith.constant 5.000000e-01 : f32
    %25 = vector.broadcast %cst_12 : f32 to vector<32x32xf32>
    %26 = arith.mulf %25, %24 : vector<32x32xf32>
    %27 = vector.extract_strided_slice %18 {offsets = [0, 32], sizes = [32, 32], strides = [1, 1]} : vector<32x64xf32> to vector<32x32xf32>
    %cst_13 = arith.constant 5.000000e-01 : f32
    %28 = vector.broadcast %cst_13 : f32 to vector<32x32xf32>
    %29 = arith.mulf %28, %27 : vector<32x32xf32>
    %30 = math.tanh %29 : vector<32x32xf32>
    %cst_14 = arith.constant 1.000000e+00 : f32
    %31 = vector.broadcast %cst_14 : f32 to vector<32x32xf32>
    %32 = arith.addf %30, %31 : vector<32x32xf32>
    %cst_15 = arith.constant 5.000000e-01 : f32
    %33 = vector.broadcast %cst_15 : f32 to vector<32x32xf32>
    %34 = arith.mulf %33, %32 : vector<32x32xf32>
    %c0_16 = arith.constant 0 : index
    %c0_17 = arith.constant 0 : index
    %35 = vector.load %arg5[%c0_16, %c0_17] : memref<16x96xf32, #tpu.memory_space<vmem>>, vector<16x96xf32>
    %cst_18 = arith.constant dense<0.000000e+00> : vector<32x96xf32>
    %36 = tpu.matmul %0, %35, %cst_18 {dimension_numbers = #tpu.dot_dimension_numbers<[1], [0], [0], [1], [0, 0, 1, 1], [], []>} : vector<32x16xf32>, vector<16x96xf32>, vector<32x96xf32> -> vector<32x96xf32>
    %37 = arith.mulf %34, %1 : vector<32x32xf32>
    %c0_19 = arith.constant 0 : index
    %c0_20 = arith.constant 0 : index
    %38 = vector.load %arg6[%c0_19, %c0_20] : memref<32x96xf32, #tpu.memory_space<vmem>>, vector<32x96xf32>
    %cst_21 = arith.constant dense<0.000000e+00> : vector<32x96xf32>
    %39 = tpu.matmul %37, %38, %cst_21 {dimension_numbers = #tpu.dot_dimension_numbers<[1], [0], [0], [1], [0, 0, 1, 1], [], []>} : vector<32x32xf32>, vector<32x96xf32>, vector<32x96xf32> -> vector<32x96xf32>
    %40 = arith.addf %36, %39 : vector<32x96xf32>
    %41 = vector.broadcast %4 : vector<1x96xf32> to vector<32x96xf32>
    %42 = arith.addf %40, %41 : vector<32x96xf32>
    %43 = vector.shape_cast %42 : vector<32x96xf32> to vector<4x8x96xf32>
    %44 = vector.extract_strided_slice %43 {offsets = [0, 0, 0], sizes = [4, 8, 8], strides = [1, 1, 1]} : vector<4x8x96xf32> to vector<4x8x8xf32>
    %cst_22 = arith.constant 0.353553385 : f32
    %45 = vector.broadcast %cst_22 : f32 to vector<4x8x8xf32>
    %46 = arith.mulf %44, %45 : vector<4x8x8xf32>
    %47 = vector.extract_strided_slice %43 {offsets = [0, 0, 32], sizes = [4, 8, 8], strides = [1, 1, 1]} : vector<4x8x96xf32> to vector<4x8x8xf32>
    %48 = vector.extract_strided_slice %43 {offsets = [0, 0, 64], sizes = [4, 8, 8], strides = [1, 1, 1]} : vector<4x8x96xf32> to vector<4x8x8xf32>
    "tpu.trace_start"() <{level = 10 : i32, message = "bqd,bkd->bqk"}> : () -> ()
    %cst_23 = arith.constant dense<0.000000e+00> : vector<4x8x8xf32>
    %49 = tpu.matmul %46, %47, %cst_23 {dimension_numbers = #tpu.dot_dimension_numbers<[2], [2], [1], [1], [0, 0, 0, 1, 1, 1], [0], [0]>} : vector<4x8x8xf32>, vector<4x8x8xf32>, vector<4x8x8xf32> -> vector<4x8x8xf32>
    "tpu.trace_stop"() : () -> ()
    %cst_24 = arith.constant dense<0xFF800000> : vector<4x8xf32>
    %50 = vector.multi_reduction <maximumf>, %49, %cst_24 [2] : vector<4x8x8xf32> to vector<4x8xf32>
    %51 = vector.shape_cast %50 : vector<4x8xf32> to vector<4x8x1xf32>
    %52 = vector.broadcast %51 : vector<4x8x1xf32> to vector<4x8x8xf32>
    %53 = arith.subf %49, %52 : vector<4x8x8xf32>
    %54 = math.exp %53 : vector<4x8x8xf32>
    %cst_25 = arith.constant dense<0.000000e+00> : vector<4x8xf32>
    %55 = vector.multi_reduction <add>, %54, %cst_25 [2] : vector<4x8x8xf32> to vector<4x8xf32>
    %56 = vector.shape_cast %55 : vector<4x8xf32> to vector<4x8x1xf32>
    %57 = tpu.reciprocal %56 {approx = true} : vector<4x8x1xf32> -> vector<4x8x1xf32>
    %58 = arith.mulf %56, %57 : vector<4x8x1xf32>
    %cst_26 = arith.constant 2.000000e+00 : f32
    %59 = vector.broadcast %cst_26 : f32 to vector<4x8x1xf32>
    %60 = arith.subf %59, %58 : vector<4x8x1xf32>
    %61 = arith.mulf %57, %60 : vector<4x8x1xf32>
    %62 = vector.broadcast %61 : vector<4x8x1xf32> to vector<4x8x8xf32>
    %63 = arith.mulf %54, %62 : vector<4x8x8xf32>
    "tpu.trace_start"() <{level = 10 : i32, message = "bqk,bkd->bqd"}> : () -> ()
    %cst_27 = arith.constant dense<0.000000e+00> : vector<4x8x8xf32>
    %64 = tpu.matmul %63, %48, %cst_27 {dimension_numbers = #tpu.dot_dimension_numbers<[2], [1], [1], [2], [0, 0, 0, 1, 1, 2], [0], [0]>} : vector<4x8x8xf32>, vector<4x8x8xf32>, vector<4x8x8xf32> -> vector<4x8x8xf32>
    "tpu.trace_stop"() : () -> ()
    %65 = vector.shape_cast %64 : vector<4x8x8xf32> to vector<32x8xf32>
    %66 = vector.extract_strided_slice %43 {offsets = [0, 0, 8], sizes = [4, 8, 8], strides = [1, 1, 1]} : vector<4x8x96xf32> to vector<4x8x8xf32>
    %cst_28 = arith.constant 0.353553385 : f32
    %67 = vector.broadcast %cst_28 : f32 to vector<4x8x8xf32>
    %68 = arith.mulf %66, %67 : vector<4x8x8xf32>
    %69 = vector.extract_strided_slice %43 {offsets = [0, 0, 40], sizes = [4, 8, 8], strides = [1, 1, 1]} : vector<4x8x96xf32> to vector<4x8x8xf32>
    %70 = vector.extract_strided_slice %43 {offsets = [0, 0, 72], sizes = [4, 8, 8], strides = [1, 1, 1]} : vector<4x8x96xf32> to vector<4x8x8xf32>
    "tpu.trace_start"() <{level = 10 : i32, message = "bqd,bkd->bqk"}> : () -> ()
    %cst_29 = arith.constant dense<0.000000e+00> : vector<4x8x8xf32>
    %71 = tpu.matmul %68, %69, %cst_29 {dimension_numbers = #tpu.dot_dimension_numbers<[2], [2], [1], [1], [0, 0, 0, 1, 1, 1], [0], [0]>} : vector<4x8x8xf32>, vector<4x8x8xf32>, vector<4x8x8xf32> -> vector<4x8x8xf32>
    "tpu.trace_stop"() : () -> ()
    %cst_30 = arith.constant dense<0xFF800000> : vector<4x8xf32>
    %72 = vector.multi_reduction <maximumf>, %71, %cst_30 [2] : vector<4x8x8xf32> to vector<4x8xf32>
    %73 = vector.shape_cast %72 : vector<4x8xf32> to vector<4x8x1xf32>
    %74 = vector.broadcast %73 : vector<4x8x1xf32> to vector<4x8x8xf32>
    %75 = arith.subf %71, %74 : vector<4x8x8xf32>
    %76 = math.exp %75 : vector<4x8x8xf32>
    %cst_31 = arith.constant dense<0.000000e+00> : vector<4x8xf32>
    %77 = vector.multi_reduction <add>, %76, %cst_31 [2] : vector<4x8x8xf32> to vector<4x8xf32>
    %78 = vector.shape_cast %77 : vector<4x8xf32> to vector<4x8x1xf32>
    %79 = tpu.reciprocal %78 {approx = true} : vector<4x8x1xf32> -> vector<4x8x1xf32>
    %80 = arith.mulf %78, %79 : vector<4x8x1xf32>
    %cst_32 = arith.constant 2.000000e+00 : f32
    %81 = vector.broadcast %cst_32 : f32 to vector<4x8x1xf32>
    %82 = arith.subf %81, %80 : vector<4x8x1xf32>
    %83 = arith.mulf %79, %82 : vector<4x8x1xf32>
    %84 = vector.broadcast %83 : vector<4x8x1xf32> to vector<4x8x8xf32>
    %85 = arith.mulf %76, %84 : vector<4x8x8xf32>
    "tpu.trace_start"() <{level = 10 : i32, message = "bqk,bkd->bqd"}> : () -> ()
    %cst_33 = arith.constant dense<0.000000e+00> : vector<4x8x8xf32>
    %86 = tpu.matmul %85, %70, %cst_33 {dimension_numbers = #tpu.dot_dimension_numbers<[2], [1], [1], [2], [0, 0, 0, 1, 1, 2], [0], [0]>} : vector<4x8x8xf32>, vector<4x8x8xf32>, vector<4x8x8xf32> -> vector<4x8x8xf32>
    "tpu.trace_stop"() : () -> ()
    %87 = vector.shape_cast %86 : vector<4x8x8xf32> to vector<32x8xf32>
    %88 = vector.extract_strided_slice %43 {offsets = [0, 0, 16], sizes = [4, 8, 8], strides = [1, 1, 1]} : vector<4x8x96xf32> to vector<4x8x8xf32>
    %cst_34 = arith.constant 0.353553385 : f32
    %89 = vector.broadcast %cst_34 : f32 to vector<4x8x8xf32>
    %90 = arith.mulf %88, %89 : vector<4x8x8xf32>
    %91 = vector.extract_strided_slice %43 {offsets = [0, 0, 48], sizes = [4, 8, 8], strides = [1, 1, 1]} : vector<4x8x96xf32> to vector<4x8x8xf32>
    %92 = vector.extract_strided_slice %43 {offsets = [0, 0, 80], sizes = [4, 8, 8], strides = [1, 1, 1]} : vector<4x8x96xf32> to vector<4x8x8xf32>
    "tpu.trace_start"() <{level = 10 : i32, message = "bqd,bkd->bqk"}> : () -> ()
    %cst_35 = arith.constant dense<0.000000e+00> : vector<4x8x8xf32>
    %93 = tpu.matmul %90, %91, %cst_35 {dimension_numbers = #tpu.dot_dimension_numbers<[2], [2], [1], [1], [0, 0, 0, 1, 1, 1], [0], [0]>} : vector<4x8x8xf32>, vector<4x8x8xf32>, vector<4x8x8xf32> -> vector<4x8x8xf32>
    "tpu.trace_stop"() : () -> ()
    %cst_36 = arith.constant dense<0xFF800000> : vector<4x8xf32>
    %94 = vector.multi_reduction <maximumf>, %93, %cst_36 [2] : vector<4x8x8xf32> to vector<4x8xf32>
    %95 = vector.shape_cast %94 : vector<4x8xf32> to vector<4x8x1xf32>
    %96 = vector.broadcast %95 : vector<4x8x1xf32> to vector<4x8x8xf32>
    %97 = arith.subf %93, %96 : vector<4x8x8xf32>
    %98 = math.exp %97 : vector<4x8x8xf32>
    %cst_37 = arith.constant dense<0.000000e+00> : vector<4x8xf32>
    %99 = vector.multi_reduction <add>, %98, %cst_37 [2] : vector<4x8x8xf32> to vector<4x8xf32>
    %100 = vector.shape_cast %99 : vector<4x8xf32> to vector<4x8x1xf32>
    %101 = tpu.reciprocal %100 {approx = true} : vector<4x8x1xf32> -> vector<4x8x1xf32>
    %102 = arith.mulf %100, %101 : vector<4x8x1xf32>
    %cst_38 = arith.constant 2.000000e+00 : f32
    %103 = vector.broadcast %cst_38 : f32 to vector<4x8x1xf32>
    %104 = arith.subf %103, %102 : vector<4x8x1xf32>
    %105 = arith.mulf %101, %104 : vector<4x8x1xf32>
    %106 = vector.broadcast %105 : vector<4x8x1xf32> to vector<4x8x8xf32>
    %107 = arith.mulf %98, %106 : vector<4x8x8xf32>
    "tpu.trace_start"() <{level = 10 : i32, message = "bqk,bkd->bqd"}> : () -> ()
    %cst_39 = arith.constant dense<0.000000e+00> : vector<4x8x8xf32>
    %108 = tpu.matmul %107, %92, %cst_39 {dimension_numbers = #tpu.dot_dimension_numbers<[2], [1], [1], [2], [0, 0, 0, 1, 1, 2], [0], [0]>} : vector<4x8x8xf32>, vector<4x8x8xf32>, vector<4x8x8xf32> -> vector<4x8x8xf32>
    "tpu.trace_stop"() : () -> ()
    %109 = vector.shape_cast %108 : vector<4x8x8xf32> to vector<32x8xf32>
    %110 = vector.extract_strided_slice %43 {offsets = [0, 0, 24], sizes = [4, 8, 8], strides = [1, 1, 1]} : vector<4x8x96xf32> to vector<4x8x8xf32>
    %cst_40 = arith.constant 0.353553385 : f32
    %111 = vector.broadcast %cst_40 : f32 to vector<4x8x8xf32>
    %112 = arith.mulf %110, %111 : vector<4x8x8xf32>
    %113 = vector.extract_strided_slice %43 {offsets = [0, 0, 56], sizes = [4, 8, 8], strides = [1, 1, 1]} : vector<4x8x96xf32> to vector<4x8x8xf32>
    %114 = vector.extract_strided_slice %43 {offsets = [0, 0, 88], sizes = [4, 8, 8], strides = [1, 1, 1]} : vector<4x8x96xf32> to vector<4x8x8xf32>
    "tpu.trace_start"() <{level = 10 : i32, message = "bqd,bkd->bqk"}> : () -> ()
    %cst_41 = arith.constant dense<0.000000e+00> : vector<4x8x8xf32>
    %115 = tpu.matmul %112, %113, %cst_41 {dimension_numbers = #tpu.dot_dimension_numbers<[2], [2], [1], [1], [0, 0, 0, 1, 1, 1], [0], [0]>} : vector<4x8x8xf32>, vector<4x8x8xf32>, vector<4x8x8xf32> -> vector<4x8x8xf32>
    "tpu.trace_stop"() : () -> ()
    %cst_42 = arith.constant dense<0xFF800000> : vector<4x8xf32>
    %116 = vector.multi_reduction <maximumf>, %115, %cst_42 [2] : vector<4x8x8xf32> to vector<4x8xf32>
    %117 = vector.shape_cast %116 : vector<4x8xf32> to vector<4x8x1xf32>
    %118 = vector.broadcast %117 : vector<4x8x1xf32> to vector<4x8x8xf32>
    %119 = arith.subf %115, %118 : vector<4x8x8xf32>
    %120 = math.exp %119 : vector<4x8x8xf32>
    %cst_43 = arith.constant dense<0.000000e+00> : vector<4x8xf32>
    %121 = vector.multi_reduction <add>, %120, %cst_43 [2] : vector<4x8x8xf32> to vector<4x8xf32>
    %122 = vector.shape_cast %121 : vector<4x8xf32> to vector<4x8x1xf32>
    %123 = tpu.reciprocal %122 {approx = true} : vector<4x8x1xf32> -> vector<4x8x1xf32>
    %124 = arith.mulf %122, %123 : vector<4x8x1xf32>
    %cst_44 = arith.constant 2.000000e+00 : f32
    %125 = vector.broadcast %cst_44 : f32 to vector<4x8x1xf32>
    %126 = arith.subf %125, %124 : vector<4x8x1xf32>
    %127 = arith.mulf %123, %126 : vector<4x8x1xf32>
    %128 = vector.broadcast %127 : vector<4x8x1xf32> to vector<4x8x8xf32>
    %129 = arith.mulf %120, %128 : vector<4x8x8xf32>
    "tpu.trace_start"() <{level = 10 : i32, message = "bqk,bkd->bqd"}> : () -> ()
    %cst_45 = arith.constant dense<0.000000e+00> : vector<4x8x8xf32>
    %130 = tpu.matmul %129, %114, %cst_45 {dimension_numbers = #tpu.dot_dimension_numbers<[2], [1], [1], [2], [0, 0, 0, 1, 1, 2], [0], [0]>} : vector<4x8x8xf32>, vector<4x8x8xf32>, vector<4x8x8xf32> -> vector<4x8x8xf32>
    "tpu.trace_stop"() : () -> ()
    %131 = vector.shape_cast %130 : vector<4x8x8xf32> to vector<32x8xf32>
    %132 = tpu.concatenate %65, %87, %109, %131 in 1 : vector<32x8xf32>, vector<32x8xf32>, vector<32x8xf32>, vector<32x8xf32> -> vector<32x32xf32>
    %133 = vector.extract_strided_slice %42 {offsets = [0, 0], sizes = [32, 32], strides = [1, 1]} : vector<32x96xf32> to vector<32x32xf32>
    %134 = arith.addf %132, %133 : vector<32x32xf32>
    %cst_46 = arith.constant dense<0.000000e+00> : vector<32xf32>
    %135 = vector.multi_reduction <add>, %134, %cst_46 [1] : vector<32x32xf32> to vector<32xf32>
    %136 = vector.shape_cast %135 : vector<32xf32> to vector<32x1xf32>
    %cst_47 = arith.constant 3.200000e+01 : f32
    %137 = vector.broadcast %cst_47 : f32 to vector<32x1xf32>
    %138 = arith.divf %136, %137 : vector<32x1xf32>
    %139 = vector.broadcast %138 : vector<32x1xf32> to vector<32x32xf32>
    %140 = arith.subf %134, %139 : vector<32x32xf32>
    %141 = arith.mulf %140, %140 : vector<32x32xf32>
    %cst_48 = arith.constant dense<0.000000e+00> : vector<32xf32>
    %142 = vector.multi_reduction <add>, %141, %cst_48 [1] : vector<32x32xf32> to vector<32xf32>
    %143 = vector.shape_cast %142 : vector<32xf32> to vector<32x1xf32>
    %cst_49 = arith.constant 3.200000e+01 : f32
    %144 = vector.broadcast %cst_49 : f32 to vector<32x1xf32>
    %145 = arith.divf %143, %144 : vector<32x1xf32>
    %146 = vector.broadcast %138 : vector<32x1xf32> to vector<32x32xf32>
    %147 = arith.subf %134, %146 : vector<32x32xf32>
    %cst_50 = arith.constant 9.99999974E-6 : f32
    %148 = vector.broadcast %cst_50 : f32 to vector<32x1xf32>
    %149 = arith.addf %145, %148 : vector<32x1xf32>
    %150 = math.rsqrt %149 : vector<32x1xf32>
    %151 = vector.broadcast %150 : vector<32x1xf32> to vector<32x32xf32>
    %152 = arith.mulf %147, %151 : vector<32x32xf32>
    %153 = vector.broadcast %7 : vector<1x32xf32> to vector<32x32xf32>
    %154 = arith.mulf %152, %153 : vector<32x32xf32>
    %155 = vector.broadcast %8 : vector<1x32xf32> to vector<32x32xf32>
    %156 = arith.addf %154, %155 : vector<32x32xf32>
    %c0_51 = arith.constant 0 : index
    %c0_52 = arith.constant 0 : index
    %157 = vector.load %arg7[%c0_51, %c0_52] : memref<32x128xf32, #tpu.memory_space<vmem>>, vector<32x128xf32>
    %cst_53 = arith.constant dense<0.000000e+00> : vector<32x128xf32>
    %158 = tpu.matmul %156, %157, %cst_53 {dimension_numbers = #tpu.dot_dimension_numbers<[1], [0], [0], [1], [0, 0, 1, 1], [], []>} : vector<32x32xf32>, vector<32x128xf32>, vector<32x128xf32> -> vector<32x128xf32>
    %159 = vector.broadcast %5 : vector<1x128xf32> to vector<32x128xf32>
    %160 = arith.addf %158, %159 : vector<32x128xf32>
    %161 = math.tanh %160 : vector<32x128xf32>
    %c0_54 = arith.constant 0 : index
    %c0_55 = arith.constant 0 : index
    %162 = vector.load %arg8[%c0_54, %c0_55] : memref<128x32xf32, #tpu.memory_space<vmem>>, vector<128x32xf32>
    %cst_56 = arith.constant dense<0.000000e+00> : vector<32x32xf32>
    %163 = tpu.matmul %161, %162, %cst_56 {dimension_numbers = #tpu.dot_dimension_numbers<[1], [0], [0], [1], [0, 0, 1, 1], [], []>} : vector<32x128xf32>, vector<128x32xf32>, vector<32x32xf32> -> vector<32x32xf32>
    %164 = vector.broadcast %6 : vector<1x32xf32> to vector<32x32xf32>
    %165 = arith.addf %163, %164 : vector<32x32xf32>
    %166 = arith.addf %165, %156 : vector<32x32xf32>
    %cst_57 = arith.constant dense<0.000000e+00> : vector<32xf32>
    %167 = vector.multi_reduction <add>, %166, %cst_57 [1] : vector<32x32xf32> to vector<32xf32>
    %168 = vector.shape_cast %167 : vector<32xf32> to vector<32x1xf32>
    %cst_58 = arith.constant 3.200000e+01 : f32
    %169 = vector.broadcast %cst_58 : f32 to vector<32x1xf32>
    %170 = arith.divf %168, %169 : vector<32x1xf32>
    %171 = vector.broadcast %170 : vector<32x1xf32> to vector<32x32xf32>
    %172 = arith.subf %166, %171 : vector<32x32xf32>
    %173 = arith.mulf %172, %172 : vector<32x32xf32>
    %cst_59 = arith.constant dense<0.000000e+00> : vector<32xf32>
    %174 = vector.multi_reduction <add>, %173, %cst_59 [1] : vector<32x32xf32> to vector<32xf32>
    %175 = vector.shape_cast %174 : vector<32xf32> to vector<32x1xf32>
    %cst_60 = arith.constant 3.200000e+01 : f32
    %176 = vector.broadcast %cst_60 : f32 to vector<32x1xf32>
    %177 = arith.divf %175, %176 : vector<32x1xf32>
    %178 = vector.broadcast %170 : vector<32x1xf32> to vector<32x32xf32>
    %179 = arith.subf %166, %178 : vector<32x32xf32>
    %cst_61 = arith.constant 9.99999974E-6 : f32
    %180 = vector.broadcast %cst_61 : f32 to vector<32x1xf32>
    %181 = arith.addf %177, %180 : vector<32x1xf32>
    %182 = math.rsqrt %181 : vector<32x1xf32>
    %183 = vector.broadcast %182 : vector<32x1xf32> to vector<32x32xf32>
    %184 = arith.mulf %179, %183 : vector<32x32xf32>
    %185 = vector.broadcast %9 : vector<1x32xf32> to vector<32x32xf32>
    %186 = arith.mulf %184, %185 : vector<32x32xf32>
    %187 = vector.broadcast %10 : vector<1x32xf32> to vector<32x32xf32>
    %188 = arith.addf %186, %187 : vector<32x32xf32>
    %c0_62 = arith.constant 0 : index
    %c0_63 = arith.constant 0 : index
    %189 = vector.load %arg9[%c0_62, %c0_63] : memref<32x32xf32, #tpu.memory_space<vmem>>, vector<32x32xf32>
    %cst_64 = arith.constant dense<0.000000e+00> : vector<32x32xf32>
    %190 = tpu.matmul %188, %189, %cst_64 {dimension_numbers = #tpu.dot_dimension_numbers<[1], [0], [0], [1], [0, 0, 1, 1], [], []>} : vector<32x32xf32>, vector<32x32xf32>, vector<32x32xf32> -> vector<32x32xf32>
    %191 = vector.broadcast %11 : vector<1x32xf32> to vector<32x32xf32>
    %192 = arith.addf %190, %191 : vector<32x32xf32>
    %193 = math.tanh %192 : vector<32x32xf32>
    %cst_65 = arith.constant 1.000000e+00 : f32
    %194 = vector.broadcast %cst_65 : f32 to vector<32x32xf32>
    %195 = arith.subf %194, %26 : vector<32x32xf32>
    %196 = arith.mulf %195, %1 : vector<32x32xf32>
    %197 = arith.mulf %26, %193 : vector<32x32xf32>
    %198 = arith.addf %196, %197 : vector<32x32xf32>
    %c0_66 = arith.constant 0 : index
    %c0_67 = arith.constant 0 : index
    %199 = vector.load %arg11[%c0_66, %c0_67] : memref<32x32xf32, #tpu.memory_space<vmem>>, vector<32x32xf32>
    tpu.vector_store %arg11[%c0_66, %c0_67], %198 {strides = array<i32>} : memref<32x32xf32, #tpu.memory_space<vmem>>, vector<32x32xf32>,
    return
  }
  func.func @transform_0(%arg0: i32) -> (i32, i32) {
    %c0_i32 = arith.constant 0 : i32
    %c0_i32_0 = arith.constant 0 : i32
    return %arg0, %c0_i32 : i32, i32
  }
  func.func @transform_1(%arg0: i32) -> (i32, i32) {
    %c0_i32 = arith.constant 0 : i32
    %c0_i32_0 = arith.constant 0 : i32
    return %arg0, %c0_i32 : i32, i32
  }
  func.func @transform_2(%arg0: i32) -> (i32, i32) {
    %c0_i32 = arith.constant 0 : i32
    %c0_i32_0 = arith.constant 0 : i32
    %c0_i32_1 = arith.constant 0 : i32
    return %c0_i32, %c0_i32_0 : i32, i32
  }
  func.func @transform_3(%arg0: i32) -> (i32, i32) {
    %c0_i32 = arith.constant 0 : i32
    %c0_i32_0 = arith.constant 0 : i32
    %c0_i32_1 = arith.constant 0 : i32
    return %c0_i32, %c0_i32_0 : i32, i32
  }
  func.func @transform_4(%arg0: i32) -> (i32, i32) {
    %c0_i32 = arith.constant 0 : i32
    %c0_i32_0 = arith.constant 0 : i32
    %c0_i32_1 = arith.constant 0 : i32
    return %c0_i32, %c0_i32_0 : i32, i32
  }
  func.func @transform_5(%arg0: i32) -> (i32, i32) {
    %c0_i32 = arith.constant 0 : i32
    %c0_i32_0 = arith.constant 0 : i32
    %c0_i32_1 = arith.constant 0 : i32
    return %c0_i32, %c0_i32_0 : i32, i32
  }
  func.func @transform_6(%arg0: i32) -> (i32, i32) {
    %c0_i32 = arith.constant 0 : i32
    %c0_i32_0 = arith.constant 0 : i32
    %c0_i32_1 = arith.constant 0 : i32
    return %c0_i32, %c0_i32_0 : i32, i32
  }
  func.func @transform_7(%arg0: i32) -> (i32, i32) {
    %c0_i32 = arith.constant 0 : i32
    %c0_i32_0 = arith.constant 0 : i32
    %c0_i32_1 = arith.constant 0 : i32
    return %c0_i32, %c0_i32_0 : i32, i32
  }
  func.func @transform_8(%arg0: i32) -> (i32, i32) {
    %c0_i32 = arith.constant 0 : i32
    %c0_i32_0 = arith.constant 0 : i32
    %c0_i32_1 = arith.constant 0 : i32
    return %c0_i32, %c0_i32_0 : i32, i32
  }
  func.func @transform_9(%arg0: i32) -> (i32, i32) {
    %c0_i32 = arith.constant 0 : i32
    %c0_i32_0 = arith.constant 0 : i32
    %c0_i32_1 = arith.constant 0 : i32
    return %c0_i32, %c0_i32_0 : i32, i32
  }
  func.func @transform_10(%arg0: i32) -> (i32, i32) {
    %c0_i32 = arith.constant 0 : i32
    %c0_i32_0 = arith.constant 0 : i32
    return %arg0, %c0_i32 : i32, i32
  }
}

</mosaic_0001>

<llo_original>
// kernel: tpu_custom_call.1
$region0: #{tpu_custom_call.1}
  #allocation0 [shape = 'u32[]', space=smem, size = 0x4, offset = 0x4, fixed_abs, tag = 'smem constant byte address 0x4 - core index']
  #allocation1 [shape = 'u32[144,128]{1,0:T(1,128)}', space=vmem, size = 0x12000, scoped, tag = 'internal scratch']
  %s0 = inlined_call_operand.vmem [shape: f32[32,16], index: 0, kind: input, shape index: {}]
  %s1 = inlined_call_operand.vmem [shape: f32[32,32], index: 1, kind: input, shape index: {}]
  %s2 = inlined_call_operand.vmem [shape: f32[16,64], index: 2, kind: input, shape index: {}]
  %s3 = inlined_call_operand.vmem [shape: f32[32,64], index: 3, kind: input, shape index: {}]
  %s4 = inlined_call_operand.hbm [shape: f32[16,96], index: 4, kind: input, shape index: {}]
  %s5 = inlined_call_operand.vmem [shape: f32[32,96], index: 5, kind: input, shape index: {}]
  %s6 = inlined_call_operand.vmem [shape: f32[32,128], index: 6, kind: input, shape index: {}]
  %s7 = inlined_call_operand.vmem [shape: f32[128,32], index: 7, kind: input, shape index: {}]
  %s8 = inlined_call_operand.vmem [shape: f32[32,32], index: 8, kind: input, shape index: {}]
  %s9 = inlined_call_operand.vmem [shape: f32[9,128], index: 9, kind: input, shape index: {}]
  %s10 = inlined_call_operand.hbm [shape: f32[32,32], index: 10, kind: output, shape index: {}]
  %s11 = sld [smem:[#allocation0]]
  $region54: #{tpu_custom_call.1} parent=0
    _
  %s13 = ssub.s32 1, %s11
  %s14 = scalar_select 0, %s13, %s11
  $region1: #{tpu_custom_call.1} parent=0
    #allocation2 [shape = 'u8[8192]{0}', space=vmem, size = 0x2000, scoped, tag = 'input window, operand 4, single buffered']
    #allocation3 [shape = 's32[1]{0}', space=sflag, size = 0x4, scoped, tag = 'scoped memory for tpu_custom_call.1']
    #allocation4 [shape = 's32[1]{0}', space=sflag, size = 0x4, scoped, tag = 'scoped memory for tpu_custom_call.1']
    #allocation5 [shape = 'u8[16384]{0}', space=vmem, size = 0x4000, scoped, tag = 'output window, operand 0, single buffered']
    %15 = vsyncpa [#allocation3], 0
    %16 = vsyncpa [#allocation4], 0
    // Predicated region
    $region2: #{tpu_custom_call.1} parent=1 // pred_check
      _
    $region3: #{tpu_custom_call.1} parent=1 // pred_check_branch
      %18 = sbr.rel (0) target = $region5
    $region4: #{tpu_custom_call.1} parent=1 // pred_region
      _
    $region5: #{tpu_custom_call.1} parent=1 // pred_fallthru
      _
    // Predicated region
    $region6: #{tpu_custom_call.1} parent=1 // pred_check
      _
    $region7: #{tpu_custom_call.1} parent=1 // pred_check_branch
      %20 = sbr.rel (0) target = $region9
    $region8: #{tpu_custom_call.1} parent=1 // pred_region
      _
    $region9: #{tpu_custom_call.1} parent=1 // pred_fallthru
      _
    // Predicated region
    $region10: #{tpu_custom_call.1} parent=1 // pred_check
      _
    $region11: #{tpu_custom_call.1} parent=1 // pred_check_branch
      %22 = sbr.rel (0) target = $region13
    $region12: #{tpu_custom_call.1} parent=1 // pred_region
      _
    $region13: #{tpu_custom_call.1} parent=1 // pred_fallthru
      _
    // Predicated region
    $region14: #{tpu_custom_call.1} parent=1 // pred_check
      _
    $region15: #{tpu_custom_call.1} parent=1 // pred_check_branch
      %24 = sbr.rel (0) target = $region17
    $region16: #{tpu_custom_call.1} parent=1 // pred_region
      _
    $region17: #{tpu_custom_call.1} parent=1 // pred_fallthru
      _
    // Predicated region
    $region18: #{tpu_custom_call.1} parent=1 // pred_check
      _
    $region19: #{tpu_custom_call.1} parent=1 // pred_check_branch
      %26 = sbr.rel (0) target = $region21
    $region20: #{tpu_custom_call.1} parent=1 // pred_region
      %s28 = ssub.s32 256, 256
      %29 = vsyncadd [#allocation3], %s28
      %s30 = sshll.u32 [#allocation2], 4
      %s31 = int_to_ptr.vmem [resolvable:$true] %s30
      %36 = dma.hbm_to_vmem [thread:$0]  %s4, 256, %s31, [#allocation3], 128, 128, 8
    $region21: #{tpu_custom_call.1} parent=1 // pred_fallthru
      _
    // Predicated region
    $region22: #{tpu_custom_call.1} parent=1 // pred_check
      _
    $region23: #{tpu_custom_call.1} parent=1 // pred_check_branch
      %38 = sbr.rel (0) target = $region25
    $region24: #{tpu_custom_call.1} parent=1 // pred_region
      _
    $region25: #{tpu_custom_call.1} parent=1 // pred_fallthru
      _
    // Predicated region
    $region26: #{tpu_custom_call.1} parent=1 // pred_check
      _
    $region27: #{tpu_custom_call.1} parent=1 // pred_check_branch
      %40 = sbr.rel (0) target = $region29
    $region28: #{tpu_custom_call.1} parent=1 // pred_region
      _
    $region29: #{tpu_custom_call.1} parent=1 // pred_fallthru
      _
    // Predicated region
    $region30: #{tpu_custom_call.1} parent=1 // pred_check
      _
    $region31: #{tpu_custom_call.1} parent=1 // pred_check_branch
      %42 = sbr.rel (0) target = $region33
    $region32: #{tpu_custom_call.1} parent=1 // pred_region
      _
    $region33: #{tpu_custom_call.1} parent=1 // pred_fallthru
      _
    // Predicated region
    $region34: #{tpu_custom_call.1} parent=1 // pred_check
      _
    $region35: #{tpu_custom_call.1} parent=1 // pred_check_branch
      %44 = sbr.rel (0) target = $region37
    $region36: #{tpu_custom_call.1} parent=1 // pred_region
      _
    $region37: #{tpu_custom_call.1} parent=1 // pred_fallthru
      _
    // Predicated region
    $region38: #{tpu_custom_call.1} parent=1 // pred_check
      _
    $region39: #{tpu_custom_call.1} parent=1 // pred_check_branch
      %46 = sbr.rel (0) target = $region41
    $region40: #{tpu_custom_call.1} parent=1 // pred_region
      _
    $region41: #{tpu_custom_call.1} parent=1 // pred_fallthru
      _
    // Predicated region
    $region42: #{tpu_custom_call.1} parent=1 // pred_check
      _
    $region43: #{tpu_custom_call.1} parent=1 // pred_check_branch
      %48 = sbr.rel (0) target = $region45
    $region44: #{tpu_custom_call.1} parent=1 // pred_region
      %49 = dma.done [#allocation3], 256
    $region45: #{tpu_custom_call.1} parent=1 // pred_fallthru
      _
    %v50 = vld [vmem:[%s0] sm:$0xff]
    %v51 = vld [vmem:[%s0 + $0x8] sm:$0xff]
    %v52 = vld [vmem:[%s0 + $0x10] sm:$0xff]
    %v53 = vld [vmem:[%s0 + $0x18] sm:$0xff]
    %v54 = vld [vmem:[%s1] sm:$0xff]
    %v55 = vld [vmem:[%s1 + $0x8] sm:$0xff]
    %v56 = vld [vmem:[%s1 + $0x10] sm:$0xff]
    %v57 = vld [vmem:[%s1 + $0x18] sm:$0xff]
    %v58 = vld [vmem:[%s9] sm:$0xff]
    %v59 = vld [vmem:[%s9 + $0x8] sm:$0x1]
    %v60 = vld [vmem:[%s2] sm:$0xff]
    %v61 = vld [vmem:[%s2 + $0x8] sm:$0xff]
    %v62 = vld [vmem:[%s3] sm:$0xff]
    %v63 = vld [vmem:[%s3 + $0x8] sm:$0xff]
    %v64 = vld [vmem:[%s3 + $0x10] sm:$0xff]
    %v65 = vld [vmem:[%s3 + $0x18] sm:$0xff]
    %vm66 = vcmask 261120
    %v68 = vsel %vm66, %v54, 0
    %v71 = vsel %vm66, %v55, 0
    %v74 = vsel %vm66, %v56, 0
    %v77 = vsel %vm66, %v57, 0
    %79 = vmatprep.subr.mxu0 0.0
    %80 = vmatpush1.msra.mxu0 %v62
    %81 = vmatprep.subr.mxu0 0.0
    %82 = vmatpush1.msra.mxu0 %v63
    %83 = vmatprep.subr.mxu0 0.0
    %84 = vmatpush1.msra.mxu0 %v64
    %85 = vmatprep.subr.mxu0 0.0
    %86 = vmatpush1.msra.mxu0 %v65
    %87 = vmatprep.subr.mxu0 0.0
    %88 = vmatpush1.msra.mxu0 0.0
    %89 = vmatprep.subr.mxu0 0.0
    %90 = vmatpush1.msra.mxu0 0.0
    %91 = vmatprep.subr.mxu0 0.0
    %92 = vmatpush1.msra.mxu0 0.0
    %93 = vmatprep.subr.mxu0 0.0
    %94 = vmatpush1.msra.mxu0 0.0
    %95 = vmatprep.subr.mxu0 0.0
    %96 = vmatpush1.msra.mxu0 0.0
    %97 = vmatprep.subr.mxu0 0.0
    %98 = vmatpush1.msra.mxu0 0.0
    %99 = vmatprep.subr.mxu0 0.0
    %100 = vmatpush1.msra.mxu0 0.0
    %101 = vmatprep.subr.mxu0 0.0
    %102 = vmatpush1.msra.mxu0 0.0
    %103 = vmatprep.subr.mxu0 0.0
    %104 = vmatpush1.msra.mxu0 0.0
    %105 = vmatprep.subr.mxu0 0.0
    %106 = vmatpush1.msra.mxu0 0.0
    %107 = vmatprep.subr.mxu0 0.0
    %108 = vmatpush1.msra.mxu0 0.0
    %109 = vmatprep.subr.mxu0 0.0
    %110 = vmatpush1.msra.mxu0 0.0
    %111 = vmatprep.subr.mxu0 0.0
    %112 = vmatpush1.msra.mxu0 0.0
    %113 = vmatprep.subr.mxu0 0.0
    %114 = vmatpush1.msra.mxu0 0.0
    %115 = vmatprep.subr.mxu0 0.0
    %116 = vmatpush1.msra.mxu0 0.0
    %117 = vmatprep.subr.mxu0 0.0
    %118 = vmatpush1.msra.mxu0 0.0
    %119 = vmatprep.subr.mxu0 0.0
    %120 = vmatpush1.msra.mxu0 0.0
    %121 = vmatprep.subr.mxu0 0.0
    %122 = vmatpush1.msra.mxu0 0.0
    %123 = vmatprep.subr.mxu0 0.0
    %124 = vmatpush1.msra.mxu0 0.0
    %125 = vmatprep.subr.mxu0 0.0
    %126 = vmatpush1.msra.mxu0 0.0
    %127 = vmatprep.subr.mxu0 0.0
    %128 = vmatpush1.msra.mxu0 0.0
    %129 = vmatprep.subr.mxu0 0.0
    %130 = vmatpush1.msra.mxu0 0.0
    %131 = vmatprep.subr.mxu0 0.0
    %132 = vmatpush1.msra.mxu0 0.0
    %133 = vmatprep.subr.mxu0 0.0
    %134 = vmatpush1.msra.mxu0 0.0
    %135 = vmatprep.subr.mxu0 0.0
    %136 = vmatpush1.msra.mxu0 0.0
    %137 = vmatprep.subr.mxu0 0.0
    %138 = vmatpush1.msra.mxu0 0.0
    %139 = vmatprep.subr.mxu0 0.0
    %140 = vmatpush1.msra.mxu0 0.0
    %141 = vmatprep.subr.mxu0 0.0
    %142 = vmatpush1.msra.mxu0 0.0
    %143 = vmatprep.mubr.f32.mxu0 0.0
    %144 = vmatmul.mubr.f32.gmra.mrb[0].mxu0 %v68
    %v145 = vpop.f32.mrb[0].mxu0
    %v146 = vadd.f32 0.0, %v145
    %v147 = vpop.f32.mrb[0].mxu0
    %148 = vmatprep.mubr.f32.mxu0 0.0
    %149 = vmatmul.mubr.f32.gmra.mrb[0].mxu0 %v71
    %v150 = vpop.f32.mrb[0].mxu0
    %v151 = vadd.f32 0.0, %v150
    %v152 = vpop.f32.mrb[0].mxu0
    %153 = vmatprep.mubr.f32.mxu0 0.0
    %154 = vmatmul.mubr.f32.gmra.mrb[0].mxu0 %v74
    %v155 = vpop.f32.mrb[0].mxu0
    %v156 = vadd.f32 0.0, %v155
    %v157 = vpop.f32.mrb[0].mxu0
    %158 = vmatprep.mubr.f32.mxu0 0.0
    %159 = vmatmul.mubr.f32.gmra.mrb[0].mxu0 %v77
    %v160 = vpop.f32.mrb[0].mxu0
    %v161 = vadd.f32 0.0, %v160
    %v162 = vpop.f32.mrb[0].mxu0
    %163 = vdwg.mxu0
    %vm164 = vcmask 130048
    %v166 = vsel %vm164, %v50, 0
    %v169 = vsel %vm164, %v51, 0
    %v172 = vsel %vm164, %v52, 0
    %v175 = vsel %vm164, %v53, 0
    %177 = vmatprep.subr.mxu0 0.0
    %178 = vmatpush1.msra.mxu0 %v60
    %179 = vmatprep.subr.mxu0 0.0
    %180 = vmatpush1.msra.mxu0 %v61
    %181 = vmatprep.subr.mxu0 0.0
    %182 = vmatpush1.msra.mxu0 0.0
    %183 = vmatprep.subr.mxu0 0.0
    %184 = vmatpush1.msra.mxu0 0.0
    %185 = vmatprep.subr.mxu0 0.0
    %186 = vmatpush1.msra.mxu0 0.0
    %187 = vmatprep.subr.mxu0 0.0
    %188 = vmatpush1.msra.mxu0 0.0
    %189 = vmatprep.subr.mxu0 0.0
    %190 = vmatpush1.msra.mxu0 0.0
    %191 = vmatprep.subr.mxu0 0.0
    %192 = vmatpush1.msra.mxu0 0.0
    %193 = vmatprep.subr.mxu0 0.0
    %194 = vmatpush1.msra.mxu0 0.0
    %195 = vmatprep.subr.mxu0 0.0
    %196 = vmatpush1.msra.mxu0 0.0
    %197 = vmatprep.subr.mxu0 0.0
    %198 = vmatpush1.msra.mxu0 0.0
    %199 = vmatprep.subr.mxu0 0.0
    %200 = vmatpush1.msra.mxu0 0.0
    %201 = vmatprep.subr.mxu0 0.0
    %202 = vmatpush1.msra.mxu0 0.0
    %203 = vmatprep.subr.mxu0 0.0
    %204 = vmatpush1.msra.mxu0 0.0
    %205 = vmatprep.subr.mxu0 0.0
    %206 = vmatpush1.msra.mxu0 0.0
    %207 = vmatprep.subr.mxu0 0.0
    %208 = vmatpush1.msra.mxu0 0.0
    %209 = vmatprep.subr.mxu0 0.0
    %210 = vmatpush1.msra.mxu0 0.0
    %211 = vmatprep.subr.mxu0 0.0
    %212 = vmatpush1.msra.mxu0 0.0
    %213 = vmatprep.subr.mxu0 0.0
    %214 = vmatpush1.msra.mxu0 0.0
    %215 = vmatprep.subr.mxu0 0.0
    %216 = vmatpush1.msra.mxu0 0.0
    %217 = vmatprep.subr.mxu0 0.0
    %218 = vmatpush1.msra.mxu0 0.0
    %219 = vmatprep.subr.mxu0 0.0
    %220 = vmatpush1.msra.mxu0 0.0
    %221 = vmatprep.subr.mxu0 0.0
    %222 = vmatpush1.msra.mxu0 0.0
    %223 = vmatprep.subr.mxu0 0.0
    %224 = vmatpush1.msra.mxu0 0.0
    %225 = vmatprep.subr.mxu0 0.0
    %226 = vmatpush1.msra.mxu0 0.0
    %227 = vmatprep.subr.mxu0 0.0
    %228 = vmatpush1.msra.mxu0 0.0
    %229 = vmatprep.subr.mxu0 0.0
    %230 = vmatpush1.msra.mxu0 0.0
    %231 = vmatprep.subr.mxu0 0.0
    %232 = vmatpush1.msra.mxu0 0.0
    %233 = vmatprep.subr.mxu0 0.0
    %234 = vmatpush1.msra.mxu0 0.0
    %235 = vmatprep.subr.mxu0 0.0
    %236 = vmatpush1.msra.mxu0 0.0
    %237 = vmatprep.subr.mxu0 0.0
    %238 = vmatpush1.msra.mxu0 0.0
    %239 = vmatprep.subr.mxu0 0.0
    %240 = vmatpush1.msra.mxu0 0.0
    %241 = vmatprep.mubr.f32.mxu0 0.0
    %242 = vmatmul.mubr.f32.gmra.mrb[0].mxu0 %v166
    %v243 = vpop.f32.mrb[0].mxu0
    %v244 = vadd.f32 %v146, %v243
    %v245 = vpop.f32.mrb[0].mxu0
    %246 = vmatprep.mubr.f32.mxu0 0.0
    %247 = vmatmul.mubr.f32.gmra.mrb[0].mxu0 %v169
    %v248 = vpop.f32.mrb[0].mxu0
    %v249 = vadd.f32 %v151, %v248
    %v250 = vpop.f32.mrb[0].mxu0
    %251 = vmatprep.mubr.f32.mxu0 0.0
    %252 = vmatmul.mubr.f32.gmra.mrb[0].mxu0 %v172
    %v253 = vpop.f32.mrb[0].mxu0
    %v254 = vadd.f32 %v156, %v253
    %v255 = vpop.f32.mrb[0].mxu0
    %256 = vmatprep.mubr.f32.mxu0 0.0
    %257 = vmatmul.mubr.f32.gmra.mrb[0].mxu0 %v175
    %v258 = vpop.f32.mrb[0].mxu0
    %v259 = vadd.f32 %v161, %v258
    %v260 = vpop.f32.mrb[0].mxu0
    %261 = vdwg.mxu0
    %v262 = vlaneseq
    %v263 = vshrl.u32 %v262, 7
    %v264 = vsub.s32 0, %v263
    %v265 = vrot.slane %v58, %v264
    %v266 = vadd.f32 %v244, %v265
    %v267 = vadd.f32 %v249, %v265
    %v268 = vadd.f32 %v254, %v265
    %v269 = vadd.f32 %v259, %v265
    %v270 = vmul.f32 %v266, 0.5
    %v271 = vmul.f32 %v267, 0.5
    %v272 = vmul.f32 %v268, 0.5
    %v273 = vmul.f32 %v269, 0.5
    %v274 = vtanh.pop %v270
    %v275 = vtanh.pop %v271
    %v276 = vtanh.pop %v272
    %v277 = vtanh.pop %v273
    %v278 = vadd.f32 %v274, 1.0
    %v279 = vadd.f32 %v275, 1.0
    %v280 = vadd.f32 %v276, 1.0
    %v281 = vadd.f32 %v277, 1.0
    %v282 = vmul.f32 %v278, 0.5
    %v283 = vmul.f32 %v279, 0.5
    %v284 = vmul.f32 %v280, 0.5
    %v285 = vmul.f32 %v281, 0.5
    %v286 = vld [vmem:[#allocation2] sm:$0xff]
    %v287 = vld [vmem:[#allocation2 + $0x8] sm:$0xff]
    %288 = vrot.lane.b32.xlu0 %v54, 32
    %v289 = vpop.permute.xlu0 %288
    %290 = vrot.lane.b32.xlu0 %v55, 32
    %v291 = vpop.permute.xlu0 %290
    %292 = vrot.lane.b32.xlu0 %v56, 32
    %v293 = vpop.permute.xlu0 %292
    %294 = vrot.lane.b32.xlu0 %v57, 32
    %v295 = vpop.permute.xlu0 %294
    %v300 = vmul.f32 %v282, %v289
    %v301 = vmul.f32 %v283, %v291
    %v302 = vmul.f32 %v284, %v293
    %v303 = vmul.f32 %v285, %v295
    %v304 = vld [vmem:[%s5] sm:$0xff]
    %v305 = vld [vmem:[%s5 + $0x8] sm:$0xff]
    %v306 = vld [vmem:[%s5 + $0x10] sm:$0xff]
    %v307 = vld [vmem:[%s5 + $0x18] sm:$0xff]
    %312 = vrot.lane.b32.xlu0 %v300, 96
    %v313 = vpop.permute.xlu0 %312
    %314 = vrot.lane.b32.xlu0 %v301, 96
    %v315 = vpop.permute.xlu0 %314
    %316 = vrot.lane.b32.xlu0 %v302, 96
    %v317 = vpop.permute.xlu0 %316
    %318 = vrot.lane.b32.xlu0 %v303, 96
    %v319 = vpop.permute.xlu0 %318
    %v320 = vsel %vm66, %v313, 0
    %v322 = vsel %vm66, %v315, 0
    %v324 = vsel %vm66, %v317, 0
    %v326 = vsel %vm66, %v319, 0
    %328 = vmatprep.subr.mxu0 0.0
    %329 = vmatpush1.msra.mxu0 %v304
    %330 = vmatprep.subr.mxu0 0.0
    %331 = vmatpush1.msra.mxu0 %v305
    %332 = vmatprep.subr.mxu0 0.0
    %333 = vmatpush1.msra.mxu0 %v306
    %334 = vmatprep.subr.mxu0 0.0
    %335 = vmatpush1.msra.mxu0 %v307
    %336 = vmatprep.subr.mxu0 0.0
    %337 = vmatpush1.msra.mxu0 0.0
    %338 = vmatprep.subr.mxu0 0.0
    %339 = vmatpush1.msra.mxu0 0.0
    %340 = vmatprep.subr.mxu0 0.0
    %341 = vmatpush1.msra.mxu0 0.0
    %342 = vmatprep.subr.mxu0 0.0
    %343 = vmatpush1.msra.mxu0 0.0
    %344 = vmatprep.subr.mxu0 0.0
    %345 = vmatpush1.msra.mxu0 0.0
    %346 = vmatprep.subr.mxu0 0.0
    %347 = vmatpush1.msra.mxu0 0.0
    %348 = vmatprep.subr.mxu0 0.0
    %349 = vmatpush1.msra.mxu0 0.0
    %350 = vmatprep.subr.mxu0 0.0
    %351 = vmatpush1.msra.mxu0 0.0
    %352 = vmatprep.subr.mxu0 0.0
    %353 = vmatpush1.msra.mxu0 0.0
    %354 = vmatprep.subr.mxu0 0.0
    %355 = vmatpush1.msra.mxu0 0.0
    %356 = vmatprep.subr.mxu0 0.0
    %357 = vmatpush1.msra.mxu0 0.0
    %358 = vmatprep.subr.mxu0 0.0
    %359 = vmatpush1.msra.mxu0 0.0
    %360 = vmatprep.subr.mxu0 0.0
    %361 = vmatpush1.msra.mxu0 0.0
    %362 = vmatprep.subr.mxu0 0.0
    %363 = vmatpush1.msra.mxu0 0.0
    %364 = vmatprep.subr.mxu0 0.0
    %365 = vmatpush1.msra.mxu0 0.0
    %366 = vmatprep.subr.mxu0 0.0
    %367 = vmatpush1.msra.mxu0 0.0
    %368 = vmatprep.subr.mxu0 0.0
    %369 = vmatpush1.msra.mxu0 0.0
    %370 = vmatprep.subr.mxu0 0.0
    %371 = vmatpush1.msra.mxu0 0.0
    %372 = vmatprep.subr.mxu0 0.0
    %373 = vmatpush1.msra.mxu0 0.0
    %374 = vmatprep.subr.mxu0 0.0
    %375 = vmatpush1.msra.mxu0 0.0
    %376 = vmatprep.subr.mxu0 0.0
    %377 = vmatpush1.msra.mxu0 0.0
    %378 = vmatprep.subr.mxu0 0.0
    %379 = vmatpush1.msra.mxu0 0.0
    %380 = vmatprep.subr.mxu0 0.0
    %381 = vmatpush1.msra.mxu0 0.0
    %382 = vmatprep.subr.mxu0 0.0
    %383 = vmatpush1.msra.mxu0 0.0
    %384 = vmatprep.subr.mxu0 0.0
    %385 = vmatpush1.msra.mxu0 0.0
    %386 = vmatprep.subr.mxu0 0.0
    %387 = vmatpush1.msra.mxu0 0.0
    %388 = vmatprep.subr.mxu0 0.0
    %389 = vmatpush1.msra.mxu0 0.0
    %390 = vmatprep.subr.mxu0 0.0
    %391 = vmatpush1.msra.mxu0 0.0
    %392 = vmatprep.mubr.f32.mxu0 0.0
    %393 = vmatmul.mubr.f32.gmra.mrb[0].mxu0 %v320
    %v394 = vpop.f32.mrb[0].mxu0
    %v395 = vadd.f32 0.0, %v394
    %v396 = vpop.f32.mrb[0].mxu0
    %397 = vmatprep.mubr.f32.mxu0 0.0
    %398 = vmatmul.mubr.f32.gmra.mrb[0].mxu0 %v322
    %v399 = vpop.f32.mrb[0].mxu0
    %v400 = vadd.f32 0.0, %v399
    %v401 = vpop.f32.mrb[0].mxu0
    %402 = vmatprep.mubr.f32.mxu0 0.0
    %403 = vmatmul.mubr.f32.gmra.mrb[0].mxu0 %v324
    %v404 = vpop.f32.mrb[0].mxu0
    %v405 = vadd.f32 0.0, %v404
    %v406 = vpop.f32.mrb[0].mxu0
    %407 = vmatprep.mubr.f32.mxu0 0.0
    %408 = vmatmul.mubr.f32.gmra.mrb[0].mxu0 %v326
    %v409 = vpop.f32.mrb[0].mxu0
    %v410 = vadd.f32 0.0, %v409
    %v411 = vpop.f32.mrb[0].mxu0
    %412 = vdwg.mxu0
    %413 = vmatprep.subr.mxu0 0.0
    %414 = vmatpush1.msra.mxu0 %v286
    %415 = vmatprep.subr.mxu0 0.0
    %416 = vmatpush1.msra.mxu0 %v287
    %417 = vmatprep.subr.mxu0 0.0
    %418 = vmatpush1.msra.mxu0 0.0
    %419 = vmatprep.subr.mxu0 0.0
    %420 = vmatpush1.msra.mxu0 0.0
    %421 = vmatprep.subr.mxu0 0.0
    %422 = vmatpush1.msra.mxu0 0.0
    %423 = vmatprep.subr.mxu0 0.0
    %424 = vmatpush1.msra.mxu0 0.0
    %425 = vmatprep.subr.mxu0 0.0
    %426 = vmatpush1.msra.mxu0 0.0
    %427 = vmatprep.subr.mxu0 0.0
    %428 = vmatpush1.msra.mxu0 0.0
    %429 = vmatprep.subr.mxu0 0.0
    %430 = vmatpush1.msra.mxu0 0.0
    %431 = vmatprep.subr.mxu0 0.0
    %432 = vmatpush1.msra.mxu0 0.0
    %433 = vmatprep.subr.mxu0 0.0
    %434 = vmatpush1.msra.mxu0 0.0
    %435 = vmatprep.subr.mxu0 0.0
    %436 = vmatpush1.msra.mxu0 0.0
    %437 = vmatprep.subr.mxu0 0.0
    %438 = vmatpush1.msra.mxu0 0.0
    %439 = vmatprep.subr.mxu0 0.0
    %440 = vmatpush1.msra.mxu0 0.0
    %441 = vmatprep.subr.mxu0 0.0
    %442 = vmatpush1.msra.mxu0 0.0
    %443 = vmatprep.subr.mxu0 0.0
    %444 = vmatpush1.msra.mxu0 0.0
    %445 = vmatprep.subr.mxu0 0.0
    %446 = vmatpush1.msra.mxu0 0.0
    %447 = vmatprep.subr.mxu0 0.0
    %448 = vmatpush1.msra.mxu0 0.0
    %449 = vmatprep.subr.mxu0 0.0
    %450 = vmatpush1.msra.mxu0 0.0
    %451 = vmatprep.subr.mxu0 0.0
    %452 = vmatpush1.msra.mxu0 0.0
    %453 = vmatprep.subr.mxu0 0.0
    %454 = vmatpush1.msra.mxu0 0.0
    %455 = vmatprep.subr.mxu0 0.0
    %456 = vmatpush1.msra.mxu0 0.0
    %457 = vmatprep.subr.mxu0 0.0
    %458 = vmatpush1.msra.mxu0 0.0
    %459 = vmatprep.subr.mxu0 0.0
    %460 = vmatpush1.msra.mxu0 0.0
    %461 = vmatprep.subr.mxu0 0.0
    %462 = vmatpush1.msra.mxu0 0.0
    %463 = vmatprep.subr.mxu0 0.0
    %464 = vmatpush1.msra.mxu0 0.0
    %465 = vmatprep.subr.mxu0 0.0
    %466 = vmatpush1.msra.mxu0 0.0
    %467 = vmatprep.subr.mxu0 0.0
    %468 = vmatpush1.msra.mxu0 0.0
    %469 = vmatprep.subr.mxu0 0.0
    %470 = vmatpush1.msra.mxu0 0.0
    %471 = vmatprep.subr.mxu0 0.0
    %472 = vmatpush1.msra.mxu0 0.0
    %473 = vmatprep.subr.mxu0 0.0
    %474 = vmatpush1.msra.mxu0 0.0
    %475 = vmatprep.subr.mxu0 0.0
    %476 = vmatpush1.msra.mxu0 0.0
    %477 = vmatprep.mubr.f32.mxu0 0.0
    %478 = vmatmul.mubr.f32.gmra.mrb[0].mxu0 %v166
    %v479 = vpop.f32.mrb[0].mxu0
    %v480 = vadd.f32 %v395, %v479
    %v481 = vpop.f32.mrb[0].mxu0
    %482 = vmatprep.mubr.f32.mxu0 0.0
    %483 = vmatmul.mubr.f32.gmra.mrb[0].mxu0 %v169
    %v484 = vpop.f32.mrb[0].mxu0
    %v485 = vadd.f32 %v400, %v484
    %v486 = vpop.f32.mrb[0].mxu0
    %487 = vmatprep.mubr.f32.mxu0 0.0
    %488 = vmatmul.mubr.f32.gmra.mrb[0].mxu0 %v172
    %v489 = vpop.f32.mrb[0].mxu0
    %v490 = vadd.f32 %v405, %v489
    %v491 = vpop.f32.mrb[0].mxu0
    %492 = vmatprep.mubr.f32.mxu0 0.0
    %493 = vmatmul.mubr.f32.gmra.mrb[0].mxu0 %v175
    %v494 = vpop.f32.mrb[0].mxu0
    %v495 = vadd.f32 %v410, %v494
    %v496 = vpop.f32.mrb[0].mxu0
    %497 = vdwg.mxu0
    %v498 = vlaneseq
    %v499 = vshrl.u32 %v498, 7
    %v500 = vsub.s32 1, %v499
    %v501 = vrot.slane %v58, %v500
    %v502 = vadd.f32 %v480, %v501
    %v503 = vadd.f32 %v485, %v501
    %v504 = vadd.f32 %v490, %v501
    %v505 = vadd.f32 %v495, %v501
    %v506 = vmul.f32 %v502, 0.35355338
    %v507 = vmul.f32 %v503, 0.35355338
    %v508 = vmul.f32 %v504, 0.35355338
    %v509 = vmul.f32 %v505, 0.35355338
    %511 = vrot.lane.b32.xlu0 %v502, 96
    %v512 = vpop.permute.xlu0 %511
    %vm513 = vcmask 64512
    %v515 = vsel %vm513, %v506, 0
    %v517 = vsel %vm513, %v512, 0
    %519 = vmatprep.subr.mxu0 0.0
    %520 = vmatpush1.xpose.msra.mxu0 %v517
    %521 = vmatprep.subr.mxu0 0.0
    %522 = vmatpush1.xpose.msra.mxu0 0.0
    %523 = vmatprep.subr.mxu0 0.0
    %524 = vmatpush1.xpose.msra.mxu0 0.0
    %525 = vmatprep.subr.mxu0 0.0
    %526 = vmatpush1.xpose.msra.mxu0 0.0
    %527 = vmatprep.subr.mxu0 0.0
    %528 = vmatpush1.xpose.msra.mxu0 0.0
    %529 = vmatprep.subr.mxu0 0.0
    %530 = vmatpush1.xpose.msra.mxu0 0.0
    %531 = vmatprep.subr.mxu0 0.0
    %532 = vmatpush1.xpose.msra.mxu0 0.0
    %533 = vmatprep.subr.mxu0 0.0
    %534 = vmatpush1.xpose.msra.mxu0 0.0
    %535 = vmatprep.subr.mxu0 0.0
    %536 = vmatpush1.xpose.msra.mxu0 0.0
    %537 = vmatprep.subr.mxu0 0.0
    %538 = vmatpush1.xpose.msra.mxu0 0.0
    %539 = vmatprep.subr.mxu0 0.0
    %540 = vmatpush1.xpose.msra.mxu0 0.0
    %541 = vmatprep.subr.mxu0 0.0
    %542 = vmatpush1.xpose.msra.mxu0 0.0
    %543 = vmatprep.subr.mxu0 0.0
    %544 = vmatpush1.xpose.msra.mxu0 0.0
    %545 = vmatprep.subr.mxu0 0.0
    %546 = vmatpush1.xpose.msra.mxu0 0.0
    %547 = vmatprep.subr.mxu0 0.0
    %548 = vmatpush1.xpose.msra.mxu0 0.0
    %549 = vmatprep.subr.mxu0 0.0
    %550 = vmatpush1.xpose.msra.mxu0 0.0
    %551 = vmatprep.subr.mxu0 0.0
    %552 = vmatpush1.xpose.msra.mxu0 0.0
    %553 = vmatprep.subr.mxu0 0.0
    %554 = vmatpush1.xpose.msra.mxu0 0.0
    %555 = vmatprep.subr.mxu0 0.0
    %556 = vmatpush1.xpose.msra.mxu0 0.0
    %557 = vmatprep.subr.mxu0 0.0
    %558 = vmatpush1.xpose.msra.mxu0 0.0
    %559 = vmatprep.subr.mxu0 0.0
    %560 = vmatpush1.xpose.msra.mxu0 0.0
    %561 = vmatprep.subr.mxu0 0.0
    %562 = vmatpush1.xpose.msra.mxu0 0.0
    %563 = vmatprep.subr.mxu0 0.0
    %564 = vmatpush1.xpose.msra.mxu0 0.0
    %565 = vmatprep.subr.mxu0 0.0
    %566 = vmatpush1.xpose.msra.mxu0 0.0
    %567 = vmatprep.subr.mxu0 0.0
    %568 = vmatpush1.xpose.msra.mxu0 0.0
    %569 = vmatprep.subr.mxu0 0.0
    %570 = vmatpush1.xpose.msra.mxu0 0.0
    %571 = vmatprep.subr.mxu0 0.0
    %572 = vmatpush1.xpose.msra.mxu0 0.0
    %573 = vmatprep.subr.mxu0 0.0
    %574 = vmatpush1.xpose.msra.mxu0 0.0
    %575 = vmatprep.subr.mxu0 0.0
    %576 = vmatpush1.xpose.msra.mxu0 0.0
    %577 = vmatprep.subr.mxu0 0.0
    %578 = vmatpush1.xpose.msra.mxu0 0.0
    %579 = vmatprep.subr.mxu0 0.0
    %580 = vmatpush1.xpose.msra.mxu0 0.0
    %581 = vmatprep.subr.mxu0 0.0
    %582 = vmatpush1.xpose.msra.mxu0 0.0
    %583 = vmatprep.mubr.f32.mxu0 0.0
    %584 = vmatmul.mubr.f32.gmra.mrb[0].mxu0 %v515
    %v585 = vpop.f32.mrb[0].mxu0
    %v586 = vadd.f32 0.0, %v585
    %v587 = vpop.f32.mrb[0].mxu0
    %588 = vdwg.mxu0
    %590 = vrot.lane.b32.xlu0 %v503, 96
    %v591 = vpop.permute.xlu0 %590
    %v593 = vsel %vm513, %v507, 0
    %v595 = vsel %vm513, %v591, 0
    %597 = vmatprep.subr.mxu0 0.0
    %598 = vmatpush1.xpose.msra.mxu0 %v595
    %599 = vmatprep.subr.mxu0 0.0
    %600 = vmatpush1.xpose.msra.mxu0 0.0
    %601 = vmatprep.subr.mxu0 0.0
    %602 = vmatpush1.xpose.msra.mxu0 0.0
    %603 = vmatprep.subr.mxu0 0.0
    %604 = vmatpush1.xpose.msra.mxu0 0.0
    %605 = vmatprep.subr.mxu0 0.0
    %606 = vmatpush1.xpose.msra.mxu0 0.0
    %607 = vmatprep.subr.mxu0 0.0
    %608 = vmatpush1.xpose.msra.mxu0 0.0
    %609 = vmatprep.subr.mxu0 0.0
    %610 = vmatpush1.xpose.msra.mxu0 0.0
    %611 = vmatprep.subr.mxu0 0.0
    %612 = vmatpush1.xpose.msra.mxu0 0.0
    %613 = vmatprep.subr.mxu0 0.0
    %614 = vmatpush1.xpose.msra.mxu0 0.0
    %615 = vmatprep.subr.mxu0 0.0
    %616 = vmatpush1.xpose.msra.mxu0 0.0
    %617 = vmatprep.subr.mxu0 0.0
    %618 = vmatpush1.xpose.msra.mxu0 0.0
    %619 = vmatprep.subr.mxu0 0.0
    %620 = vmatpush1.xpose.msra.mxu0 0.0
    %621 = vmatprep.subr.mxu0 0.0
    %622 = vmatpush1.xpose.msra.mxu0 0.0
    %623 = vmatprep.subr.mxu0 0.0
    %624 = vmatpush1.xpose.msra.mxu0 0.0
    %625 = vmatprep.subr.mxu0 0.0
    %626 = vmatpush1.xpose.msra.mxu0 0.0
    %627 = vmatprep.subr.mxu0 0.0
    %628 = vmatpush1.xpose.msra.mxu0 0.0
    %629 = vmatprep.subr.mxu0 0.0
    %630 = vmatpush1.xpose.msra.mxu0 0.0
    %631 = vmatprep.subr.mxu0 0.0
    %632 = vmatpush1.xpose.msra.mxu0 0.0
    %633 = vmatprep.subr.mxu0 0.0
    %634 = vmatpush1.xpose.msra.mxu0 0.0
    %635 = vmatprep.subr.mxu0 0.0
    %636 = vmatpush1.xpose.msra.mxu0 0.0
    %637 = vmatprep.subr.mxu0 0.0
    %638 = vmatpush1.xpose.msra.mxu0 0.0
    %639 = vmatprep.subr.mxu0 0.0
    %640 = vmatpush1.xpose.msra.mxu0 0.0
    %641 = vmatprep.subr.mxu0 0.0
    %642 = vmatpush1.xpose.msra.mxu0 0.0
    %643 = vmatprep.subr.mxu0 0.0
    %644 = vmatpush1.xpose.msra.mxu0 0.0
    %645 = vmatprep.subr.mxu0 0.0
    %646 = vmatpush1.xpose.msra.mxu0 0.0
    %647 = vmatprep.subr.mxu0 0.0
    %648 = vmatpush1.xpose.msra.mxu0 0.0
    %649 = vmatprep.subr.mxu0 0.0
    %650 = vmatpush1.xpose.msra.mxu0 0.0
    %651 = vmatprep.subr.mxu0 0.0
    %652 = vmatpush1.xpose.msra.mxu0 0.0
    %653 = vmatprep.subr.mxu0 0.0
    %654 = vmatpush1.xpose.msra.mxu0 0.0
    %655 = vmatprep.subr.mxu0 0.0
    %656 = vmatpush1.xpose.msra.mxu0 0.0
    %657 = vmatprep.subr.mxu0 0.0
    %658 = vmatpush1.xpose.msra.mxu0 0.0
    %659 = vmatprep.subr.mxu0 0.0
    %660 = vmatpush1.xpose.msra.mxu0 0.0
    %661 = vmatprep.mubr.f32.mxu0 0.0
    %662 = vmatmul.mubr.f32.gmra.mrb[0].mxu0 %v593
    %v663 = vpop.f32.mrb[0].mxu0
    %v664 = vadd.f32 0.0, %v663
    %v665 = vpop.f32.mrb[0].mxu0
    %666 = vdwg.mxu0
    %668 = vrot.lane.b32.xlu0 %v504, 96
    %v669 = vpop.permute.xlu0 %668
    %v671 = vsel %vm513, %v508, 0
    %v673 = vsel %vm513, %v669, 0
    %675 = vmatprep.subr.mxu0 0.0
    %676 = vmatpush1.xpose.msra.mxu0 %v673
    %677 = vmatprep.subr.mxu0 0.0
    %678 = vmatpush1.xpose.msra.mxu0 0.0
    %679 = vmatprep.subr.mxu0 0.0
    %680 = vmatpush1.xpose.msra.mxu0 0.0
    %681 = vmatprep.subr.mxu0 0.0
    %682 = vmatpush1.xpose.msra.mxu0 0.0
    %683 = vmatprep.subr.mxu0 0.0
    %684 = vmatpush1.xpose.msra.mxu0 0.0
    %685 = vmatprep.subr.mxu0 0.0
    %686 = vmatpush1.xpose.msra.mxu0 0.0
    %687 = vmatprep.subr.mxu0 0.0
    %688 = vmatpush1.xpose.msra.mxu0 0.0
    %689 = vmatprep.subr.mxu0 0.0
    %690 = vmatpush1.xpose.msra.mxu0 0.0
    %691 = vmatprep.subr.mxu0 0.0
    %692 = vmatpush1.xpose.msra.mxu0 0.0
    %693 = vmatprep.subr.mxu0 0.0
    %694 = vmatpush1.xpose.msra.mxu0 0.0
    %695 = vmatprep.subr.mxu0 0.0
    %696 = vmatpush1.xpose.msra.mxu0 0.0
    %697 = vmatprep.subr.mxu0 0.0
    %698 = vmatpush1.xpose.msra.mxu0 0.0
    %699 = vmatprep.subr.mxu0 0.0
    %700 = vmatpush1.xpose.msra.mxu0 0.0
    %701 = vmatprep.subr.mxu0 0.0
    %702 = vmatpush1.xpose.msra.mxu0 0.0
    %703 = vmatprep.subr.mxu0 0.0
    %704 = vmatpush1.xpose.msra.mxu0 0.0
    %705 = vmatprep.subr.mxu0 0.0
    %706 = vmatpush1.xpose.msra.mxu0 0.0
    %707 = vmatprep.subr.mxu0 0.0
    %708 = vmatpush1.xpose.msra.mxu0 0.0
    %709 = vmatprep.subr.mxu0 0.0
    %710 = vmatpush1.xpose.msra.mxu0 0.0
    %711 = vmatprep.subr.mxu0 0.0
    %712 = vmatpush1.xpose.msra.mxu0 0.0
    %713 = vmatprep.subr.mxu0 0.0
    %714 = vmatpush1.xpose.msra.mxu0 0.0
    %715 = vmatprep.subr.mxu0 0.0
    %716 = vmatpush1.xpose.msra.mxu0 0.0
    %717 = vmatprep.subr.mxu0 0.0
    %718 = vmatpush1.xpose.msra.mxu0 0.0
    %719 = vmatprep.subr.mxu0 0.0
    %720 = vmatpush1.xpose.msra.mxu0 0.0
    %721 = vmatprep.subr.mxu0 0.0
    %722 = vmatpush1.xpose.msra.mxu0 0.0
    %723 = vmatprep.subr.mxu0 0.0
    %724 = vmatpush1.xpose.msra.mxu0 0.0
    %725 = vmatprep.subr.mxu0 0.0
    %726 = vmatpush1.xpose.msra.mxu0 0.0
    %727 = vmatprep.subr.mxu0 0.0
    %728 = vmatpush1.xpose.msra.mxu0 0.0
    %729 = vmatprep.subr.mxu0 0.0
    %730 = vmatpush1.xpose.msra.mxu0 0.0
    %731 = vmatprep.subr.mxu0 0.0
    %732 = vmatpush1.xpose.msra.mxu0 0.0
    %733 = vmatprep.subr.mxu0 0.0
    %734 = vmatpush1.xpose.msra.mxu0 0.0
    %735 = vmatprep.subr.mxu0 0.0
    %736 = vmatpush1.xpose.msra.mxu0 0.0
    %737 = vmatprep.subr.mxu0 0.0
    %738 = vmatpush1.xpose.msra.mxu0 0.0
    %739 = vmatprep.mubr.f32.mxu0 0.0
    %740 = vmatmul.mubr.f32.gmra.mrb[0].mxu0 %v671
    %v741 = vpop.f32.mrb[0].mxu0
    %v742 = vadd.f32 0.0, %v741
    %v743 = vpop.f32.mrb[0].mxu0
    %744 = vdwg.mxu0
    %746 = vrot.lane.b32.xlu0 %v505, 96
    %v747 = vpop.permute.xlu0 %746
    %v749 = vsel %vm513, %v509, 0
    %v751 = vsel %vm513, %v747, 0
    %753 = vmatprep.subr.mxu0 0.0
    %754 = vmatpush1.xpose.msra.mxu0 %v751
    %755 = vmatprep.subr.mxu0 0.0
    %756 = vmatpush1.xpose.msra.mxu0 0.0
    %757 = vmatprep.subr.mxu0 0.0
    %758 = vmatpush1.xpose.msra.mxu0 0.0
    %759 = vmatprep.subr.mxu0 0.0
    %760 = vmatpush1.xpose.msra.mxu0 0.0
    %761 = vmatprep.subr.mxu0 0.0
    %762 = vmatpush1.xpose.msra.mxu0 0.0
    %763 = vmatprep.subr.mxu0 0.0
    %764 = vmatpush1.xpose.msra.mxu0 0.0
    %765 = vmatprep.subr.mxu0 0.0
    %766 = vmatpush1.xpose.msra.mxu0 0.0
    %767 = vmatprep.subr.mxu0 0.0
    %768 = vmatpush1.xpose.msra.mxu0 0.0
    %769 = vmatprep.subr.mxu0 0.0
    %770 = vmatpush1.xpose.msra.mxu0 0.0
    %771 = vmatprep.subr.mxu0 0.0
    %772 = vmatpush1.xpose.msra.mxu0 0.0
    %773 = vmatprep.subr.mxu0 0.0
    %774 = vmatpush1.xpose.msra.mxu0 0.0
    %775 = vmatprep.subr.mxu0 0.0
    %776 = vmatpush1.xpose.msra.mxu0 0.0
    %777 = vmatprep.subr.mxu0 0.0
    %778 = vmatpush1.xpose.msra.mxu0 0.0
    %779 = vmatprep.subr.mxu0 0.0
    %780 = vmatpush1.xpose.msra.mxu0 0.0
    %781 = vmatprep.subr.mxu0 0.0
    %782 = vmatpush1.xpose.msra.mxu0 0.0
    %783 = vmatprep.subr.mxu0 0.0
    %784 = vmatpush1.xpose.msra.mxu0 0.0
    %785 = vmatprep.subr.mxu0 0.0
    %786 = vmatpush1.xpose.msra.mxu0 0.0
    %787 = vmatprep.subr.mxu0 0.0
    %788 = vmatpush1.xpose.msra.mxu0 0.0
    %789 = vmatprep.subr.mxu0 0.0
    %790 = vmatpush1.xpose.msra.mxu0 0.0
    %791 = vmatprep.subr.mxu0 0.0
    %792 = vmatpush1.xpose.msra.mxu0 0.0
    %793 = vmatprep.subr.mxu0 0.0
    %794 = vmatpush1.xpose.msra.mxu0 0.0
    %795 = vmatprep.subr.mxu0 0.0
    %796 = vmatpush1.xpose.msra.mxu0 0.0
    %797 = vmatprep.subr.mxu0 0.0
    %798 = vmatpush1.xpose.msra.mxu0 0.0
    %799 = vmatprep.subr.mxu0 0.0
    %800 = vmatpush1.xpose.msra.mxu0 0.0
    %801 = vmatprep.subr.mxu0 0.0
    %802 = vmatpush1.xpose.msra.mxu0 0.0
    %803 = vmatprep.subr.mxu0 0.0
    %804 = vmatpush1.xpose.msra.mxu0 0.0
    %805 = vmatprep.subr.mxu0 0.0
    %806 = vmatpush1.xpose.msra.mxu0 0.0
    %807 = vmatprep.subr.mxu0 0.0
    %808 = vmatpush1.xpose.msra.mxu0 0.0
    %809 = vmatprep.subr.mxu0 0.0
    %810 = vmatpush1.xpose.msra.mxu0 0.0
    %811 = vmatprep.subr.mxu0 0.0
    %812 = vmatpush1.xpose.msra.mxu0 0.0
    %813 = vmatprep.subr.mxu0 0.0
    %814 = vmatpush1.xpose.msra.mxu0 0.0
    %815 = vmatprep.subr.mxu0 0.0
    %816 = vmatpush1.xpose.msra.mxu0 0.0
    %817 = vmatprep.mubr.f32.mxu0 0.0
    %818 = vmatmul.mubr.f32.gmra.mrb[0].mxu0 %v749
    %v819 = vpop.f32.mrb[0].mxu0
    %v820 = vadd.f32 0.0, %v819
    %v821 = vpop.f32.mrb[0].mxu0
    %822 = vdwg.mxu0
    %v823 = vsel %vm513, %v586, -inf
    %824 = vmax.xlane.f32.xlu0 %v823
    %v825 = vpop.xlane.xlu0 %824
    %v826 = vsel %vm513, %v664, -inf
    %827 = vmax.xlane.f32.xlu0 %v826
    %v828 = vpop.xlane.xlu0 %827
    %v829 = vsel %vm513, %v742, -inf
    %830 = vmax.xlane.f32.xlu0 %v829
    %v831 = vpop.xlane.xlu0 %830
    %v832 = vsel %vm513, %v820, -inf
    %833 = vmax.xlane.f32.xlu0 %v832
    %v834 = vpop.xlane.xlu0 %833
    %v835 = vsub.f32 %v586, %v825
    %v836 = vsub.f32 %v664, %v828
    %v837 = vsub.f32 %v742, %v831
    %v838 = vsub.f32 %v820, %v834
    %v839 = vmul.f32 %v835, 1.442695
    %v840 = vpow.pop %v839
    %v841 = vmul.f32 %v836, 1.442695
    %v842 = vpow.pop %v841
    %v843 = vmul.f32 %v837, 1.442695
    %v844 = vpow.pop %v843
    %v845 = vmul.f32 %v838, 1.442695
    %v846 = vpow.pop %v845
    %v847 = vsel %vm513, %v840, 0.0
    %848 = vadd.xlane.f32.xlu0 %v847
    %v849 = vpop.xlane.xlu0 %848
    %v850 = vsel %vm513, %v842, 0.0
    %851 = vadd.xlane.f32.xlu0 %v850
    %v852 = vpop.xlane.xlu0 %851
    %v853 = vsel %vm513, %v844, 0.0
    %854 = vadd.xlane.f32.xlu0 %v853
    %v855 = vpop.xlane.xlu0 %854
    %v856 = vsel %vm513, %v846, 0.0
    %857 = vadd.xlane.f32.xlu0 %v856
    %v858 = vpop.xlane.xlu0 %857
    %v859 = vrcp.pop %v849
    %v860 = vrcp.pop %v852
    %v861 = vrcp.pop %v855
    %v862 = vrcp.pop %v858
    %v863 = vmul.f32 %v849, %v859
    %v864 = vmul.f32 %v852, %v860
    %v865 = vmul.f32 %v855, %v861
    %v866 = vmul.f32 %v858, %v862
    %v867 = vsub.f32 2.0, %v863
    %v868 = vsub.f32 2.0, %v864
    %v869 = vsub.f32 2.0, %v865
    %v870 = vsub.f32 2.0, %v866
    %v871 = vmul.f32 %v859, %v867
    %v872 = vmul.f32 %v860, %v868
    %v873 = vmul.f32 %v861, %v869
    %v874 = vmul.f32 %v862, %v870
    %v875 = vmul.f32 %v840, %v871
    %v876 = vmul.f32 %v842, %v872
    %v877 = vmul.f32 %v844, %v873
    %v878 = vmul.f32 %v846, %v874
    %879 = vrot.lane.b32.xlu0 %v502, 64
    %v880 = vpop.permute.xlu0 %879
    %v883 = vsel %vm513, %v875, 0
    %885 = vmatprep.subr.mxu0 0.0
    %886 = vmatpush1.msra.mxu0 %v880
    %887 = vmatprep.subr.mxu0 0.0
    %888 = vmatpush1.msra.mxu0 0.0
    %889 = vmatprep.subr.mxu0 0.0
    %890 = vmatpush1.msra.mxu0 0.0
    %891 = vmatprep.subr.mxu0 0.0
    %892 = vmatpush1.msra.mxu0 0.0
    %893 = vmatprep.subr.mxu0 0.0
    %894 = vmatpush1.msra.mxu0 0.0
    %895 = vmatprep.subr.mxu0 0.0
    %896 = vmatpush1.msra.mxu0 0.0
    %897 = vmatprep.subr.mxu0 0.0
    %898 = vmatpush1.msra.mxu0 0.0
    %899 = vmatprep.subr.mxu0 0.0
    %900 = vmatpush1.msra.mxu0 0.0
    %901 = vmatprep.subr.mxu0 0.0
    %902 = vmatpush1.msra.mxu0 0.0
    %903 = vmatprep.subr.mxu0 0.0
    %904 = vmatpush1.msra.mxu0 0.0
    %905 = vmatprep.subr.mxu0 0.0
    %906 = vmatpush1.msra.mxu0 0.0
    %907 = vmatprep.subr.mxu0 0.0
    %908 = vmatpush1.msra.mxu0 0.0
    %909 = vmatprep.subr.mxu0 0.0
    %910 = vmatpush1.msra.mxu0 0.0
    %911 = vmatprep.subr.mxu0 0.0
    %912 = vmatpush1.msra.mxu0 0.0
    %913 = vmatprep.subr.mxu0 0.0
    %914 = vmatpush1.msra.mxu0 0.0
    %915 = vmatprep.subr.mxu0 0.0
    %916 = vmatpush1.msra.mxu0 0.0
    %917 = vmatprep.subr.mxu0 0.0
    %918 = vmatpush1.msra.mxu0 0.0
    %919 = vmatprep.subr.mxu0 0.0
    %920 = vmatpush1.msra.mxu0 0.0
    %921 = vmatprep.subr.mxu0 0.0
    %922 = vmatpush1.msra.mxu0 0.0
    %923 = vmatprep.subr.mxu0 0.0
    %924 = vmatpush1.msra.mxu0 0.0
    %925 = vmatprep.subr.mxu0 0.0
    %926 = vmatpush1.msra.mxu0 0.0
    %927 = vmatprep.subr.mxu0 0.0
    %928 = vmatpush1.msra.mxu0 0.0
    %929 = vmatprep.subr.mxu0 0.0
    %930 = vmatpush1.msra.mxu0 0.0
    %931 = vmatprep.subr.mxu0 0.0
    %932 = vmatpush1.msra.mxu0 0.0
    %933 = vmatprep.subr.mxu0 0.0
    %934 = vmatpush1.msra.mxu0 0.0
    %935 = vmatprep.subr.mxu0 0.0
    %936 = vmatpush1.msra.mxu0 0.0
    %937 = vmatprep.subr.mxu0 0.0
    %938 = vmatpush1.msra.mxu0 0.0
    %939 = vmatprep.subr.mxu0 0.0
    %940 = vmatpush1.msra.mxu0 0.0
    %941 = vmatprep.subr.mxu0 0.0
    %942 = vmatpush1.msra.mxu0 0.0
    %943 = vmatprep.subr.mxu0 0.0
    %944 = vmatpush1.msra.mxu0 0.0
    %945 = vmatprep.subr.mxu0 0.0
    %946 = vmatpush1.msra.mxu0 0.0
    %947 = vmatprep.subr.mxu0 0.0
    %948 = vmatpush1.msra.mxu0 0.0
    %949 = vmatprep.mubr.f32.mxu0 0.0
    %950 = vmatmul.mubr.f32.gmra.mrb[0].mxu0 %v883
    %v951 = vpop.f32.mrb[0].mxu0
    %v952 = vadd.f32 0.0, %v951
    %v953 = vpop.f32.mrb[0].mxu0
    %954 = vdwg.mxu0
    %955 = vrot.lane.b32.xlu0 %v503, 64
    %v956 = vpop.permute.xlu0 %955
    %v959 = vsel %vm513, %v876, 0
    %961 = vmatprep.subr.mxu0 0.0
    %962 = vmatpush1.msra.mxu0 %v956
    %963 = vmatprep.subr.mxu0 0.0
    %964 = vmatpush1.msra.mxu0 0.0
    %965 = vmatprep.subr.mxu0 0.0
    %966 = vmatpush1.msra.mxu0 0.0
    %967 = vmatprep.subr.mxu0 0.0
    %968 = vmatpush1.msra.mxu0 0.0
    %969 = vmatprep.subr.mxu0 0.0
    %970 = vmatpush1.msra.mxu0 0.0
    %971 = vmatprep.subr.mxu0 0.0
    %972 = vmatpush1.msra.mxu0 0.0
    %973 = vmatprep.subr.mxu0 0.0
    %974 = vmatpush1.msra.mxu0 0.0
    %975 = vmatprep.subr.mxu0 0.0
    %976 = vmatpush1.msra.mxu0 0.0
    %977 = vmatprep.subr.mxu0 0.0
    %978 = vmatpush1.msra.mxu0 0.0
    %979 = vmatprep.subr.mxu0 0.0
    %980 = vmatpush1.msra.mxu0 0.0
    %981 = vmatprep.subr.mxu0 0.0
    %982 = vmatpush1.msra.mxu0 0.0
    %983 = vmatprep.subr.mxu0 0.0
    %984 = vmatpush1.msra.mxu0 0.0
    %985 = vmatprep.subr.mxu0 0.0
    %986 = vmatpush1.msra.mxu0 0.0
    %987 = vmatprep.subr.mxu0 0.0
    %988 = vmatpush1.msra.mxu0 0.0
    %989 = vmatprep.subr.mxu0 0.0
    %990 = vmatpush1.msra.mxu0 0.0
    %991 = vmatprep.subr.mxu0 0.0
    %992 = vmatpush1.msra.mxu0 0.0
    %993 = vmatprep.subr.mxu0 0.0
    %994 = vmatpush1.msra.mxu0 0.0
    %995 = vmatprep.subr.mxu0 0.0
    %996 = vmatpush1.msra.mxu0 0.0
    %997 = vmatprep.subr.mxu0 0.0
    %998 = vmatpush1.msra.mxu0 0.0
    %999 = vmatprep.subr.mxu0 0.0
    %1000 = vmatpush1.msra.mxu0 0.0
    %1001 = vmatprep.subr.mxu0 0.0
    %1002 = vmatpush1.msra.mxu0 0.0
    %1003 = vmatprep.subr.mxu0 0.0
    %1004 = vmatpush1.msra.mxu0 0.0
    %1005 = vmatprep.subr.mxu0 0.0
    %1006 = vmatpush1.msra.mxu0 0.0
    %1007 = vmatprep.subr.mxu0 0.0
    %1008 = vmatpush1.msra.mxu0 0.0
    %1009 = vmatprep.subr.mxu0 0.0
    %1010 = vmatpush1.msra.mxu0 0.0
    %1011 = vmatprep.subr.mxu0 0.0
    %1012 = vmatpush1.msra.mxu0 0.0
    %1013 = vmatprep.subr.mxu0 0.0
    %1014 = vmatpush1.msra.mxu0 0.0
    %1015 = vmatprep.subr.mxu0 0.0
    %1016 = vmatpush1.msra.mxu0 0.0
    %1017 = vmatprep.subr.mxu0 0.0
    %1018 = vmatpush1.msra.mxu0 0.0
    %1019 = vmatprep.subr.mxu0 0.0
    %1020 = vmatpush1.msra.mxu0 0.0
    %1021 = vmatprep.subr.mxu0 0.0
    %1022 = vmatpush1.msra.mxu0 0.0
    %1023 = vmatprep.subr.mxu0 0.0
    %1024 = vmatpush1.msra.mxu0 0.0
    %1025 = vmatprep.mubr.f32.mxu0 0.0
    %1026 = vmatmul.mubr.f32.gmra.mrb[0].mxu0 %v959
    %v1027 = vpop.f32.mrb[0].mxu0
    %v1028 = vadd.f32 0.0, %v1027
    %v1029 = vpop.f32.mrb[0].mxu0
    %1030 = vdwg.mxu0
    %1031 = vrot.lane.b32.xlu0 %v504, 64
    %v1032 = vpop.permute.xlu0 %1031
    %v1035 = vsel %vm513, %v877, 0
    %1037 = vmatprep.subr.mxu0 0.0
    %1038 = vmatpush1.msra.mxu0 %v1032
    %1039 = vmatprep.subr.mxu0 0.0
    %1040 = vmatpush1.msra.mxu0 0.0
    %1041 = vmatprep.subr.mxu0 0.0
    %1042 = vmatpush1.msra.mxu0 0.0
    %1043 = vmatprep.subr.mxu0 0.0
    %1044 = vmatpush1.msra.mxu0 0.0
    %1045 = vmatprep.subr.mxu0 0.0
    %1046 = vmatpush1.msra.mxu0 0.0
    %1047 = vmatprep.subr.mxu0 0.0
    %1048 = vmatpush1.msra.mxu0 0.0
    %1049 = vmatprep.subr.mxu0 0.0
    %1050 = vmatpush1.msra.mxu0 0.0
    %1051 = vmatprep.subr.mxu0 0.0
    %1052 = vmatpush1.msra.mxu0 0.0
    %1053 = vmatprep.subr.mxu0 0.0
    %1054 = vmatpush1.msra.mxu0 0.0
    %1055 = vmatprep.subr.mxu0 0.0
    %1056 = vmatpush1.msra.mxu0 0.0
    %1057 = vmatprep.subr.mxu0 0.0
    %1058 = vmatpush1.msra.mxu0 0.0
    %1059 = vmatprep.subr.mxu0 0.0
    %1060 = vmatpush1.msra.mxu0 0.0
    %1061 = vmatprep.subr.mxu0 0.0
    %1062 = vmatpush1.msra.mxu0 0.0
    %1063 = vmatprep.subr.mxu0 0.0
    %1064 = vmatpush1.msra.mxu0 0.0
    %1065 = vmatprep.subr.mxu0 0.0
    %1066 = vmatpush1.msra.mxu0 0.0
    %1067 = vmatprep.subr.mxu0 0.0
    %1068 = vmatpush1.msra.mxu0 0.0
    %1069 = vmatprep.subr.mxu0 0.0
    %1070 = vmatpush1.msra.mxu0 0.0
    %1071 = vmatprep.subr.mxu0 0.0
    %1072 = vmatpush1.msra.mxu0 0.0
    %1073 = vmatprep.subr.mxu0 0.0
    %1074 = vmatpush1.msra.mxu0 0.0
    %1075 = vmatprep.subr.mxu0 0.0
    %1076 = vmatpush1.msra.mxu0 0.0
    %1077 = vmatprep.subr.mxu0 0.0
    %1078 = vmatpush1.msra.mxu0 0.0
    %1079 = vmatprep.subr.mxu0 0.0
    %1080 = vmatpush1.msra.mxu0 0.0
    %1081 = vmatprep.subr.mxu0 0.0
    %1082 = vmatpush1.msra.mxu0 0.0
    %1083 = vmatprep.subr.mxu0 0.0
    %1084 = vmatpush1.msra.mxu0 0.0
    %1085 = vmatprep.subr.mxu0 0.0
    %1086 = vmatpush1.msra.mxu0 0.0
    %1087 = vmatprep.subr.mxu0 0.0
    %1088 = vmatpush1.msra.mxu0 0.0
    %1089 = vmatprep.subr.mxu0 0.0
    %1090 = vmatpush1.msra.mxu0 0.0
    %1091 = vmatprep.subr.mxu0 0.0
    %1092 = vmatpush1.msra.mxu0 0.0
    %1093 = vmatprep.subr.mxu0 0.0
    %1094 = vmatpush1.msra.mxu0 0.0
    %1095 = vmatprep.subr.mxu0 0.0
    %1096 = vmatpush1.msra.mxu0 0.0
    %1097 = vmatprep.subr.mxu0 0.0
    %1098 = vmatpush1.msra.mxu0 0.0
    %1099 = vmatprep.subr.mxu0 0.0
    %1100 = vmatpush1.msra.mxu0 0.0
    %1101 = vmatprep.mubr.f32.mxu0 0.0
    %1102 = vmatmul.mubr.f32.gmra.mrb[0].mxu0 %v1035
    %v1103 = vpop.f32.mrb[0].mxu0
    %v1104 = vadd.f32 0.0, %v1103
    %v1105 = vpop.f32.mrb[0].mxu0
    %1106 = vdwg.mxu0
    %1107 = vrot.lane.b32.xlu0 %v505, 64
    %v1108 = vpop.permute.xlu0 %1107
    %v1111 = vsel %vm513, %v878, 0
    %1113 = vmatprep.subr.mxu0 0.0
    %1114 = vmatpush1.msra.mxu0 %v1108
    %1115 = vmatprep.subr.mxu0 0.0
    %1116 = vmatpush1.msra.mxu0 0.0
    %1117 = vmatprep.subr.mxu0 0.0
    %1118 = vmatpush1.msra.mxu0 0.0
    %1119 = vmatprep.subr.mxu0 0.0
    %1120 = vmatpush1.msra.mxu0 0.0
    %1121 = vmatprep.subr.mxu0 0.0
    %1122 = vmatpush1.msra.mxu0 0.0
    %1123 = vmatprep.subr.mxu0 0.0
    %1124 = vmatpush1.msra.mxu0 0.0
    %1125 = vmatprep.subr.mxu0 0.0
    %1126 = vmatpush1.msra.mxu0 0.0
    %1127 = vmatprep.subr.mxu0 0.0
    %1128 = vmatpush1.msra.mxu0 0.0
    %1129 = vmatprep.subr.mxu0 0.0
    %1130 = vmatpush1.msra.mxu0 0.0
    %1131 = vmatprep.subr.mxu0 0.0
    %1132 = vmatpush1.msra.mxu0 0.0
    %1133 = vmatprep.subr.mxu0 0.0
    %1134 = vmatpush1.msra.mxu0 0.0
    %1135 = vmatprep.subr.mxu0 0.0
    %1136 = vmatpush1.msra.mxu0 0.0
    %1137 = vmatprep.subr.mxu0 0.0
    %1138 = vmatpush1.msra.mxu0 0.0
    %1139 = vmatprep.subr.mxu0 0.0
    %1140 = vmatpush1.msra.mxu0 0.0
    %1141 = vmatprep.subr.mxu0 0.0
    %1142 = vmatpush1.msra.mxu0 0.0
    %1143 = vmatprep.subr.mxu0 0.0
    %1144 = vmatpush1.msra.mxu0 0.0
    %1145 = vmatprep.subr.mxu0 0.0
    %1146 = vmatpush1.msra.mxu0 0.0
    %1147 = vmatprep.subr.mxu0 0.0
    %1148 = vmatpush1.msra.mxu0 0.0
    %1149 = vmatprep.subr.mxu0 0.0
    %1150 = vmatpush1.msra.mxu0 0.0
    %1151 = vmatprep.subr.mxu0 0.0
    %1152 = vmatpush1.msra.mxu0 0.0
    %1153 = vmatprep.subr.mxu0 0.0
    %1154 = vmatpush1.msra.mxu0 0.0
    %1155 = vmatprep.subr.mxu0 0.0
    %1156 = vmatpush1.msra.mxu0 0.0
    %1157 = vmatprep.subr.mxu0 0.0
    %1158 = vmatpush1.msra.mxu0 0.0
    %1159 = vmatprep.subr.mxu0 0.0
    %1160 = vmatpush1.msra.mxu0 0.0
    %1161 = vmatprep.subr.mxu0 0.0
    %1162 = vmatpush1.msra.mxu0 0.0
    %1163 = vmatprep.subr.mxu0 0.0
    %1164 = vmatpush1.msra.mxu0 0.0
    %1165 = vmatprep.subr.mxu0 0.0
    %1166 = vmatpush1.msra.mxu0 0.0
    %1167 = vmatprep.subr.mxu0 0.0
    %1168 = vmatpush1.msra.mxu0 0.0
    %1169 = vmatprep.subr.mxu0 0.0
    %1170 = vmatpush1.msra.mxu0 0.0
    %1171 = vmatprep.subr.mxu0 0.0
    %1172 = vmatpush1.msra.mxu0 0.0
    %1173 = vmatprep.subr.mxu0 0.0
    %1174 = vmatpush1.msra.mxu0 0.0
    %1175 = vmatprep.subr.mxu0 0.0
    %1176 = vmatpush1.msra.mxu0 0.0
    %1177 = vmatprep.mubr.f32.mxu0 0.0
    %1178 = vmatmul.mubr.f32.gmra.mrb[0].mxu0 %v1111
    %v1179 = vpop.f32.mrb[0].mxu0
    %v1180 = vadd.f32 0.0, %v1179
    %v1181 = vpop.f32.mrb[0].mxu0
    %1182 = vdwg.mxu0
    %1183 = vrot.lane.b32.xlu0 %v506, 120
    %v1184 = vpop.permute.xlu0 %1183
    %1185 = vrot.lane.b32.xlu0 %v502, 88
    %v1186 = vpop.permute.xlu0 %1185
    %v1187 = vsel %vm513, %v1184, 0
    %v1189 = vsel %vm513, %v1186, 0
    %1191 = vmatprep.subr.mxu0 0.0
    %1192 = vmatpush1.xpose.msra.mxu0 %v1189
    %1193 = vmatprep.subr.mxu0 0.0
    %1194 = vmatpush1.xpose.msra.mxu0 0.0
    %1195 = vmatprep.subr.mxu0 0.0
    %1196 = vmatpush1.xpose.msra.mxu0 0.0
    %1197 = vmatprep.subr.mxu0 0.0
    %1198 = vmatpush1.xpose.msra.mxu0 0.0
    %1199 = vmatprep.subr.mxu0 0.0
    %1200 = vmatpush1.xpose.msra.mxu0 0.0
    %1201 = vmatprep.subr.mxu0 0.0
    %1202 = vmatpush1.xpose.msra.mxu0 0.0
    %1203 = vmatprep.subr.mxu0 0.0
    %1204 = vmatpush1.xpose.msra.mxu0 0.0
    %1205 = vmatprep.subr.mxu0 0.0
    %1206 = vmatpush1.xpose.msra.mxu0 0.0
    %1207 = vmatprep.subr.mxu0 0.0
    %1208 = vmatpush1.xpose.msra.mxu0 0.0
    %1209 = vmatprep.subr.mxu0 0.0
    %1210 = vmatpush1.xpose.msra.mxu0 0.0
    %1211 = vmatprep.subr.mxu0 0.0
    %1212 = vmatpush1.xpose.msra.mxu0 0.0
    %1213 = vmatprep.subr.mxu0 0.0
    %1214 = vmatpush1.xpose.msra.mxu0 0.0
    %1215 = vmatprep.subr.mxu0 0.0
    %1216 = vmatpush1.xpose.msra.mxu0 0.0
    %1217 = vmatprep.subr.mxu0 0.0
    %1218 = vmatpush1.xpose.msra.mxu0 0.0
    %1219 = vmatprep.subr.mxu0 0.0
    %1220 = vmatpush1.xpose.msra.mxu0 0.0
    %1221 = vmatprep.subr.mxu0 0.0
    %1222 = vmatpush1.xpose.msra.mxu0 0.0
    %1223 = vmatprep.subr.mxu0 0.0
    %1224 = vmatpush1.xpose.msra.mxu0 0.0
    %1225 = vmatprep.subr.mxu0 0.0
    %1226 = vmatpush1.xpose.msra.mxu0 0.0
    %1227 = vmatprep.subr.mxu0 0.0
    %1228 = vmatpush1.xpose.msra.mxu0 0.0
    %1229 = vmatprep.subr.mxu0 0.0
    %1230 = vmatpush1.xpose.msra.mxu0 0.0
    %1231 = vmatprep.subr.mxu0 0.0
    %1232 = vmatpush1.xpose.msra.mxu0 0.0
    %1233 = vmatprep.subr.mxu0 0.0
    %1234 = vmatpush1.xpose.msra.mxu0 0.0
    %1235 = vmatprep.subr.mxu0 0.0
    %1236 = vmatpush1.xpose.msra.mxu0 0.0
    %1237 = vmatprep.subr.mxu0 0.0
    %1238 = vmatpush1.xpose.msra.mxu0 0.0
    %1239 = vmatprep.subr.mxu0 0.0
    %1240 = vmatpush1.xpose.msra.mxu0 0.0
    %1241 = vmatprep.subr.mxu0 0.0
    %1242 = vmatpush1.xpose.msra.mxu0 0.0
    %1243 = vmatprep.subr.mxu0 0.0
    %1244 = vmatpush1.xpose.msra.mxu0 0.0
    %1245 = vmatprep.subr.mxu0 0.0
    %1246 = vmatpush1.xpose.msra.mxu0 0.0
    %1247 = vmatprep.subr.mxu0 0.0
    %1248 = vmatpush1.xpose.msra.mxu0 0.0
    %1249 = vmatprep.subr.mxu0 0.0
    %1250 = vmatpush1.xpose.msra.mxu0 0.0
    %1251 = vmatprep.subr.mxu0 0.0
    %1252 = vmatpush1.xpose.msra.mxu0 0.0
    %1253 = vmatprep.subr.mxu0 0.0
    %1254 = vmatpush1.xpose.msra.mxu0 0.0
    %1255 = vmatprep.mubr.f32.mxu0 0.0
    %1256 = vmatmul.mubr.f32.gmra.mrb[0].mxu0 %v1187
    %v1257 = vpop.f32.mrb[0].mxu0
    %v1258 = vadd.f32 0.0, %v1257
    %v1259 = vpop.f32.mrb[0].mxu0
    %1260 = vdwg.mxu0
    %1261 = vrot.lane.b32.xlu0 %v507, 120
    %v1262 = vpop.permute.xlu0 %1261
    %1263 = vrot.lane.b32.xlu0 %v503, 88
    %v1264 = vpop.permute.xlu0 %1263
    %v1265 = vsel %vm513, %v1262, 0
    %v1267 = vsel %vm513, %v1264, 0
    %1269 = vmatprep.subr.mxu0 0.0
    %1270 = vmatpush1.xpose.msra.mxu0 %v1267
    %1271 = vmatprep.subr.mxu0 0.0
    %1272 = vmatpush1.xpose.msra.mxu0 0.0
    %1273 = vmatprep.subr.mxu0 0.0
    %1274 = vmatpush1.xpose.msra.mxu0 0.0
    %1275 = vmatprep.subr.mxu0 0.0
    %1276 = vmatpush1.xpose.msra.mxu0 0.0
    %1277 = vmatprep.subr.mxu0 0.0
    %1278 = vmatpush1.xpose.msra.mxu0 0.0
    %1279 = vmatprep.subr.mxu0 0.0
    %1280 = vmatpush1.xpose.msra.mxu0 0.0
    %1281 = vmatprep.subr.mxu0 0.0
    %1282 = vmatpush1.xpose.msra.mxu0 0.0
    %1283 = vmatprep.subr.mxu0 0.0
    %1284 = vmatpush1.xpose.msra.mxu0 0.0
    %1285 = vmatprep.subr.mxu0 0.0
    %1286 = vmatpush1.xpose.msra.mxu0 0.0
    %1287 = vmatprep.subr.mxu0 0.0
    %1288 = vmatpush1.xpose.msra.mxu0 0.0
    %1289 = vmatprep.subr.mxu0 0.0
    %1290 = vmatpush1.xpose.msra.mxu0 0.0
    %1291 = vmatprep.subr.mxu0 0.0
    %1292 = vmatpush1.xpose.msra.mxu0 0.0
    %1293 = vmatprep.subr.mxu0 0.0
    %1294 = vmatpush1.xpose.msra.mxu0 0.0
    %1295 = vmatprep.subr.mxu0 0.0
    %1296 = vmatpush1.xpose.msra.mxu0 0.0
    %1297 = vmatprep.subr.mxu0 0.0
    %1298 = vmatpush1.xpose.msra.mxu0 0.0
    %1299 = vmatprep.subr.mxu0 0.0
    %1300 = vmatpush1.xpose.msra.mxu0 0.0
    %1301 = vmatprep.subr.mxu0 0.0
    %1302 = vmatpush1.xpose.msra.mxu0 0.0
    %1303 = vmatprep.subr.mxu0 0.0
    %1304 = vmatpush1.xpose.msra.mxu0 0.0
    %1305 = vmatprep.subr.mxu0 0.0
    %1306 = vmatpush1.xpose.msra.mxu0 0.0
    %1307 = vmatprep.subr.mxu0 0.0
    %1308 = vmatpush1.xpose.msra.mxu0 0.0
    %1309 = vmatprep.subr.mxu0 0.0
    %1310 = vmatpush1.xpose.msra.mxu0 0.0
    %1311 = vmatprep.subr.mxu0 0.0
    %1312 = vmatpush1.xpose.msra.mxu0 0.0
    %1313 = vmatprep.subr.mxu0 0.0
    %1314 = vmatpush1.xpose.msra.mxu0 0.0
    %1315 = vmatprep.subr.mxu0 0.0
    %1316 = vmatpush1.xpose.msra.mxu0 0.0
    %1317 = vmatprep.subr.mxu0 0.0
    %1318 = vmatpush1.xpose.msra.mxu0 0.0
    %1319 = vmatprep.subr.mxu0 0.0
    %1320 = vmatpush1.xpose.msra.mxu0 0.0
    %1321 = vmatprep.subr.mxu0 0.0
    %1322 = vmatpush1.xpose.msra.mxu0 0.0
    %1323 = vmatprep.subr.mxu0 0.0
    %1324 = vmatpush1.xpose.msra.mxu0 0.0
    %1325 = vmatprep.subr.mxu0 0.0
    %1326 = vmatpush1.xpose.msra.mxu0 0.0
    %1327 = vmatprep.subr.mxu0 0.0
    %1328 = vmatpush1.xpose.msra.mxu0 0.0
    %1329 = vmatprep.subr.mxu0 0.0
    %1330 = vmatpush1.xpose.msra.mxu0 0.0
    %1331 = vmatprep.subr.mxu0 0.0
    %1332 = vmatpush1.xpose.msra.mxu0 0.0
    %1333 = vmatprep.mubr.f32.mxu0 0.0
    %1334 = vmatmul.mubr.f32.gmra.mrb[0].mxu0 %v1265
    %v1335 = vpop.f32.mrb[0].mxu0
    %v1336 = vadd.f32 0.0, %v1335
    %v1337 = vpop.f32.mrb[0].mxu0
    %1338 = vdwg.mxu0
    %1339 = vrot.lane.b32.xlu0 %v508, 120
    %v1340 = vpop.permute.xlu0 %1339
    %1341 = vrot.lane.b32.xlu0 %v504, 88
    %v1342 = vpop.permute.xlu0 %1341
    %v1343 = vsel %vm513, %v1340, 0
    %v1345 = vsel %vm513, %v1342, 0
    %1347 = vmatprep.subr.mxu0 0.0
    %1348 = vmatpush1.xpose.msra.mxu0 %v1345
    %1349 = vmatprep.subr.mxu0 0.0
    %1350 = vmatpush1.xpose.msra.mxu0 0.0
    %1351 = vmatprep.subr.mxu0 0.0
    %1352 = vmatpush1.xpose.msra.mxu0 0.0
    %1353 = vmatprep.subr.mxu0 0.0
    %1354 = vmatpush1.xpose.msra.mxu0 0.0
    %1355 = vmatprep.subr.mxu0 0.0
    %1356 = vmatpush1.xpose.msra.mxu0 0.0
    %1357 = vmatprep.subr.mxu0 0.0
    %1358 = vmatpush1.xpose.msra.mxu0 0.0
    %1359 = vmatprep.subr.mxu0 0.0
    %1360 = vmatpush1.xpose.msra.mxu0 0.0
    %1361 = vmatprep.subr.mxu0 0.0
    %1362 = vmatpush1.xpose.msra.mxu0 0.0
    %1363 = vmatprep.subr.mxu0 0.0
    %1364 = vmatpush1.xpose.msra.mxu0 0.0
    %1365 = vmatprep.subr.mxu0 0.0
    %1366 = vmatpush1.xpose.msra.mxu0 0.0
    %1367 = vmatprep.subr.mxu0 0.0
    %1368 = vmatpush1.xpose.msra.mxu0 0.0
    %1369 = vmatprep.subr.mxu0 0.0
    %1370 = vmatpush1.xpose.msra.mxu0 0.0
    %1371 = vmatprep.subr.mxu0 0.0
    %1372 = vmatpush1.xpose.msra.mxu0 0.0
    %1373 = vmatprep.subr.mxu0 0.0
    %1374 = vmatpush1.xpose.msra.mxu0 0.0
    %1375 = vmatprep.subr.mxu0 0.0
    %1376 = vmatpush1.xpose.msra.mxu0 0.0
    %1377 = vmatprep.subr.mxu0 0.0
    %1378 = vmatpush1.xpose.msra.mxu0 0.0
    %1379 = vmatprep.subr.mxu0 0.0
    %1380 = vmatpush1.xpose.msra.mxu0 0.0
    %1381 = vmatprep.subr.mxu0 0.0
    %1382 = vmatpush1.xpose.msra.mxu0 0.0
    %1383 = vmatprep.subr.mxu0 0.0
    %1384 = vmatpush1.xpose.msra.mxu0 0.0
    %1385 = vmatprep.subr.mxu0 0.0
    %1386 = vmatpush1.xpose.msra.mxu0 0.0
    %1387 = vmatprep.subr.mxu0 0.0
    %1388 = vmatpush1.xpose.msra.mxu0 0.0
    %1389 = vmatprep.subr.mxu0 0.0
    %1390 = vmatpush1.xpose.msra.mxu0 0.0
    %1391 = vmatprep.subr.mxu0 0.0
    %1392 = vmatpush1.xpose.msra.mxu0 0.0
    %1393 = vmatprep.subr.mxu0 0.0
    %1394 = vmatpush1.xpose.msra.mxu0 0.0
    %1395 = vmatprep.subr.mxu0 0.0
    %1396 = vmatpush1.xpose.msra.mxu0 0.0
    %1397 = vmatprep.subr.mxu0 0.0
    %1398 = vmatpush1.xpose.msra.mxu0 0.0
    %1399 = vmatprep.subr.mxu0 0.0
    %1400 = vmatpush1.xpose.msra.mxu0 0.0
    %1401 = vmatprep.subr.mxu0 0.0
    %1402 = vmatpush1.xpose.msra.mxu0 0.0
    %1403 = vmatprep.subr.mxu0 0.0
    %1404 = vmatpush1.xpose.msra.mxu0 0.0
    %1405 = vmatprep.subr.mxu0 0.0
    %1406 = vmatpush1.xpose.msra.mxu0 0.0
    %1407 = vmatprep.subr.mxu0 0.0
    %1408 = vmatpush1.xpose.msra.mxu0 0.0
    %1409 = vmatprep.subr.mxu0 0.0
    %1410 = vmatpush1.xpose.msra.mxu0 0.0
    %1411 = vmatprep.mubr.f32.mxu0 0.0
    %1412 = vmatmul.mubr.f32.gmra.mrb[0].mxu0 %v1343
    %v1413 = vpop.f32.mrb[0].mxu0
    %v1414 = vadd.f32 0.0, %v1413
    %v1415 = vpop.f32.mrb[0].mxu0
    %1416 = vdwg.mxu0
    %1417 = vrot.lane.b32.xlu0 %v509, 120
    %v1418 = vpop.permute.xlu0 %1417
    %1419 = vrot.lane.b32.xlu0 %v505, 88
    %v1420 = vpop.permute.xlu0 %1419
    %v1421 = vsel %vm513, %v1418, 0
    %v1423 = vsel %vm513, %v1420, 0
    %1425 = vmatprep.subr.mxu0 0.0
    %1426 = vmatpush1.xpose.msra.mxu0 %v1423
    %1427 = vmatprep.subr.mxu0 0.0
    %1428 = vmatpush1.xpose.msra.mxu0 0.0
    %1429 = vmatprep.subr.mxu0 0.0
    %1430 = vmatpush1.xpose.msra.mxu0 0.0
    %1431 = vmatprep.subr.mxu0 0.0
    %1432 = vmatpush1.xpose.msra.mxu0 0.0
    %1433 = vmatprep.subr.mxu0 0.0
    %1434 = vmatpush1.xpose.msra.mxu0 0.0
    %1435 = vmatprep.subr.mxu0 0.0
    %1436 = vmatpush1.xpose.msra.mxu0 0.0
    %1437 = vmatprep.subr.mxu0 0.0
    %1438 = vmatpush1.xpose.msra.mxu0 0.0
    %1439 = vmatprep.subr.mxu0 0.0
    %1440 = vmatpush1.xpose.msra.mxu0 0.0
    %1441 = vmatprep.subr.mxu0 0.0
    %1442 = vmatpush1.xpose.msra.mxu0 0.0
    %1443 = vmatprep.subr.mxu0 0.0
    %1444 = vmatpush1.xpose.msra.mxu0 0.0
    %1445 = vmatprep.subr.mxu0 0.0
    %1446 = vmatpush1.xpose.msra.mxu0 0.0
    %1447 = vmatprep.subr.mxu0 0.0
    %1448 = vmatpush1.xpose.msra.mxu0 0.0
    %1449 = vmatprep.subr.mxu0 0.0
    %1450 = vmatpush1.xpose.msra.mxu0 0.0
    %1451 = vmatprep.subr.mxu0 0.0
    %1452 = vmatpush1.xpose.msra.mxu0 0.0
    %1453 = vmatprep.subr.mxu0 0.0
    %1454 = vmatpush1.xpose.msra.mxu0 0.0
    %1455 = vmatprep.subr.mxu0 0.0
    %1456 = vmatpush1.xpose.msra.mxu0 0.0
    %1457 = vmatprep.subr.mxu0 0.0
    %1458 = vmatpush1.xpose.msra.mxu0 0.0
    %1459 = vmatprep.subr.mxu0 0.0
    %1460 = vmatpush1.xpose.msra.mxu0 0.0
    %1461 = vmatprep.subr.mxu0 0.0
    %1462 = vmatpush1.xpose.msra.mxu0 0.0
    %1463 = vmatprep.subr.mxu0 0.0
    %1464 = vmatpush1.xpose.msra.mxu0 0.0
    %1465 = vmatprep.subr.mxu0 0.0
    %1466 = vmatpush1.xpose.msra.mxu0 0.0
    %1467 = vmatprep.subr.mxu0 0.0
    %1468 = vmatpush1.xpose.msra.mxu0 0.0
    %1469 = vmatprep.subr.mxu0 0.0
    %1470 = vmatpush1.xpose.msra.mxu0 0.0
    %1471 = vmatprep.subr.mxu0 0.0
    %1472 = vmatpush1.xpose.msra.mxu0 0.0
    %1473 = vmatprep.subr.mxu0 0.0
    %1474 = vmatpush1.xpose.msra.mxu0 0.0
    %1475 = vmatprep.subr.mxu0 0.0
    %1476 = vmatpush1.xpose.msra.mxu0 0.0
    %1477 = vmatprep.subr.mxu0 0.0
    %1478 = vmatpush1.xpose.msra.mxu0 0.0
    %1479 = vmatprep.subr.mxu0 0.0
    %1480 = vmatpush1.xpose.msra.mxu0 0.0
    %1481 = vmatprep.subr.mxu0 0.0
    %1482 = vmatpush1.xpose.msra.mxu0 0.0
    %1483 = vmatprep.subr.mxu0 0.0
    %1484 = vmatpush1.xpose.msra.mxu0 0.0
    %1485 = vmatprep.subr.mxu0 0.0
    %1486 = vmatpush1.xpose.msra.mxu0 0.0
    %1487 = vmatprep.subr.mxu0 0.0
    %1488 = vmatpush1.xpose.msra.mxu0 0.0
    %1489 = vmatprep.mubr.f32.mxu0 0.0
    %1490 = vmatmul.mubr.f32.gmra.mrb[0].mxu0 %v1421
    %v1491 = vpop.f32.mrb[0].mxu0
    %v1492 = vadd.f32 0.0, %v1491
    %v1493 = vpop.f32.mrb[0].mxu0
    %1494 = vdwg.mxu0
    %v1495 = vsel %vm513, %v1258, -inf
    %1496 = vmax.xlane.f32.xlu0 %v1495
    %v1497 = vpop.xlane.xlu0 %1496
    %v1498 = vsel %vm513, %v1336, -inf
    %1499 = vmax.xlane.f32.xlu0 %v1498
    %v1500 = vpop.xlane.xlu0 %1499
    %v1501 = vsel %vm513, %v1414, -inf
    %1502 = vmax.xlane.f32.xlu0 %v1501
    %v1503 = vpop.xlane.xlu0 %1502
    %v1504 = vsel %vm513, %v1492, -inf
    %1505 = vmax.xlane.f32.xlu0 %v1504
    %v1506 = vpop.xlane.xlu0 %1505
    %v1507 = vsub.f32 %v1258, %v1497
    %v1508 = vsub.f32 %v1336, %v1500
    %v1509 = vsub.f32 %v1414, %v1503
    %v1510 = vsub.f32 %v1492, %v1506
    %v1511 = vmul.f32 %v1507, 1.442695
    %v1512 = vpow.pop %v1511
    %v1513 = vmul.f32 %v1508, 1.442695
    %v1514 = vpow.pop %v1513
    %v1515 = vmul.f32 %v1509, 1.442695
    %v1516 = vpow.pop %v1515
    %v1517 = vmul.f32 %v1510, 1.442695
    %v1518 = vpow.pop %v1517
    %v1519 = vsel %vm513, %v1512, 0.0
    %1520 = vadd.xlane.f32.xlu0 %v1519
    %v1521 = vpop.xlane.xlu0 %1520
    %v1522 = vsel %vm513, %v1514, 0.0
    %1523 = vadd.xlane.f32.xlu0 %v1522
    %v1524 = vpop.xlane.xlu0 %1523
    %v1525 = vsel %vm513, %v1516, 0.0
    %1526 = vadd.xlane.f32.xlu0 %v1525
    %v1527 = vpop.xlane.xlu0 %1526
    %v1528 = vsel %vm513, %v1518, 0.0
    %1529 = vadd.xlane.f32.xlu0 %v1528
    %v1530 = vpop.xlane.xlu0 %1529
    %v1531 = vrcp.pop %v1521
    %v1532 = vrcp.pop %v1524
    %v1533 = vrcp.pop %v1527
    %v1534 = vrcp.pop %v1530
    %v1535 = vmul.f32 %v1521, %v1531
    %v1536 = vmul.f32 %v1524, %v1532
    %v1537 = vmul.f32 %v1527, %v1533
    %v1538 = vmul.f32 %v1530, %v1534
    %v1539 = vsub.f32 2.0, %v1535
    %v1540 = vsub.f32 2.0, %v1536
    %v1541 = vsub.f32 2.0, %v1537
    %v1542 = vsub.f32 2.0, %v1538
    %v1543 = vmul.f32 %v1531, %v1539
    %v1544 = vmul.f32 %v1532, %v1540
    %v1545 = vmul.f32 %v1533, %v1541
    %v1546 = vmul.f32 %v1534, %v1542
    %v1547 = vmul.f32 %v1512, %v1543
    %v1548 = vmul.f32 %v1514, %v1544
    %v1549 = vmul.f32 %v1516, %v1545
    %v1550 = vmul.f32 %v1518, %v1546
    %1551 = vrot.lane.b32.xlu0 %v502, 56
    %v1552 = vpop.permute.xlu0 %1551
    %v1555 = vsel %vm513, %v1547, 0
    %1557 = vmatprep.subr.mxu0 0.0
    %1558 = vmatpush1.msra.mxu0 %v1552
    %1559 = vmatprep.subr.mxu0 0.0
    %1560 = vmatpush1.msra.mxu0 0.0
    %1561 = vmatprep.subr.mxu0 0.0
    %1562 = vmatpush1.msra.mxu0 0.0
    %1563 = vmatprep.subr.mxu0 0.0
    %1564 = vmatpush1.msra.mxu0 0.0
    %1565 = vmatprep.subr.mxu0 0.0
    %1566 = vmatpush1.msra.mxu0 0.0
    %1567 = vmatprep.subr.mxu0 0.0
    %1568 = vmatpush1.msra.mxu0 0.0
    %1569 = vmatprep.subr.mxu0 0.0
    %1570 = vmatpush1.msra.mxu0 0.0
    %1571 = vmatprep.subr.mxu0 0.0
    %1572 = vmatpush1.msra.mxu0 0.0
    %1573 = vmatprep.subr.mxu0 0.0
    %1574 = vmatpush1.msra.mxu0 0.0
    %1575 = vmatprep.subr.mxu0 0.0
    %1576 = vmatpush1.msra.mxu0 0.0
    %1577 = vmatprep.subr.mxu0 0.0
    %1578 = vmatpush1.msra.mxu0 0.0
    %1579 = vmatprep.subr.mxu0 0.0
    %1580 = vmatpush1.msra.mxu0 0.0
    %1581 = vmatprep.subr.mxu0 0.0
    %1582 = vmatpush1.msra.mxu0 0.0
    %1583 = vmatprep.subr.mxu0 0.0
    %1584 = vmatpush1.msra.mxu0 0.0
    %1585 = vmatprep.subr.mxu0 0.0
    %1586 = vmatpush1.msra.mxu0 0.0
    %1587 = vmatprep.subr.mxu0 0.0
    %1588 = vmatpush1.msra.mxu0 0.0
    %1589 = vmatprep.subr.mxu0 0.0
    %1590 = vmatpush1.msra.mxu0 0.0
    %1591 = vmatprep.subr.mxu0 0.0
    %1592 = vmatpush1.msra.mxu0 0.0
    %1593 = vmatprep.subr.mxu0 0.0
    %1594 = vmatpush1.msra.mxu0 0.0
    %1595 = vmatprep.subr.mxu0 0.0
    %1596 = vmatpush1.msra.mxu0 0.0
    %1597 = vmatprep.subr.mxu0 0.0
    %1598 = vmatpush1.msra.mxu0 0.0
    %1599 = vmatprep.subr.mxu0 0.0
    %1600 = vmatpush1.msra.mxu0 0.0
    %1601 = vmatprep.subr.mxu0 0.0
    %1602 = vmatpush1.msra.mxu0 0.0
    %1603 = vmatprep.subr.mxu0 0.0
    %1604 = vmatpush1.msra.mxu0 0.0
    %1605 = vmatprep.subr.mxu0 0.0
    %1606 = vmatpush1.msra.mxu0 0.0
    %1607 = vmatprep.subr.mxu0 0.0
    %1608 = vmatpush1.msra.mxu0 0.0
    %1609 = vmatprep.subr.mxu0 0.0
    %1610 = vmatpush1.msra.mxu0 0.0
    %1611 = vmatprep.subr.mxu0 0.0
    %1612 = vmatpush1.msra.mxu0 0.0
    %1613 = vmatprep.subr.mxu0 0.0
    %1614 = vmatpush1.msra.mxu0 0.0
    %1615 = vmatprep.subr.mxu0 0.0
    %1616 = vmatpush1.msra.mxu0 0.0
    %1617 = vmatprep.subr.mxu0 0.0
    %1618 = vmatpush1.msra.mxu0 0.0
    %1619 = vmatprep.subr.mxu0 0.0
    %1620 = vmatpush1.msra.mxu0 0.0
    %1621 = vmatprep.mubr.f32.mxu0 0.0
    %1622 = vmatmul.mubr.f32.gmra.mrb[0].mxu0 %v1555
    %v1623 = vpop.f32.mrb[0].mxu0
    %v1624 = vadd.f32 0.0, %v1623
    %v1625 = vpop.f32.mrb[0].mxu0
    %1626 = vdwg.mxu0
    %1627 = vrot.lane.b32.xlu0 %v503, 56
    %v1628 = vpop.permute.xlu0 %1627
    %v1631 = vsel %vm513, %v1548, 0
    %1633 = vmatprep.subr.mxu0 0.0
    %1634 = vmatpush1.msra.mxu0 %v1628
    %1635 = vmatprep.subr.mxu0 0.0
    %1636 = vmatpush1.msra.mxu0 0.0
    %1637 = vmatprep.subr.mxu0 0.0
    %1638 = vmatpush1.msra.mxu0 0.0
    %1639 = vmatprep.subr.mxu0 0.0
    %1640 = vmatpush1.msra.mxu0 0.0
    %1641 = vmatprep.subr.mxu0 0.0
    %1642 = vmatpush1.msra.mxu0 0.0
    %1643 = vmatprep.subr.mxu0 0.0
    %1644 = vmatpush1.msra.mxu0 0.0
    %1645 = vmatprep.subr.mxu0 0.0
    %1646 = vmatpush1.msra.mxu0 0.0
    %1647 = vmatprep.subr.mxu0 0.0
    %1648 = vmatpush1.msra.mxu0 0.0
    %1649 = vmatprep.subr.mxu0 0.0
    %1650 = vmatpush1.msra.mxu0 0.0
    %1651 = vmatprep.subr.mxu0 0.0
    %1652 = vmatpush1.msra.mxu0 0.0
    %1653 = vmatprep.subr.mxu0 0.0
    %1654 = vmatpush1.msra.mxu0 0.0
    %1655 = vmatprep.subr.mxu0 0.0
    %1656 = vmatpush1.msra.mxu0 0.0
    %1657 = vmatprep.subr.mxu0 0.0
    %1658 = vmatpush1.msra.mxu0 0.0
    %1659 = vmatprep.subr.mxu0 0.0
    %1660 = vmatpush1.msra.mxu0 0.0
    %1661 = vmatprep.subr.mxu0 0.0
    %1662 = vmatpush1.msra.mxu0 0.0
    %1663 = vmatprep.subr.mxu0 0.0
    %1664 = vmatpush1.msra.mxu0 0.0
    %1665 = vmatprep.subr.mxu0 0.0
    %1666 = vmatpush1.msra.mxu0 0.0
    %1667 = vmatprep.subr.mxu0 0.0
    %1668 = vmatpush1.msra.mxu0 0.0
    %1669 = vmatprep.subr.mxu0 0.0
    %1670 = vmatpush1.msra.mxu0 0.0
    %1671 = vmatprep.subr.mxu0 0.0
    %1672 = vmatpush1.msra.mxu0 0.0
    %1673 = vmatprep.subr.mxu0 0.0
    %1674 = vmatpush1.msra.mxu0 0.0
    %1675 = vmatprep.subr.mxu0 0.0
    %1676 = vmatpush1.msra.mxu0 0.0
    %1677 = vmatprep.subr.mxu0 0.0
    %1678 = vmatpush1.msra.mxu0 0.0
    %1679 = vmatprep.subr.mxu0 0.0
    %1680 = vmatpush1.msra.mxu0 0.0
    %1681 = vmatprep.subr.mxu0 0.0
    %1682 = vmatpush1.msra.mxu0 0.0
    %1683 = vmatprep.subr.mxu0 0.0
    %1684 = vmatpush1.msra.mxu0 0.0
    %1685 = vmatprep.subr.mxu0 0.0
    %1686 = vmatpush1.msra.mxu0 0.0
    %1687 = vmatprep.subr.mxu0 0.0
    %1688 = vmatpush1.msra.mxu0 0.0
    %1689 = vmatprep.subr.mxu0 0.0
    %1690 = vmatpush1.msra.mxu0 0.0
    %1691 = vmatprep.subr.mxu0 0.0
    %1692 = vmatpush1.msra.mxu0 0.0
    %1693 = vmatprep.subr.mxu0 0.0
    %1694 = vmatpush1.msra.mxu0 0.0
    %1695 = vmatprep.subr.mxu0 0.0
    %1696 = vmatpush1.msra.mxu0 0.0
    %1697 = vmatprep.mubr.f32.mxu0 0.0
    %1698 = vmatmul.mubr.f32.gmra.mrb[0].mxu0 %v1631
    %v1699 = vpop.f32.mrb[0].mxu0
    %v1700 = vadd.f32 0.0, %v1699
    %v1701 = vpop.f32.mrb[0].mxu0
    %1702 = vdwg.mxu0
    %1703 = vrot.lane.b32.xlu0 %v504, 56
    %v1704 = vpop.permute.xlu0 %1703
    %v1707 = vsel %vm513, %v1549, 0
    %1709 = vmatprep.subr.mxu0 0.0
    %1710 = vmatpush1.msra.mxu0 %v1704
    %1711 = vmatprep.subr.mxu0 0.0
    %1712 = vmatpush1.msra.mxu0 0.0
    %1713 = vmatprep.subr.mxu0 0.0
    %1714 = vmatpush1.msra.mxu0 0.0
    %1715 = vmatprep.subr.mxu0 0.0
    %1716 = vmatpush1.msra.mxu0 0.0
    %1717 = vmatprep.subr.mxu0 0.0
    %1718 = vmatpush1.msra.mxu0 0.0
    %1719 = vmatprep.subr.mxu0 0.0
    %1720 = vmatpush1.msra.mxu0 0.0
    %1721 = vmatprep.subr.mxu0 0.0
    %1722 = vmatpush1.msra.mxu0 0.0
    %1723 = vmatprep.subr.mxu0 0.0
    %1724 = vmatpush1.msra.mxu0 0.0
    %1725 = vmatprep.subr.mxu0 0.0
    %1726 = vmatpush1.msra.mxu0 0.0
    %1727 = vmatprep.subr.mxu0 0.0
    %1728 = vmatpush1.msra.mxu0 0.0
    %1729 = vmatprep.subr.mxu0 0.0
    %1730 = vmatpush1.msra.mxu0 0.0
    %1731 = vmatprep.subr.mxu0 0.0
    %1732 = vmatpush1.msra.mxu0 0.0
    %1733 = vmatprep.subr.mxu0 0.0
    %1734 = vmatpush1.msra.mxu0 0.0
    %1735 = vmatprep.subr.mxu0 0.0
    %1736 = vmatpush1.msra.mxu0 0.0
    %1737 = vmatprep.subr.mxu0 0.0
    %1738 = vmatpush1.msra.mxu0 0.0
    %1739 = vmatprep.subr.mxu0 0.0
    %1740 = vmatpush1.msra.mxu0 0.0
    %1741 = vmatprep.subr.mxu0 0.0
    %1742 = vmatpush1.msra.mxu0 0.0
    %1743 = vmatprep.subr.mxu0 0.0
    %1744 = vmatpush1.msra.mxu0 0.0
    %1745 = vmatprep.subr.mxu0 0.0
    %1746 = vmatpush1.msra.mxu0 0.0
    %1747 = vmatprep.subr.mxu0 0.0
    %1748 = vmatpush1.msra.mxu0 0.0
    %1749 = vmatprep.subr.mxu0 0.0
    %1750 = vmatpush1.msra.mxu0 0.0
    %1751 = vmatprep.subr.mxu0 0.0
    %1752 = vmatpush1.msra.mxu0 0.0
    %1753 = vmatprep.subr.mxu0 0.0
    %1754 = vmatpush1.msra.mxu0 0.0
    %1755 = vmatprep.subr.mxu0 0.0
    %1756 = vmatpush1.msra.mxu0 0.0
    %1757 = vmatprep.subr.mxu0 0.0
    %1758 = vmatpush1.msra.mxu0 0.0
    %1759 = vmatprep.subr.mxu0 0.0
    %1760 = vmatpush1.msra.mxu0 0.0
    %1761 = vmatprep.subr.mxu0 0.0
    %1762 = vmatpush1.msra.mxu0 0.0
    %1763 = vmatprep.subr.mxu0 0.0
    %1764 = vmatpush1.msra.mxu0 0.0
    %1765 = vmatprep.subr.mxu0 0.0
    %1766 = vmatpush1.msra.mxu0 0.0
    %1767 = vmatprep.subr.mxu0 0.0
    %1768 = vmatpush1.msra.mxu0 0.0
    %1769 = vmatprep.subr.mxu0 0.0
    %1770 = vmatpush1.msra.mxu0 0.0
    %1771 = vmatprep.subr.mxu0 0.0
    %1772 = vmatpush1.msra.mxu0 0.0
    %1773 = vmatprep.mubr.f32.mxu0 0.0
    %1774 = vmatmul.mubr.f32.gmra.mrb[0].mxu0 %v1707
    %v1775 = vpop.f32.mrb[0].mxu0
    %v1776 = vadd.f32 0.0, %v1775
    %v1777 = vpop.f32.mrb[0].mxu0
    %1778 = vdwg.mxu0
    %1779 = vrot.lane.b32.xlu0 %v505, 56
    %v1780 = vpop.permute.xlu0 %1779
    %v1783 = vsel %vm513, %v1550, 0
    %1785 = vmatprep.subr.mxu0 0.0
    %1786 = vmatpush1.msra.mxu0 %v1780
    %1787 = vmatprep.subr.mxu0 0.0
    %1788 = vmatpush1.msra.mxu0 0.0
    %1789 = vmatprep.subr.mxu0 0.0
    %1790 = vmatpush1.msra.mxu0 0.0
    %1791 = vmatprep.subr.mxu0 0.0
    %1792 = vmatpush1.msra.mxu0 0.0
    %1793 = vmatprep.subr.mxu0 0.0
    %1794 = vmatpush1.msra.mxu0 0.0
    %1795 = vmatprep.subr.mxu0 0.0
    %1796 = vmatpush1.msra.mxu0 0.0
    %1797 = vmatprep.subr.mxu0 0.0
    %1798 = vmatpush1.msra.mxu0 0.0
    %1799 = vmatprep.subr.mxu0 0.0
    %1800 = vmatpush1.msra.mxu0 0.0
    %1801 = vmatprep.subr.mxu0 0.0
    %1802 = vmatpush1.msra.mxu0 0.0
    %1803 = vmatprep.subr.mxu0 0.0
    %1804 = vmatpush1.msra.mxu0 0.0
    %1805 = vmatprep.subr.mxu0 0.0
    %1806 = vmatpush1.msra.mxu0 0.0
    %1807 = vmatprep.subr.mxu0 0.0
    %1808 = vmatpush1.msra.mxu0 0.0
    %1809 = vmatprep.subr.mxu0 0.0
    %1810 = vmatpush1.msra.mxu0 0.0
    %1811 = vmatprep.subr.mxu0 0.0
    %1812 = vmatpush1.msra.mxu0 0.0
    %1813 = vmatprep.subr.mxu0 0.0
    %1814 = vmatpush1.msra.mxu0 0.0
    %1815 = vmatprep.subr.mxu0 0.0
    %1816 = vmatpush1.msra.mxu0 0.0
    %1817 = vmatprep.subr.mxu0 0.0
    %1818 = vmatpush1.msra.mxu0 0.0
    %1819 = vmatprep.subr.mxu0 0.0
    %1820 = vmatpush1.msra.mxu0 0.0
    %1821 = vmatprep.subr.mxu0 0.0
    %1822 = vmatpush1.msra.mxu0 0.0
    %1823 = vmatprep.subr.mxu0 0.0
    %1824 = vmatpush1.msra.mxu0 0.0
    %1825 = vmatprep.subr.mxu0 0.0
    %1826 = vmatpush1.msra.mxu0 0.0
    %1827 = vmatprep.subr.mxu0 0.0
    %1828 = vmatpush1.msra.mxu0 0.0
    %1829 = vmatprep.subr.mxu0 0.0
    %1830 = vmatpush1.msra.mxu0 0.0
    %1831 = vmatprep.subr.mxu0 0.0
    %1832 = vmatpush1.msra.mxu0 0.0
    %1833 = vmatprep.subr.mxu0 0.0
    %1834 = vmatpush1.msra.mxu0 0.0
    %1835 = vmatprep.subr.mxu0 0.0
    %1836 = vmatpush1.msra.mxu0 0.0
    %1837 = vmatprep.subr.mxu0 0.0
    %1838 = vmatpush1.msra.mxu0 0.0
    %1839 = vmatprep.subr.mxu0 0.0
    %1840 = vmatpush1.msra.mxu0 0.0
    %1841 = vmatprep.subr.mxu0 0.0
    %1842 = vmatpush1.msra.mxu0 0.0
    %1843 = vmatprep.subr.mxu0 0.0
    %1844 = vmatpush1.msra.mxu0 0.0
    %1845 = vmatprep.subr.mxu0 0.0
    %1846 = vmatpush1.msra.mxu0 0.0
    %1847 = vmatprep.subr.mxu0 0.0
    %1848 = vmatpush1.msra.mxu0 0.0
    %1849 = vmatprep.mubr.f32.mxu0 0.0
    %1850 = vmatmul.mubr.f32.gmra.mrb[0].mxu0 %v1783
    %v1851 = vpop.f32.mrb[0].mxu0
    %v1852 = vadd.f32 0.0, %v1851
    %v1853 = vpop.f32.mrb[0].mxu0
    %1854 = vdwg.mxu0
    %1855 = vrot.lane.b32.xlu0 %v506, 112
    %v1856 = vpop.permute.xlu0 %1855
    %1857 = vrot.lane.b32.xlu0 %v502, 80
    %v1858 = vpop.permute.xlu0 %1857
    %v1859 = vsel %vm513, %v1856, 0
    %v1861 = vsel %vm513, %v1858, 0
    %1863 = vmatprep.subr.mxu0 0.0
    %1864 = vmatpush1.xpose.msra.mxu0 %v1861
    %1865 = vmatprep.subr.mxu0 0.0
    %1866 = vmatpush1.xpose.msra.mxu0 0.0
    %1867 = vmatprep.subr.mxu0 0.0
    %1868 = vmatpush1.xpose.msra.mxu0 0.0
    %1869 = vmatprep.subr.mxu0 0.0
    %1870 = vmatpush1.xpose.msra.mxu0 0.0
    %1871 = vmatprep.subr.mxu0 0.0
    %1872 = vmatpush1.xpose.msra.mxu0 0.0
    %1873 = vmatprep.subr.mxu0 0.0
    %1874 = vmatpush1.xpose.msra.mxu0 0.0
    %1875 = vmatprep.subr.mxu0 0.0
    %1876 = vmatpush1.xpose.msra.mxu0 0.0
    %1877 = vmatprep.subr.mxu0 0.0
    %1878 = vmatpush1.xpose.msra.mxu0 0.0
    %1879 = vmatprep.subr.mxu0 0.0
    %1880 = vmatpush1.xpose.msra.mxu0 0.0
    %1881 = vmatprep.subr.mxu0 0.0
    %1882 = vmatpush1.xpose.msra.mxu0 0.0
    %1883 = vmatprep.subr.mxu0 0.0
    %1884 = vmatpush1.xpose.msra.mxu0 0.0
    %1885 = vmatprep.subr.mxu0 0.0
    %1886 = vmatpush1.xpose.msra.mxu0 0.0
    %1887 = vmatprep.subr.mxu0 0.0
    %1888 = vmatpush1.xpose.msra.mxu0 0.0
    %1889 = vmatprep.subr.mxu0 0.0
    %1890 = vmatpush1.xpose.msra.mxu0 0.0
    %1891 = vmatprep.subr.mxu0 0.0
    %1892 = vmatpush1.xpose.msra.mxu0 0.0
    %1893 = vmatprep.subr.mxu0 0.0
    %1894 = vmatpush1.xpose.msra.mxu0 0.0
    %1895 = vmatprep.subr.mxu0 0.0
    %1896 = vmatpush1.xpose.msra.mxu0 0.0
    %1897 = vmatprep.subr.mxu0 0.0
    %1898 = vmatpush1.xpose.msra.mxu0 0.0
    %1899 = vmatprep.subr.mxu0 0.0
    %1900 = vmatpush1.xpose.msra.mxu0 0.0
    %1901 = vmatprep.subr.mxu0 0.0
    %1902 = vmatpush1.xpose.msra.mxu0 0.0
    %1903 = vmatprep.subr.mxu0 0.0
    %1904 = vmatpush1.xpose.msra.mxu0 0.0
    %1905 = vmatprep.subr.mxu0 0.0
    %1906 = vmatpush1.xpose.msra.mxu0 0.0
    %1907 = vmatprep.subr.mxu0 0.0
    %1908 = vmatpush1.xpose.msra.mxu0 0.0
    %1909 = vmatprep.subr.mxu0 0.0
    %1910 = vmatpush1.xpose.msra.mxu0 0.0
    %1911 = vmatprep.subr.mxu0 0.0
    %1912 = vmatpush1.xpose.msra.mxu0 0.0
    %1913 = vmatprep.subr.mxu0 0.0
    %1914 = vmatpush1.xpose.msra.mxu0 0.0
    %1915 = vmatprep.subr.mxu0 0.0
    %1916 = vmatpush1.xpose.msra.mxu0 0.0
    %1917 = vmatprep.subr.mxu0 0.0
    %1918 = vmatpush1.xpose.msra.mxu0 0.0
    %1919 = vmatprep.subr.mxu0 0.0
    %1920 = vmatpush1.xpose.msra.mxu0 0.0
    %1921 = vmatprep.subr.mxu0 0.0
    %1922 = vmatpush1.xpose.msra.mxu0 0.0
    %1923 = vmatprep.subr.mxu0 0.0
    %1924 = vmatpush1.xpose.msra.mxu0 0.0
    %1925 = vmatprep.subr.mxu0 0.0
    %1926 = vmatpush1.xpose.msra.mxu0 0.0
    %1927 = vmatprep.mubr.f32.mxu0 0.0
    %1928 = vmatmul.mubr.f32.gmra.mrb[0].mxu0 %v1859
    %v1929 = vpop.f32.mrb[0].mxu0
    %v1930 = vadd.f32 0.0, %v1929
    %v1931 = vpop.f32.mrb[0].mxu0
    %1932 = vdwg.mxu0
    %1933 = vrot.lane.b32.xlu0 %v507, 112
    %v1934 = vpop.permute.xlu0 %1933
    %1935 = vrot.lane.b32.xlu0 %v503, 80
    %v1936 = vpop.permute.xlu0 %1935
    %v1937 = vsel %vm513, %v1934, 0
    %v1939 = vsel %vm513, %v1936, 0
    %1941 = vmatprep.subr.mxu0 0.0
    %1942 = vmatpush1.xpose.msra.mxu0 %v1939
    %1943 = vmatprep.subr.mxu0 0.0
    %1944 = vmatpush1.xpose.msra.mxu0 0.0
    %1945 = vmatprep.subr.mxu0 0.0
    %1946 = vmatpush1.xpose.msra.mxu0 0.0
    %1947 = vmatprep.subr.mxu0 0.0
    %1948 = vmatpush1.xpose.msra.mxu0 0.0
    %1949 = vmatprep.subr.mxu0 0.0
    %1950 = vmatpush1.xpose.msra.mxu0 0.0
    %1951 = vmatprep.subr.mxu0 0.0
    %1952 = vmatpush1.xpose.msra.mxu0 0.0
    %1953 = vmatprep.subr.mxu0 0.0
    %1954 = vmatpush1.xpose.msra.mxu0 0.0
    %1955 = vmatprep.subr.mxu0 0.0
    %1956 = vmatpush1.xpose.msra.mxu0 0.0
    %1957 = vmatprep.subr.mxu0 0.0
    %1958 = vmatpush1.xpose.msra.mxu0 0.0
    %1959 = vmatprep.subr.mxu0 0.0
    %1960 = vmatpush1.xpose.msra.mxu0 0.0
    %1961 = vmatprep.subr.mxu0 0.0
    %1962 = vmatpush1.xpose.msra.mxu0 0.0
    %1963 = vmatprep.subr.mxu0 0.0
    %1964 = vmatpush1.xpose.msra.mxu0 0.0
    %1965 = vmatprep.subr.mxu0 0.0
    %1966 = vmatpush1.xpose.msra.mxu0 0.0
    %1967 = vmatprep.subr.mxu0 0.0
    %1968 = vmatpush1.xpose.msra.mxu0 0.0
    %1969 = vmatprep.subr.mxu0 0.0
    %1970 = vmatpush1.xpose.msra.mxu0 0.0
    %1971 = vmatprep.subr.mxu0 0.0
    %1972 = vmatpush1.xpose.msra.mxu0 0.0
    %1973 = vmatprep.subr.mxu0 0.0
    %1974 = vmatpush1.xpose.msra.mxu0 0.0
    %1975 = vmatprep.subr.mxu0 0.0
    %1976 = vmatpush1.xpose.msra.mxu0 0.0
    %1977 = vmatprep.subr.mxu0 0.0
    %1978 = vmatpush1.xpose.msra.mxu0 0.0
    %1979 = vmatprep.subr.mxu0 0.0
    %1980 = vmatpush1.xpose.msra.mxu0 0.0
    %1981 = vmatprep.subr.mxu0 0.0
    %1982 = vmatpush1.xpose.msra.mxu0 0.0
    %1983 = vmatprep.subr.mxu0 0.0
    %1984 = vmatpush1.xpose.msra.mxu0 0.0
    %1985 = vmatprep.subr.mxu0 0.0
    %1986 = vmatpush1.xpose.msra.mxu0 0.0
    %1987 = vmatprep.subr.mxu0 0.0
    %1988 = vmatpush1.xpose.msra.mxu0 0.0
    %1989 = vmatprep.subr.mxu0 0.0
    %1990 = vmatpush1.xpose.msra.mxu0 0.0
    %1991 = vmatprep.subr.mxu0 0.0
    %1992 = vmatpush1.xpose.msra.mxu0 0.0
    %1993 = vmatprep.subr.mxu0 0.0
    %1994 = vmatpush1.xpose.msra.mxu0 0.0
    %1995 = vmatprep.subr.mxu0 0.0
    %1996 = vmatpush1.xpose.msra.mxu0 0.0
    %1997 = vmatprep.subr.mxu0 0.0
    %1998 = vmatpush1.xpose.msra.mxu0 0.0
    %1999 = vmatprep.subr.mxu0 0.0
    %2000 = vmatpush1.xpose.msra.mxu0 0.0
    %2001 = vmatprep.subr.mxu0 0.0
    %2002 = vmatpush1.xpose.msra.mxu0 0.0
    %2003 = vmatprep.subr.mxu0 0.0
    %2004 = vmatpush1.xpose.msra.mxu0 0.0
    %2005 = vmatprep.mubr.f32.mxu0 0.0
    %2006 = vmatmul.mubr.f32.gmra.mrb[0].mxu0 %v1937
    %v2007 = vpop.f32.mrb[0].mxu0
    %v2008 = vadd.f32 0.0, %v2007
    %v2009 = vpop.f32.mrb[0].mxu0
    %2010 = vdwg.mxu0
    %2011 = vrot.lane.b32.xlu0 %v508, 112
    %v2012 = vpop.permute.xlu0 %2011
    %2013 = vrot.lane.b32.xlu0 %v504, 80
    %v2014 = vpop.permute.xlu0 %2013
    %v2015 = vsel %vm513, %v2012, 0
    %v2017 = vsel %vm513, %v2014, 0
    %2019 = vmatprep.subr.mxu0 0.0
    %2020 = vmatpush1.xpose.msra.mxu0 %v2017
    %2021 = vmatprep.subr.mxu0 0.0
    %2022 = vmatpush1.xpose.msra.mxu0 0.0
    %2023 = vmatprep.subr.mxu0 0.0
    %2024 = vmatpush1.xpose.msra.mxu0 0.0
    %2025 = vmatprep.subr.mxu0 0.0
    %2026 = vmatpush1.xpose.msra.mxu0 0.0
    %2027 = vmatprep.subr.mxu0 0.0
    %2028 = vmatpush1.xpose.msra.mxu0 0.0
    %2029 = vmatprep.subr.mxu0 0.0
    %2030 = vmatpush1.xpose.msra.mxu0 0.0
    %2031 = vmatprep.subr.mxu0 0.0
    %2032 = vmatpush1.xpose.msra.mxu0 0.0
    %2033 = vmatprep.subr.mxu0 0.0
    %2034 = vmatpush1.xpose.msra.mxu0 0.0
    %2035 = vmatprep.subr.mxu0 0.0
    %2036 = vmatpush1.xpose.msra.mxu0 0.0
    %2037 = vmatprep.subr.mxu0 0.0
    %2038 = vmatpush1.xpose.msra.mxu0 0.0
    %2039 = vmatprep.subr.mxu0 0.0
    %2040 = vmatpush1.xpose.msra.mxu0 0.0
    %2041 = vmatprep.subr.mxu0 0.0
    %2042 = vmatpush1.xpose.msra.mxu0 0.0
    %2043 = vmatprep.subr.mxu0 0.0
    %2044 = vmatpush1.xpose.msra.mxu0 0.0
    %2045 = vmatprep.subr.mxu0 0.0
    %2046 = vmatpush1.xpose.msra.mxu0 0.0
    %2047 = vmatprep.subr.mxu0 0.0
    %2048 = vmatpush1.xpose.msra.mxu0 0.0
    %2049 = vmatprep.subr.mxu0 0.0
    %2050 = vmatpush1.xpose.msra.mxu0 0.0
    %2051 = vmatprep.subr.mxu0 0.0
    %2052 = vmatpush1.xpose.msra.mxu0 0.0
    %2053 = vmatprep.subr.mxu0 0.0
    %2054 = vmatpush1.xpose.msra.mxu0 0.0
    %2055 = vmatprep.subr.mxu0 0.0
    %2056 = vmatpush1.xpose.msra.mxu0 0.0
    %2057 = vmatprep.subr.mxu0 0.0
    %2058 = vmatpush1.xpose.msra.mxu0 0.0
    %2059 = vmatprep.subr.mxu0 0.0
    %2060 = vmatpush1.xpose.msra.mxu0 0.0
    %2061 = vmatprep.subr.mxu0 0.0
    %2062 = vmatpush1.xpose.msra.mxu0 0.0
    %2063 = vmatprep.subr.mxu0 0.0
    %2064 = vmatpush1.xpose.msra.mxu0 0.0
    %2065 = vmatprep.subr.mxu0 0.0
    %2066 = vmatpush1.xpose.msra.mxu0 0.0
    %2067 = vmatprep.subr.mxu0 0.0
    %2068 = vmatpush1.xpose.msra.mxu0 0.0
    %2069 = vmatprep.subr.mxu0 0.0
    %2070 = vmatpush1.xpose.msra.mxu0 0.0
    %2071 = vmatprep.subr.mxu0 0.0
    %2072 = vmatpush1.xpose.msra.mxu0 0.0
    %2073 = vmatprep.subr.mxu0 0.0
    %2074 = vmatpush1.xpose.msra.mxu0 0.0
    %2075 = vmatprep.subr.mxu0 0.0
    %2076 = vmatpush1.xpose.msra.mxu0 0.0
    %2077 = vmatprep.subr.mxu0 0.0
    %2078 = vmatpush1.xpose.msra.mxu0 0.0
    %2079 = vmatprep.subr.mxu0 0.0
    %2080 = vmatpush1.xpose.msra.mxu0 0.0
    %2081 = vmatprep.subr.mxu0 0.0
    %2082 = vmatpush1.xpose.msra.mxu0 0.0
    %2083 = vmatprep.mubr.f32.mxu0 0.0
    %2084 = vmatmul.mubr.f32.gmra.mrb[0].mxu0 %v2015
    %v2085 = vpop.f32.mrb[0].mxu0
    %v2086 = vadd.f32 0.0, %v2085
    %v2087 = vpop.f32.mrb[0].mxu0
    %2088 = vdwg.mxu0
    %2089 = vrot.lane.b32.xlu0 %v509, 112
    %v2090 = vpop.permute.xlu0 %2089
    %2091 = vrot.lane.b32.xlu0 %v505, 80
    %v2092 = vpop.permute.xlu0 %2091
    %v2093 = vsel %vm513, %v2090, 0
    %v2095 = vsel %vm513, %v2092, 0
    %2097 = vmatprep.subr.mxu0 0.0
    %2098 = vmatpush1.xpose.msra.mxu0 %v2095
    %2099 = vmatprep.subr.mxu0 0.0
    %2100 = vmatpush1.xpose.msra.mxu0 0.0
    %2101 = vmatprep.subr.mxu0 0.0
    %2102 = vmatpush1.xpose.msra.mxu0 0.0
    %2103 = vmatprep.subr.mxu0 0.0
    %2104 = vmatpush1.xpose.msra.mxu0 0.0
    %2105 = vmatprep.subr.mxu0 0.0
    %2106 = vmatpush1.xpose.msra.mxu0 0.0
    %2107 = vmatprep.subr.mxu0 0.0
    %2108 = vmatpush1.xpose.msra.mxu0 0.0
    %2109 = vmatprep.subr.mxu0 0.0
    %2110 = vmatpush1.xpose.msra.mxu0 0.0
    %2111 = vmatprep.subr.mxu0 0.0
    %2112 = vmatpush1.xpose.msra.mxu0 0.0
    %2113 = vmatprep.subr.mxu0 0.0
    %2114 = vmatpush1.xpose.msra.mxu0 0.0
    %2115 = vmatprep.subr.mxu0 0.0
    %2116 = vmatpush1.xpose.msra.mxu0 0.0
    %2117 = vmatprep.subr.mxu0 0.0
    %2118 = vmatpush1.xpose.msra.mxu0 0.0
    %2119 = vmatprep.subr.mxu0 0.0
    %2120 = vmatpush1.xpose.msra.mxu0 0.0
    %2121 = vmatprep.subr.mxu0 0.0
    %2122 = vmatpush1.xpose.msra.mxu0 0.0
    %2123 = vmatprep.subr.mxu0 0.0
    %2124 = vmatpush1.xpose.msra.mxu0 0.0
    %2125 = vmatprep.subr.mxu0 0.0
    %2126 = vmatpush1.xpose.msra.mxu0 0.0
    %2127 = vmatprep.subr.mxu0 0.0
    %2128 = vmatpush1.xpose.msra.mxu0 0.0
    %2129 = vmatprep.subr.mxu0 0.0
    %2130 = vmatpush1.xpose.msra.mxu0 0.0
    %2131 = vmatprep.subr.mxu0 0.0
    %2132 = vmatpush1.xpose.msra.mxu0 0.0
    %2133 = vmatprep.subr.mxu0 0.0
    %2134 = vmatpush1.xpose.msra.mxu0 0.0
    %2135 = vmatprep.subr.mxu0 0.0
    %2136 = vmatpush1.xpose.msra.mxu0 0.0
    %2137 = vmatprep.subr.mxu0 0.0
    %2138 = vmatpush1.xpose.msra.mxu0 0.0
    %2139 = vmatprep.subr.mxu0 0.0
    %2140 = vmatpush1.xpose.msra.mxu0 0.0
    %2141 = vmatprep.subr.mxu0 0.0
    %2142 = vmatpush1.xpose.msra.mxu0 0.0
    %2143 = vmatprep.subr.mxu0 0.0
    %2144 = vmatpush1.xpose.msra.mxu0 0.0
    %2145 = vmatprep.subr.mxu0 0.0
    %2146 = vmatpush1.xpose.msra.mxu0 0.0
    %2147 = vmatprep.subr.mxu0 0.0
    %2148 = vmatpush1.xpose.msra.mxu0 0.0
    %2149 = vmatprep.subr.mxu0 0.0
    %2150 = vmatpush1.xpose.msra.mxu0 0.0
    %2151 = vmatprep.subr.mxu0 0.0
    %2152 = vmatpush1.xpose.msra.mxu0 0.0
    %2153 = vmatprep.subr.mxu0 0.0
    %2154 = vmatpush1.xpose.msra.mxu0 0.0
    %2155 = vmatprep.subr.mxu0 0.0
    %2156 = vmatpush1.xpose.msra.mxu0 0.0
    %2157 = vmatprep.subr.mxu0 0.0
    %2158 = vmatpush1.xpose.msra.mxu0 0.0
    %2159 = vmatprep.subr.mxu0 0.0
    %2160 = vmatpush1.xpose.msra.mxu0 0.0
    %2161 = vmatprep.mubr.f32.mxu0 0.0
    %2162 = vmatmul.mubr.f32.gmra.mrb[0].mxu0 %v2093
    %v2163 = vpop.f32.mrb[0].mxu0
    %v2164 = vadd.f32 0.0, %v2163
    %v2165 = vpop.f32.mrb[0].mxu0
    %2166 = vdwg.mxu0
    %v2167 = vsel %vm513, %v1930, -inf
    %2168 = vmax.xlane.f32.xlu0 %v2167
    %v2169 = vpop.xlane.xlu0 %2168
    %v2170 = vsel %vm513, %v2008, -inf
    %2171 = vmax.xlane.f32.xlu0 %v2170
    %v2172 = vpop.xlane.xlu0 %2171
    %v2173 = vsel %vm513, %v2086, -inf
    %2174 = vmax.xlane.f32.xlu0 %v2173
    %v2175 = vpop.xlane.xlu0 %2174
    %v2176 = vsel %vm513, %v2164, -inf
    %2177 = vmax.xlane.f32.xlu0 %v2176
    %v2178 = vpop.xlane.xlu0 %2177
    %v2179 = vsub.f32 %v1930, %v2169
    %v2180 = vsub.f32 %v2008, %v2172
    %v2181 = vsub.f32 %v2086, %v2175
    %v2182 = vsub.f32 %v2164, %v2178
    %v2183 = vmul.f32 %v2179, 1.442695
    %v2184 = vpow.pop %v2183
    %v2185 = vmul.f32 %v2180, 1.442695
    %v2186 = vpow.pop %v2185
    %v2187 = vmul.f32 %v2181, 1.442695
    %v2188 = vpow.pop %v2187
    %v2189 = vmul.f32 %v2182, 1.442695
    %v2190 = vpow.pop %v2189
    %v2191 = vsel %vm513, %v2184, 0.0
    %2192 = vadd.xlane.f32.xlu0 %v2191
    %v2193 = vpop.xlane.xlu0 %2192
    %v2194 = vsel %vm513, %v2186, 0.0
    %2195 = vadd.xlane.f32.xlu0 %v2194
    %v2196 = vpop.xlane.xlu0 %2195
    %v2197 = vsel %vm513, %v2188, 0.0
    %2198 = vadd.xlane.f32.xlu0 %v2197
    %v2199 = vpop.xlane.xlu0 %2198
    %v2200 = vsel %vm513, %v2190, 0.0
    %2201 = vadd.xlane.f32.xlu0 %v2200
    %v2202 = vpop.xlane.xlu0 %2201
    %v2203 = vrcp.pop %v2193
    %v2204 = vrcp.pop %v2196
    %v2205 = vrcp.pop %v2199
    %v2206 = vrcp.pop %v2202
    %v2207 = vmul.f32 %v2193, %v2203
    %v2208 = vmul.f32 %v2196, %v2204
    %v2209 = vmul.f32 %v2199, %v2205
    %v2210 = vmul.f32 %v2202, %v2206
    %v2211 = vsub.f32 2.0, %v2207
    %v2212 = vsub.f32 2.0, %v2208
    %v2213 = vsub.f32 2.0, %v2209
    %v2214 = vsub.f32 2.0, %v2210
    %v2215 = vmul.f32 %v2203, %v2211
    %v2216 = vmul.f32 %v2204, %v2212
    %v2217 = vmul.f32 %v2205, %v2213
    %v2218 = vmul.f32 %v2206, %v2214
    %v2219 = vmul.f32 %v2184, %v2215
    %v2220 = vmul.f32 %v2186, %v2216
    %v2221 = vmul.f32 %v2188, %v2217
    %v2222 = vmul.f32 %v2190, %v2218
    %2223 = vrot.lane.b32.xlu0 %v502, 48
    %v2224 = vpop.permute.xlu0 %2223
    %v2227 = vsel %vm513, %v2219, 0
    %2229 = vmatprep.subr.mxu0 0.0
    %2230 = vmatpush1.msra.mxu0 %v2224
    %2231 = vmatprep.subr.mxu0 0.0
    %2232 = vmatpush1.msra.mxu0 0.0
    %2233 = vmatprep.subr.mxu0 0.0
    %2234 = vmatpush1.msra.mxu0 0.0
    %2235 = vmatprep.subr.mxu0 0.0
    %2236 = vmatpush1.msra.mxu0 0.0
    %2237 = vmatprep.subr.mxu0 0.0
    %2238 = vmatpush1.msra.mxu0 0.0
    %2239 = vmatprep.subr.mxu0 0.0
    %2240 = vmatpush1.msra.mxu0 0.0
    %2241 = vmatprep.subr.mxu0 0.0
    %2242 = vmatpush1.msra.mxu0 0.0
    %2243 = vmatprep.subr.mxu0 0.0
    %2244 = vmatpush1.msra.mxu0 0.0
    %2245 = vmatprep.subr.mxu0 0.0
    %2246 = vmatpush1.msra.mxu0 0.0
    %2247 = vmatprep.subr.mxu0 0.0
    %2248 = vmatpush1.msra.mxu0 0.0
    %2249 = vmatprep.subr.mxu0 0.0
    %2250 = vmatpush1.msra.mxu0 0.0
    %2251 = vmatprep.subr.mxu0 0.0
    %2252 = vmatpush1.msra.mxu0 0.0
    %2253 = vmatprep.subr.mxu0 0.0
    %2254 = vmatpush1.msra.mxu0 0.0
    %2255 = vmatprep.subr.mxu0 0.0
    %2256 = vmatpush1.msra.mxu0 0.0
    %2257 = vmatprep.subr.mxu0 0.0
    %2258 = vmatpush1.msra.mxu0 0.0
    %2259 = vmatprep.subr.mxu0 0.0
    %2260 = vmatpush1.msra.mxu0 0.0
    %2261 = vmatprep.subr.mxu0 0.0
    %2262 = vmatpush1.msra.mxu0 0.0
    %2263 = vmatprep.subr.mxu0 0.0
    %2264 = vmatpush1.msra.mxu0 0.0
    %2265 = vmatprep.subr.mxu0 0.0
    %2266 = vmatpush1.msra.mxu0 0.0
    %2267 = vmatprep.subr.mxu0 0.0
    %2268 = vmatpush1.msra.mxu0 0.0
    %2269 = vmatprep.subr.mxu0 0.0
    %2270 = vmatpush1.msra.mxu0 0.0
    %2271 = vmatprep.subr.mxu0 0.0
    %2272 = vmatpush1.msra.mxu0 0.0
    %2273 = vmatprep.subr.mxu0 0.0
    %2274 = vmatpush1.msra.mxu0 0.0
    %2275 = vmatprep.subr.mxu0 0.0
    %2276 = vmatpush1.msra.mxu0 0.0
    %2277 = vmatprep.subr.mxu0 0.0
    %2278 = vmatpush1.msra.mxu0 0.0
    %2279 = vmatprep.subr.mxu0 0.0
    %2280 = vmatpush1.msra.mxu0 0.0
    %2281 = vmatprep.subr.mxu0 0.0
    %2282 = vmatpush1.msra.mxu0 0.0
    %2283 = vmatprep.subr.mxu0 0.0
    %2284 = vmatpush1.msra.mxu0 0.0
    %2285 = vmatprep.subr.mxu0 0.0
    %2286 = vmatpush1.msra.mxu0 0.0
    %2287 = vmatprep.subr.mxu0 0.0
    %2288 = vmatpush1.msra.mxu0 0.0
    %2289 = vmatprep.subr.mxu0 0.0
    %2290 = vmatpush1.msra.mxu0 0.0
    %2291 = vmatprep.subr.mxu0 0.0
    %2292 = vmatpush1.msra.mxu0 0.0
    %2293 = vmatprep.mubr.f32.mxu0 0.0
    %2294 = vmatmul.mubr.f32.gmra.mrb[0].mxu0 %v2227
    %v2295 = vpop.f32.mrb[0].mxu0
    %v2296 = vadd.f32 0.0, %v2295
    %v2297 = vpop.f32.mrb[0].mxu0
    %2298 = vdwg.mxu0
    %2299 = vrot.lane.b32.xlu0 %v503, 48
    %v2300 = vpop.permute.xlu0 %2299
    %v2303 = vsel %vm513, %v2220, 0
    %2305 = vmatprep.subr.mxu0 0.0
    %2306 = vmatpush1.msra.mxu0 %v2300
    %2307 = vmatprep.subr.mxu0 0.0
    %2308 = vmatpush1.msra.mxu0 0.0
    %2309 = vmatprep.subr.mxu0 0.0
    %2310 = vmatpush1.msra.mxu0 0.0
    %2311 = vmatprep.subr.mxu0 0.0
    %2312 = vmatpush1.msra.mxu0 0.0
    %2313 = vmatprep.subr.mxu0 0.0
    %2314 = vmatpush1.msra.mxu0 0.0
    %2315 = vmatprep.subr.mxu0 0.0
    %2316 = vmatpush1.msra.mxu0 0.0
    %2317 = vmatprep.subr.mxu0 0.0
    %2318 = vmatpush1.msra.mxu0 0.0
    %2319 = vmatprep.subr.mxu0 0.0
    %2320 = vmatpush1.msra.mxu0 0.0
    %2321 = vmatprep.subr.mxu0 0.0
    %2322 = vmatpush1.msra.mxu0 0.0
    %2323 = vmatprep.subr.mxu0 0.0
    %2324 = vmatpush1.msra.mxu0 0.0
    %2325 = vmatprep.subr.mxu0 0.0
    %2326 = vmatpush1.msra.mxu0 0.0
    %2327 = vmatprep.subr.mxu0 0.0
    %2328 = vmatpush1.msra.mxu0 0.0
    %2329 = vmatprep.subr.mxu0 0.0
    %2330 = vmatpush1.msra.mxu0 0.0
    %2331 = vmatprep.subr.mxu0 0.0
    %2332 = vmatpush1.msra.mxu0 0.0
    %2333 = vmatprep.subr.mxu0 0.0
    %2334 = vmatpush1.msra.mxu0 0.0
    %2335 = vmatprep.subr.mxu0 0.0
    %2336 = vmatpush1.msra.mxu0 0.0
    %2337 = vmatprep.subr.mxu0 0.0
    %2338 = vmatpush1.msra.mxu0 0.0
    %2339 = vmatprep.subr.mxu0 0.0
    %2340 = vmatpush1.msra.mxu0 0.0
    %2341 = vmatprep.subr.mxu0 0.0
    %2342 = vmatpush1.msra.mxu0 0.0
    %2343 = vmatprep.subr.mxu0 0.0
    %2344 = vmatpush1.msra.mxu0 0.0
    %2345 = vmatprep.subr.mxu0 0.0
    %2346 = vmatpush1.msra.mxu0 0.0
    %2347 = vmatprep.subr.mxu0 0.0
    %2348 = vmatpush1.msra.mxu0 0.0
    %2349 = vmatprep.subr.mxu0 0.0
    %2350 = vmatpush1.msra.mxu0 0.0
    %2351 = vmatprep.subr.mxu0 0.0
    %2352 = vmatpush1.msra.mxu0 0.0
    %2353 = vmatprep.subr.mxu0 0.0
    %2354 = vmatpush1.msra.mxu0 0.0
    %2355 = vmatprep.subr.mxu0 0.0
    %2356 = vmatpush1.msra.mxu0 0.0
    %2357 = vmatprep.subr.mxu0 0.0
    %2358 = vmatpush1.msra.mxu0 0.0
    %2359 = vmatprep.subr.mxu0 0.0
    %2360 = vmatpush1.msra.mxu0 0.0
    %2361 = vmatprep.subr.mxu0 0.0
    %2362 = vmatpush1.msra.mxu0 0.0
    %2363 = vmatprep.subr.mxu0 0.0
    %2364 = vmatpush1.msra.mxu0 0.0
    %2365 = vmatprep.subr.mxu0 0.0
    %2366 = vmatpush1.msra.mxu0 0.0
    %2367 = vmatprep.subr.mxu0 0.0
    %2368 = vmatpush1.msra.mxu0 0.0
    %2369 = vmatprep.mubr.f32.mxu0 0.0
    %2370 = vmatmul.mubr.f32.gmra.mrb[0].mxu0 %v2303
    %v2371 = vpop.f32.mrb[0].mxu0
    %v2372 = vadd.f32 0.0, %v2371
    %v2373 = vpop.f32.mrb[0].mxu0
    %2374 = vdwg.mxu0
    %2375 = vrot.lane.b32.xlu0 %v504, 48
    %v2376 = vpop.permute.xlu0 %2375
    %v2379 = vsel %vm513, %v2221, 0
    %2381 = vmatprep.subr.mxu0 0.0
    %2382 = vmatpush1.msra.mxu0 %v2376
    %2383 = vmatprep.subr.mxu0 0.0
    %2384 = vmatpush1.msra.mxu0 0.0
    %2385 = vmatprep.subr.mxu0 0.0
    %2386 = vmatpush1.msra.mxu0 0.0
    %2387 = vmatprep.subr.mxu0 0.0
    %2388 = vmatpush1.msra.mxu0 0.0
    %2389 = vmatprep.subr.mxu0 0.0
    %2390 = vmatpush1.msra.mxu0 0.0
    %2391 = vmatprep.subr.mxu0 0.0
    %2392 = vmatpush1.msra.mxu0 0.0
    %2393 = vmatprep.subr.mxu0 0.0
    %2394 = vmatpush1.msra.mxu0 0.0
    %2395 = vmatprep.subr.mxu0 0.0
    %2396 = vmatpush1.msra.mxu0 0.0
    %2397 = vmatprep.subr.mxu0 0.0
    %2398 = vmatpush1.msra.mxu0 0.0
    %2399 = vmatprep.subr.mxu0 0.0
    %2400 = vmatpush1.msra.mxu0 0.0
    %2401 = vmatprep.subr.mxu0 0.0
    %2402 = vmatpush1.msra.mxu0 0.0
    %2403 = vmatprep.subr.mxu0 0.0
    %2404 = vmatpush1.msra.mxu0 0.0
    %2405 = vmatprep.subr.mxu0 0.0
    %2406 = vmatpush1.msra.mxu0 0.0
    %2407 = vmatprep.subr.mxu0 0.0
    %2408 = vmatpush1.msra.mxu0 0.0
    %2409 = vmatprep.subr.mxu0 0.0
    %2410 = vmatpush1.msra.mxu0 0.0
    %2411 = vmatprep.subr.mxu0 0.0
    %2412 = vmatpush1.msra.mxu0 0.0
    %2413 = vmatprep.subr.mxu0 0.0
    %2414 = vmatpush1.msra.mxu0 0.0
    %2415 = vmatprep.subr.mxu0 0.0
    %2416 = vmatpush1.msra.mxu0 0.0
    %2417 = vmatprep.subr.mxu0 0.0
    %2418 = vmatpush1.msra.mxu0 0.0
    %2419 = vmatprep.subr.mxu0 0.0
    %2420 = vmatpush1.msra.mxu0 0.0
    %2421 = vmatprep.subr.mxu0 0.0
    %2422 = vmatpush1.msra.mxu0 0.0
    %2423 = vmatprep.subr.mxu0 0.0
    %2424 = vmatpush1.msra.mxu0 0.0
    %2425 = vmatprep.subr.mxu0 0.0
    %2426 = vmatpush1.msra.mxu0 0.0
    %2427 = vmatprep.subr.mxu0 0.0
    %2428 = vmatpush1.msra.mxu0 0.0
    %2429 = vmatprep.subr.mxu0 0.0
    %2430 = vmatpush1.msra.mxu0 0.0
    %2431 = vmatprep.subr.mxu0 0.0
    %2432 = vmatpush1.msra.mxu0 0.0
    %2433 = vmatprep.subr.mxu0 0.0
    %2434 = vmatpush1.msra.mxu0 0.0
    %2435 = vmatprep.subr.mxu0 0.0
    %2436 = vmatpush1.msra.mxu0 0.0
    %2437 = vmatprep.subr.mxu0 0.0
    %2438 = vmatpush1.msra.mxu0 0.0
    %2439 = vmatprep.subr.mxu0 0.0
    %2440 = vmatpush1.msra.mxu0 0.0
    %2441 = vmatprep.subr.mxu0 0.0
    %2442 = vmatpush1.msra.mxu0 0.0
    %2443 = vmatprep.subr.mxu0 0.0
    %2444 = vmatpush1.msra.mxu0 0.0
    %2445 = vmatprep.mubr.f32.mxu0 0.0
    %2446 = vmatmul.mubr.f32.gmra.mrb[0].mxu0 %v2379
    %v2447 = vpop.f32.mrb[0].mxu0
    %v2448 = vadd.f32 0.0, %v2447
    %v2449 = vpop.f32.mrb[0].mxu0
    %2450 = vdwg.mxu0
    %2451 = vrot.lane.b32.xlu0 %v505, 48
    %v2452 = vpop.permute.xlu0 %2451
    %v2455 = vsel %vm513, %v2222, 0
    %2457 = vmatprep.subr.mxu0 0.0
    %2458 = vmatpush1.msra.mxu0 %v2452
    %2459 = vmatprep.subr.mxu0 0.0
    %2460 = vmatpush1.msra.mxu0 0.0
    %2461 = vmatprep.subr.mxu0 0.0
    %2462 = vmatpush1.msra.mxu0 0.0
    %2463 = vmatprep.subr.mxu0 0.0
    %2464 = vmatpush1.msra.mxu0 0.0
    %2465 = vmatprep.subr.mxu0 0.0
    %2466 = vmatpush1.msra.mxu0 0.0
    %2467 = vmatprep.subr.mxu0 0.0
    %2468 = vmatpush1.msra.mxu0 0.0
    %2469 = vmatprep.subr.mxu0 0.0
    %2470 = vmatpush1.msra.mxu0 0.0
    %2471 = vmatprep.subr.mxu0 0.0
    %2472 = vmatpush1.msra.mxu0 0.0
    %2473 = vmatprep.subr.mxu0 0.0
    %2474 = vmatpush1.msra.mxu0 0.0
    %2475 = vmatprep.subr.mxu0 0.0
    %2476 = vmatpush1.msra.mxu0 0.0
    %2477 = vmatprep.subr.mxu0 0.0
    %2478 = vmatpush1.msra.mxu0 0.0
    %2479 = vmatprep.subr.mxu0 0.0
    %2480 = vmatpush1.msra.mxu0 0.0
    %2481 = vmatprep.subr.mxu0 0.0
    %2482 = vmatpush1.msra.mxu0 0.0
    %2483 = vmatprep.subr.mxu0 0.0
    %2484 = vmatpush1.msra.mxu0 0.0
    %2485 = vmatprep.subr.mxu0 0.0
    %2486 = vmatpush1.msra.mxu0 0.0
    %2487 = vmatprep.subr.mxu0 0.0
    %2488 = vmatpush1.msra.mxu0 0.0
    %2489 = vmatprep.subr.mxu0 0.0
    %2490 = vmatpush1.msra.mxu0 0.0
    %2491 = vmatprep.subr.mxu0 0.0
    %2492 = vmatpush1.msra.mxu0 0.0
    %2493 = vmatprep.subr.mxu0 0.0
    %2494 = vmatpush1.msra.mxu0 0.0
    %2495 = vmatprep.subr.mxu0 0.0
    %2496 = vmatpush1.msra.mxu0 0.0
    %2497 = vmatprep.subr.mxu0 0.0
    %2498 = vmatpush1.msra.mxu0 0.0
    %2499 = vmatprep.subr.mxu0 0.0
    %2500 = vmatpush1.msra.mxu0 0.0
    %2501 = vmatprep.subr.mxu0 0.0
    %2502 = vmatpush1.msra.mxu0 0.0
    %2503 = vmatprep.subr.mxu0 0.0
    %2504 = vmatpush1.msra.mxu0 0.0
    %2505 = vmatprep.subr.mxu0 0.0
    %2506 = vmatpush1.msra.mxu0 0.0
    %2507 = vmatprep.subr.mxu0 0.0
    %2508 = vmatpush1.msra.mxu0 0.0
    %2509 = vmatprep.subr.mxu0 0.0
    %2510 = vmatpush1.msra.mxu0 0.0
    %2511 = vmatprep.subr.mxu0 0.0
    %2512 = vmatpush1.msra.mxu0 0.0
    %2513 = vmatprep.subr.mxu0 0.0
    %2514 = vmatpush1.msra.mxu0 0.0
    %2515 = vmatprep.subr.mxu0 0.0
    %2516 = vmatpush1.msra.mxu0 0.0
    %2517 = vmatprep.subr.mxu0 0.0
    %2518 = vmatpush1.msra.mxu0 0.0
    %2519 = vmatprep.subr.mxu0 0.0
    %2520 = vmatpush1.msra.mxu0 0.0
    %2521 = vmatprep.mubr.f32.mxu0 0.0
    %2522 = vmatmul.mubr.f32.gmra.mrb[0].mxu0 %v2455
    %v2523 = vpop.f32.mrb[0].mxu0
    %v2524 = vadd.f32 0.0, %v2523
    %v2525 = vpop.f32.mrb[0].mxu0
    %2526 = vdwg.mxu0
    %2527 = vrot.lane.b32.xlu0 %v506, 104
    %v2528 = vpop.permute.xlu0 %2527
    %2529 = vrot.lane.b32.xlu0 %v502, 72
    %v2530 = vpop.permute.xlu0 %2529
    %v2531 = vsel %vm513, %v2528, 0
    %v2533 = vsel %vm513, %v2530, 0
    %2535 = vmatprep.subr.mxu0 0.0
    %2536 = vmatpush1.xpose.msra.mxu0 %v2533
    %2537 = vmatprep.subr.mxu0 0.0
    %2538 = vmatpush1.xpose.msra.mxu0 0.0
    %2539 = vmatprep.subr.mxu0 0.0
    %2540 = vmatpush1.xpose.msra.mxu0 0.0
    %2541 = vmatprep.subr.mxu0 0.0
    %2542 = vmatpush1.xpose.msra.mxu0 0.0
    %2543 = vmatprep.subr.mxu0 0.0
    %2544 = vmatpush1.xpose.msra.mxu0 0.0
    %2545 = vmatprep.subr.mxu0 0.0
    %2546 = vmatpush1.xpose.msra.mxu0 0.0
    %2547 = vmatprep.subr.mxu0 0.0
    %2548 = vmatpush1.xpose.msra.mxu0 0.0
    %2549 = vmatprep.subr.mxu0 0.0
    %2550 = vmatpush1.xpose.msra.mxu0 0.0
    %2551 = vmatprep.subr.mxu0 0.0
    %2552 = vmatpush1.xpose.msra.mxu0 0.0
    %2553 = vmatprep.subr.mxu0 0.0
    %2554 = vmatpush1.xpose.msra.mxu0 0.0
    %2555 = vmatprep.subr.mxu0 0.0
    %2556 = vmatpush1.xpose.msra.mxu0 0.0
    %2557 = vmatprep.subr.mxu0 0.0
    %2558 = vmatpush1.xpose.msra.mxu0 0.0
    %2559 = vmatprep.subr.mxu0 0.0
    %2560 = vmatpush1.xpose.msra.mxu0 0.0
    %2561 = vmatprep.subr.mxu0 0.0
    %2562 = vmatpush1.xpose.msra.mxu0 0.0
    %2563 = vmatprep.subr.mxu0 0.0
    %2564 = vmatpush1.xpose.msra.mxu0 0.0
    %2565 = vmatprep.subr.mxu0 0.0
    %2566 = vmatpush1.xpose.msra.mxu0 0.0
    %2567 = vmatprep.subr.mxu0 0.0
    %2568 = vmatpush1.xpose.msra.mxu0 0.0
    %2569 = vmatprep.subr.mxu0 0.0
    %2570 = vmatpush1.xpose.msra.mxu0 0.0
    %2571 = vmatprep.subr.mxu0 0.0
    %2572 = vmatpush1.xpose.msra.mxu0 0.0
    %2573 = vmatprep.subr.mxu0 0.0
    %2574 = vmatpush1.xpose.msra.mxu0 0.0
    %2575 = vmatprep.subr.mxu0 0.0
    %2576 = vmatpush1.xpose.msra.mxu0 0.0
    %2577 = vmatprep.subr.mxu0 0.0
    %2578 = vmatpush1.xpose.msra.mxu0 0.0
    %2579 = vmatprep.subr.mxu0 0.0
    %2580 = vmatpush1.xpose.msra.mxu0 0.0
    %2581 = vmatprep.subr.mxu0 0.0
    %2582 = vmatpush1.xpose.msra.mxu0 0.0
    %2583 = vmatprep.subr.mxu0 0.0
    %2584 = vmatpush1.xpose.msra.mxu0 0.0
    %2585 = vmatprep.subr.mxu0 0.0
    %2586 = vmatpush1.xpose.msra.mxu0 0.0
    %2587 = vmatprep.subr.mxu0 0.0
    %2588 = vmatpush1.xpose.msra.mxu0 0.0
    %2589 = vmatprep.subr.mxu0 0.0
    %2590 = vmatpush1.xpose.msra.mxu0 0.0
    %2591 = vmatprep.subr.mxu0 0.0
    %2592 = vmatpush1.xpose.msra.mxu0 0.0
    %2593 = vmatprep.subr.mxu0 0.0
    %2594 = vmatpush1.xpose.msra.mxu0 0.0
    %2595 = vmatprep.subr.mxu0 0.0
    %2596 = vmatpush1.xpose.msra.mxu0 0.0
    %2597 = vmatprep.subr.mxu0 0.0
    %2598 = vmatpush1.xpose.msra.mxu0 0.0
    %2599 = vmatprep.mubr.f32.mxu0 0.0
    %2600 = vmatmul.mubr.f32.gmra.mrb[0].mxu0 %v2531
    %v2601 = vpop.f32.mrb[0].mxu0
    %v2602 = vadd.f32 0.0, %v2601
    %v2603 = vpop.f32.mrb[0].mxu0
    %2604 = vdwg.mxu0
    %2605 = vrot.lane.b32.xlu0 %v507, 104
    %v2606 = vpop.permute.xlu0 %2605
    %2607 = vrot.lane.b32.xlu0 %v503, 72
    %v2608 = vpop.permute.xlu0 %2607
    %v2609 = vsel %vm513, %v2606, 0
    %v2611 = vsel %vm513, %v2608, 0
    %2613 = vmatprep.subr.mxu0 0.0
    %2614 = vmatpush1.xpose.msra.mxu0 %v2611
    %2615 = vmatprep.subr.mxu0 0.0
    %2616 = vmatpush1.xpose.msra.mxu0 0.0
    %2617 = vmatprep.subr.mxu0 0.0
    %2618 = vmatpush1.xpose.msra.mxu0 0.0
    %2619 = vmatprep.subr.mxu0 0.0
    %2620 = vmatpush1.xpose.msra.mxu0 0.0
    %2621 = vmatprep.subr.mxu0 0.0
    %2622 = vmatpush1.xpose.msra.mxu0 0.0
    %2623 = vmatprep.subr.mxu0 0.0
    %2624 = vmatpush1.xpose.msra.mxu0 0.0
    %2625 = vmatprep.subr.mxu0 0.0
    %2626 = vmatpush1.xpose.msra.mxu0 0.0
    %2627 = vmatprep.subr.mxu0 0.0
    %2628 = vmatpush1.xpose.msra.mxu0 0.0
    %2629 = vmatprep.subr.mxu0 0.0
    %2630 = vmatpush1.xpose.msra.mxu0 0.0
    %2631 = vmatprep.subr.mxu0 0.0
    %2632 = vmatpush1.xpose.msra.mxu0 0.0
    %2633 = vmatprep.subr.mxu0 0.0
    %2634 = vmatpush1.xpose.msra.mxu0 0.0
    %2635 = vmatprep.subr.mxu0 0.0
    %2636 = vmatpush1.xpose.msra.mxu0 0.0
    %2637 = vmatprep.subr.mxu0 0.0
    %2638 = vmatpush1.xpose.msra.mxu0 0.0
    %2639 = vmatprep.subr.mxu0 0.0
    %2640 = vmatpush1.xpose.msra.mxu0 0.0
    %2641 = vmatprep.subr.mxu0 0.0
    %2642 = vmatpush1.xpose.msra.mxu0 0.0
    %2643 = vmatprep.subr.mxu0 0.0
    %2644 = vmatpush1.xpose.msra.mxu0 0.0
    %2645 = vmatprep.subr.mxu0 0.0
    %2646 = vmatpush1.xpose.msra.mxu0 0.0
    %2647 = vmatprep.subr.mxu0 0.0
    %2648 = vmatpush1.xpose.msra.mxu0 0.0
    %2649 = vmatprep.subr.mxu0 0.0
    %2650 = vmatpush1.xpose.msra.mxu0 0.0
    %2651 = vmatprep.subr.mxu0 0.0
    %2652 = vmatpush1.xpose.msra.mxu0 0.0
    %2653 = vmatprep.subr.mxu0 0.0
    %2654 = vmatpush1.xpose.msra.mxu0 0.0
    %2655 = vmatprep.subr.mxu0 0.0
    %2656 = vmatpush1.xpose.msra.mxu0 0.0
    %2657 = vmatprep.subr.mxu0 0.0
    %2658 = vmatpush1.xpose.msra.mxu0 0.0
    %2659 = vmatprep.subr.mxu0 0.0
    %2660 = vmatpush1.xpose.msra.mxu0 0.0
    %2661 = vmatprep.subr.mxu0 0.0
    %2662 = vmatpush1.xpose.msra.mxu0 0.0
    %2663 = vmatprep.subr.mxu0 0.0
    %2664 = vmatpush1.xpose.msra.mxu0 0.0
    %2665 = vmatprep.subr.mxu0 0.0
    %2666 = vmatpush1.xpose.msra.mxu0 0.0
    %2667 = vmatprep.subr.mxu0 0.0
    %2668 = vmatpush1.xpose.msra.mxu0 0.0
    %2669 = vmatprep.subr.mxu0 0.0
    %2670 = vmatpush1.xpose.msra.mxu0 0.0
    %2671 = vmatprep.subr.mxu0 0.0
    %2672 = vmatpush1.xpose.msra.mxu0 0.0
    %2673 = vmatprep.subr.mxu0 0.0
    %2674 = vmatpush1.xpose.msra.mxu0 0.0
    %2675 = vmatprep.subr.mxu0 0.0
    %2676 = vmatpush1.xpose.msra.mxu0 0.0
    %2677 = vmatprep.mubr.f32.mxu0 0.0
    %2678 = vmatmul.mubr.f32.gmra.mrb[0].mxu0 %v2609
    %v2679 = vpop.f32.mrb[0].mxu0
    %v2680 = vadd.f32 0.0, %v2679
    %v2681 = vpop.f32.mrb[0].mxu0
    %2682 = vdwg.mxu0
    %2683 = vrot.lane.b32.xlu0 %v508, 104
    %v2684 = vpop.permute.xlu0 %2683
    %2685 = vrot.lane.b32.xlu0 %v504, 72
    %v2686 = vpop.permute.xlu0 %2685
    %v2687 = vsel %vm513, %v2684, 0
    %v2689 = vsel %vm513, %v2686, 0
    %2691 = vmatprep.subr.mxu0 0.0
    %2692 = vmatpush1.xpose.msra.mxu0 %v2689
    %2693 = vmatprep.subr.mxu0 0.0
    %2694 = vmatpush1.xpose.msra.mxu0 0.0
    %2695 = vmatprep.subr.mxu0 0.0
    %2696 = vmatpush1.xpose.msra.mxu0 0.0
    %2697 = vmatprep.subr.mxu0 0.0
    %2698 = vmatpush1.xpose.msra.mxu0 0.0
    %2699 = vmatprep.subr.mxu0 0.0
    %2700 = vmatpush1.xpose.msra.mxu0 0.0
    %2701 = vmatprep.subr.mxu0 0.0
    %2702 = vmatpush1.xpose.msra.mxu0 0.0
    %2703 = vmatprep.subr.mxu0 0.0
    %2704 = vmatpush1.xpose.msra.mxu0 0.0
    %2705 = vmatprep.subr.mxu0 0.0
    %2706 = vmatpush1.xpose.msra.mxu0 0.0
    %2707 = vmatprep.subr.mxu0 0.0
    %2708 = vmatpush1.xpose.msra.mxu0 0.0
    %2709 = vmatprep.subr.mxu0 0.0
    %2710 = vmatpush1.xpose.msra.mxu0 0.0
    %2711 = vmatprep.subr.mxu0 0.0
    %2712 = vmatpush1.xpose.msra.mxu0 0.0
    %2713 = vmatprep.subr.mxu0 0.0
    %2714 = vmatpush1.xpose.msra.mxu0 0.0
    %2715 = vmatprep.subr.mxu0 0.0
    %2716 = vmatpush1.xpose.msra.mxu0 0.0
    %2717 = vmatprep.subr.mxu0 0.0
    %2718 = vmatpush1.xpose.msra.mxu0 0.0
    %2719 = vmatprep.subr.mxu0 0.0
    %2720 = vmatpush1.xpose.msra.mxu0 0.0
    %2721 = vmatprep.subr.mxu0 0.0
    %2722 = vmatpush1.xpose.msra.mxu0 0.0
    %2723 = vmatprep.subr.mxu0 0.0
    %2724 = vmatpush1.xpose.msra.mxu0 0.0
    %2725 = vmatprep.subr.mxu0 0.0
    %2726 = vmatpush1.xpose.msra.mxu0 0.0
    %2727 = vmatprep.subr.mxu0 0.0
    %2728 = vmatpush1.xpose.msra.mxu0 0.0
    %2729 = vmatprep.subr.mxu0 0.0
    %2730 = vmatpush1.xpose.msra.mxu0 0.0
    %2731 = vmatprep.subr.mxu0 0.0
    %2732 = vmatpush1.xpose.msra.mxu0 0.0
    %2733 = vmatprep.subr.mxu0 0.0
    %2734 = vmatpush1.xpose.msra.mxu0 0.0
    %2735 = vmatprep.subr.mxu0 0.0
    %2736 = vmatpush1.xpose.msra.mxu0 0.0
    %2737 = vmatprep.subr.mxu0 0.0
    %2738 = vmatpush1.xpose.msra.mxu0 0.0
    %2739 = vmatprep.subr.mxu0 0.0
    %2740 = vmatpush1.xpose.msra.mxu0 0.0
    %2741 = vmatprep.subr.mxu0 0.0
    %2742 = vmatpush1.xpose.msra.mxu0 0.0
    %2743 = vmatprep.subr.mxu0 0.0
    %2744 = vmatpush1.xpose.msra.mxu0 0.0
    %2745 = vmatprep.subr.mxu0 0.0
    %2746 = vmatpush1.xpose.msra.mxu0 0.0
    %2747 = vmatprep.subr.mxu0 0.0
    %2748 = vmatpush1.xpose.msra.mxu0 0.0
    %2749 = vmatprep.subr.mxu0 0.0
    %2750 = vmatpush1.xpose.msra.mxu0 0.0
    %2751 = vmatprep.subr.mxu0 0.0
    %2752 = vmatpush1.xpose.msra.mxu0 0.0
    %2753 = vmatprep.subr.mxu0 0.0
    %2754 = vmatpush1.xpose.msra.mxu0 0.0
    %2755 = vmatprep.mubr.f32.mxu0 0.0
    %2756 = vmatmul.mubr.f32.gmra.mrb[0].mxu0 %v2687
    %v2757 = vpop.f32.mrb[0].mxu0
    %v2758 = vadd.f32 0.0, %v2757
    %v2759 = vpop.f32.mrb[0].mxu0
    %2760 = vdwg.mxu0
    %2761 = vrot.lane.b32.xlu0 %v509, 104
    %v2762 = vpop.permute.xlu0 %2761
    %2763 = vrot.lane.b32.xlu0 %v505, 72
    %v2764 = vpop.permute.xlu0 %2763
    %v2765 = vsel %vm513, %v2762, 0
    %v2767 = vsel %vm513, %v2764, 0
    %2769 = vmatprep.subr.mxu0 0.0
    %2770 = vmatpush1.xpose.msra.mxu0 %v2767
    %2771 = vmatprep.subr.mxu0 0.0
    %2772 = vmatpush1.xpose.msra.mxu0 0.0
    %2773 = vmatprep.subr.mxu0 0.0
    %2774 = vmatpush1.xpose.msra.mxu0 0.0
    %2775 = vmatprep.subr.mxu0 0.0
    %2776 = vmatpush1.xpose.msra.mxu0 0.0
    %2777 = vmatprep.subr.mxu0 0.0
    %2778 = vmatpush1.xpose.msra.mxu0 0.0
    %2779 = vmatprep.subr.mxu0 0.0
    %2780 = vmatpush1.xpose.msra.mxu0 0.0
    %2781 = vmatprep.subr.mxu0 0.0
    %2782 = vmatpush1.xpose.msra.mxu0 0.0
    %2783 = vmatprep.subr.mxu0 0.0
    %2784 = vmatpush1.xpose.msra.mxu0 0.0
    %2785 = vmatprep.subr.mxu0 0.0
    %2786 = vmatpush1.xpose.msra.mxu0 0.0
    %2787 = vmatprep.subr.mxu0 0.0
    %2788 = vmatpush1.xpose.msra.mxu0 0.0
    %2789 = vmatprep.subr.mxu0 0.0
    %2790 = vmatpush1.xpose.msra.mxu0 0.0
    %2791 = vmatprep.subr.mxu0 0.0
    %2792 = vmatpush1.xpose.msra.mxu0 0.0
    %2793 = vmatprep.subr.mxu0 0.0
    %2794 = vmatpush1.xpose.msra.mxu0 0.0
    %2795 = vmatprep.subr.mxu0 0.0
    %2796 = vmatpush1.xpose.msra.mxu0 0.0
    %2797 = vmatprep.subr.mxu0 0.0
    %2798 = vmatpush1.xpose.msra.mxu0 0.0
    %2799 = vmatprep.subr.mxu0 0.0
    %2800 = vmatpush1.xpose.msra.mxu0 0.0
    %2801 = vmatprep.subr.mxu0 0.0
    %2802 = vmatpush1.xpose.msra.mxu0 0.0
    %2803 = vmatprep.subr.mxu0 0.0
    %2804 = vmatpush1.xpose.msra.mxu0 0.0
    %2805 = vmatprep.subr.mxu0 0.0
    %2806 = vmatpush1.xpose.msra.mxu0 0.0
    %2807 = vmatprep.subr.mxu0 0.0
    %2808 = vmatpush1.xpose.msra.mxu0 0.0
    %2809 = vmatprep.subr.mxu0 0.0
    %2810 = vmatpush1.xpose.msra.mxu0 0.0
    %2811 = vmatprep.subr.mxu0 0.0
    %2812 = vmatpush1.xpose.msra.mxu0 0.0
    %2813 = vmatprep.subr.mxu0 0.0
    %2814 = vmatpush1.xpose.msra.mxu0 0.0
    %2815 = vmatprep.subr.mxu0 0.0
    %2816 = vmatpush1.xpose.msra.mxu0 0.0
    %2817 = vmatprep.subr.mxu0 0.0
    %2818 = vmatpush1.xpose.msra.mxu0 0.0
    %2819 = vmatprep.subr.mxu0 0.0
    %2820 = vmatpush1.xpose.msra.mxu0 0.0
    %2821 = vmatprep.subr.mxu0 0.0
    %2822 = vmatpush1.xpose.msra.mxu0 0.0
    %2823 = vmatprep.subr.mxu0 0.0
    %2824 = vmatpush1.xpose.msra.mxu0 0.0
    %2825 = vmatprep.subr.mxu0 0.0
    %2826 = vmatpush1.xpose.msra.mxu0 0.0
    %2827 = vmatprep.subr.mxu0 0.0
    %2828 = vmatpush1.xpose.msra.mxu0 0.0
    %2829 = vmatprep.subr.mxu0 0.0
    %2830 = vmatpush1.xpose.msra.mxu0 0.0
    %2831 = vmatprep.subr.mxu0 0.0
    %2832 = vmatpush1.xpose.msra.mxu0 0.0
    %2833 = vmatprep.mubr.f32.mxu0 0.0
    %2834 = vmatmul.mubr.f32.gmra.mrb[0].mxu0 %v2765
    %v2835 = vpop.f32.mrb[0].mxu0
    %v2836 = vadd.f32 0.0, %v2835
    %v2837 = vpop.f32.mrb[0].mxu0
    %2838 = vdwg.mxu0
    %v2839 = vsel %vm513, %v2602, -inf
    %2840 = vmax.xlane.f32.xlu0 %v2839
    %v2841 = vpop.xlane.xlu0 %2840
    %v2842 = vsel %vm513, %v2680, -inf
    %2843 = vmax.xlane.f32.xlu0 %v2842
    %v2844 = vpop.xlane.xlu0 %2843
    %v2845 = vsel %vm513, %v2758, -inf
    %2846 = vmax.xlane.f32.xlu0 %v2845
    %v2847 = vpop.xlane.xlu0 %2846
    %v2848 = vsel %vm513, %v2836, -inf
    %2849 = vmax.xlane.f32.xlu0 %v2848
    %v2850 = vpop.xlane.xlu0 %2849
    %v2851 = vsub.f32 %v2602, %v2841
    %v2852 = vsub.f32 %v2680, %v2844
    %v2853 = vsub.f32 %v2758, %v2847
    %v2854 = vsub.f32 %v2836, %v2850
    %v2855 = vmul.f32 %v2851, 1.442695
    %v2856 = vpow.pop %v2855
    %v2857 = vmul.f32 %v2852, 1.442695
    %v2858 = vpow.pop %v2857
    %v2859 = vmul.f32 %v2853, 1.442695
    %v2860 = vpow.pop %v2859
    %v2861 = vmul.f32 %v2854, 1.442695
    %v2862 = vpow.pop %v2861
    %v2863 = vsel %vm513, %v2856, 0.0
    %2864 = vadd.xlane.f32.xlu0 %v2863
    %v2865 = vpop.xlane.xlu0 %2864
    %v2866 = vsel %vm513, %v2858, 0.0
    %2867 = vadd.xlane.f32.xlu0 %v2866
    %v2868 = vpop.xlane.xlu0 %2867
    %v2869 = vsel %vm513, %v2860, 0.0
    %2870 = vadd.xlane.f32.xlu0 %v2869
    %v2871 = vpop.xlane.xlu0 %2870
    %v2872 = vsel %vm513, %v2862, 0.0
    %2873 = vadd.xlane.f32.xlu0 %v2872
    %v2874 = vpop.xlane.xlu0 %2873
    %v2875 = vrcp.pop %v2865
    %v2876 = vrcp.pop %v2868
    %v2877 = vrcp.pop %v2871
    %v2878 = vrcp.pop %v2874
    %v2879 = vmul.f32 %v2865, %v2875
    %v2880 = vmul.f32 %v2868, %v2876
    %v2881 = vmul.f32 %v2871, %v2877
    %v2882 = vmul.f32 %v2874, %v2878
    %v2883 = vsub.f32 2.0, %v2879
    %v2884 = vsub.f32 2.0, %v2880
    %v2885 = vsub.f32 2.0, %v2881
    %v2886 = vsub.f32 2.0, %v2882
    %v2887 = vmul.f32 %v2875, %v2883
    %v2888 = vmul.f32 %v2876, %v2884
    %v2889 = vmul.f32 %v2877, %v2885
    %v2890 = vmul.f32 %v2878, %v2886
    %v2891 = vmul.f32 %v2856, %v2887
    %v2892 = vmul.f32 %v2858, %v2888
    %v2893 = vmul.f32 %v2860, %v2889
    %v2894 = vmul.f32 %v2862, %v2890
    %2895 = vrot.lane.b32.xlu0 %v502, 40
    %v2896 = vpop.permute.xlu0 %2895
    %v2899 = vsel %vm513, %v2891, 0
    %2901 = vmatprep.subr.mxu0 0.0
    %2902 = vmatpush1.msra.mxu0 %v2896
    %2903 = vmatprep.subr.mxu0 0.0
    %2904 = vmatpush1.msra.mxu0 0.0
    %2905 = vmatprep.subr.mxu0 0.0
    %2906 = vmatpush1.msra.mxu0 0.0
    %2907 = vmatprep.subr.mxu0 0.0
    %2908 = vmatpush1.msra.mxu0 0.0
    %2909 = vmatprep.subr.mxu0 0.0
    %2910 = vmatpush1.msra.mxu0 0.0
    %2911 = vmatprep.subr.mxu0 0.0
    %2912 = vmatpush1.msra.mxu0 0.0
    %2913 = vmatprep.subr.mxu0 0.0
    %2914 = vmatpush1.msra.mxu0 0.0
    %2915 = vmatprep.subr.mxu0 0.0
    %2916 = vmatpush1.msra.mxu0 0.0
    %2917 = vmatprep.subr.mxu0 0.0
    %2918 = vmatpush1.msra.mxu0 0.0
    %2919 = vmatprep.subr.mxu0 0.0
    %2920 = vmatpush1.msra.mxu0 0.0
    %2921 = vmatprep.subr.mxu0 0.0
    %2922 = vmatpush1.msra.mxu0 0.0
    %2923 = vmatprep.subr.mxu0 0.0
    %2924 = vmatpush1.msra.mxu0 0.0
    %2925 = vmatprep.subr.mxu0 0.0
    %2926 = vmatpush1.msra.mxu0 0.0
    %2927 = vmatprep.subr.mxu0 0.0
    %2928 = vmatpush1.msra.mxu0 0.0
    %2929 = vmatprep.subr.mxu0 0.0
    %2930 = vmatpush1.msra.mxu0 0.0
    %2931 = vmatprep.subr.mxu0 0.0
    %2932 = vmatpush1.msra.mxu0 0.0
    %2933 = vmatprep.subr.mxu0 0.0
    %2934 = vmatpush1.msra.mxu0 0.0
    %2935 = vmatprep.subr.mxu0 0.0
    %2936 = vmatpush1.msra.mxu0 0.0
    %2937 = vmatprep.subr.mxu0 0.0
    %2938 = vmatpush1.msra.mxu0 0.0
    %2939 = vmatprep.subr.mxu0 0.0
    %2940 = vmatpush1.msra.mxu0 0.0
    %2941 = vmatprep.subr.mxu0 0.0
    %2942 = vmatpush1.msra.mxu0 0.0
    %2943 = vmatprep.subr.mxu0 0.0
    %2944 = vmatpush1.msra.mxu0 0.0
    %2945 = vmatprep.subr.mxu0 0.0
    %2946 = vmatpush1.msra.mxu0 0.0
    %2947 = vmatprep.subr.mxu0 0.0
    %2948 = vmatpush1.msra.mxu0 0.0
    %2949 = vmatprep.subr.mxu0 0.0
    %2950 = vmatpush1.msra.mxu0 0.0
    %2951 = vmatprep.subr.mxu0 0.0
    %2952 = vmatpush1.msra.mxu0 0.0
    %2953 = vmatprep.subr.mxu0 0.0
    %2954 = vmatpush1.msra.mxu0 0.0
    %2955 = vmatprep.subr.mxu0 0.0
    %2956 = vmatpush1.msra.mxu0 0.0
    %2957 = vmatprep.subr.mxu0 0.0
    %2958 = vmatpush1.msra.mxu0 0.0
    %2959 = vmatprep.subr.mxu0 0.0
    %2960 = vmatpush1.msra.mxu0 0.0
    %2961 = vmatprep.subr.mxu0 0.0
    %2962 = vmatpush1.msra.mxu0 0.0
    %2963 = vmatprep.subr.mxu0 0.0
    %2964 = vmatpush1.msra.mxu0 0.0
    %2965 = vmatprep.mubr.f32.mxu0 0.0
    %2966 = vmatmul.mubr.f32.gmra.mrb[0].mxu0 %v2899
    %v2967 = vpop.f32.mrb[0].mxu0
    %v2968 = vadd.f32 0.0, %v2967
    %v2969 = vpop.f32.mrb[0].mxu0
    %2970 = vdwg.mxu0
    %2971 = vrot.lane.b32.xlu0 %v503, 40
    %v2972 = vpop.permute.xlu0 %2971
    %v2975 = vsel %vm513, %v2892, 0
    %2977 = vmatprep.subr.mxu0 0.0
    %2978 = vmatpush1.msra.mxu0 %v2972
    %2979 = vmatprep.subr.mxu0 0.0
    %2980 = vmatpush1.msra.mxu0 0.0
    %2981 = vmatprep.subr.mxu0 0.0
    %2982 = vmatpush1.msra.mxu0 0.0
    %2983 = vmatprep.subr.mxu0 0.0
    %2984 = vmatpush1.msra.mxu0 0.0
    %2985 = vmatprep.subr.mxu0 0.0
    %2986 = vmatpush1.msra.mxu0 0.0
    %2987 = vmatprep.subr.mxu0 0.0
    %2988 = vmatpush1.msra.mxu0 0.0
    %2989 = vmatprep.subr.mxu0 0.0
    %2990 = vmatpush1.msra.mxu0 0.0
    %2991 = vmatprep.subr.mxu0 0.0
    %2992 = vmatpush1.msra.mxu0 0.0
    %2993 = vmatprep.subr.mxu0 0.0
    %2994 = vmatpush1.msra.mxu0 0.0
    %2995 = vmatprep.subr.mxu0 0.0
    %2996 = vmatpush1.msra.mxu0 0.0
    %2997 = vmatprep.subr.mxu0 0.0
    %2998 = vmatpush1.msra.mxu0 0.0
    %2999 = vmatprep.subr.mxu0 0.0
    %3000 = vmatpush1.msra.mxu0 0.0
    %3001 = vmatprep.subr.mxu0 0.0
    %3002 = vmatpush1.msra.mxu0 0.0
    %3003 = vmatprep.subr.mxu0 0.0
    %3004 = vmatpush1.msra.mxu0 0.0
    %3005 = vmatprep.subr.mxu0 0.0
    %3006 = vmatpush1.msra.mxu0 0.0
    %3007 = vmatprep.subr.mxu0 0.0
    %3008 = vmatpush1.msra.mxu0 0.0
    %3009 = vmatprep.subr.mxu0 0.0
    %3010 = vmatpush1.msra.mxu0 0.0
    %3011 = vmatprep.subr.mxu0 0.0
    %3012 = vmatpush1.msra.mxu0 0.0
    %3013 = vmatprep.subr.mxu0 0.0
    %3014 = vmatpush1.msra.mxu0 0.0
    %3015 = vmatprep.subr.mxu0 0.0
    %3016 = vmatpush1.msra.mxu0 0.0
    %3017 = vmatprep.subr.mxu0 0.0
    %3018 = vmatpush1.msra.mxu0 0.0
    %3019 = vmatprep.subr.mxu0 0.0
    %3020 = vmatpush1.msra.mxu0 0.0
    %3021 = vmatprep.subr.mxu0 0.0
    %3022 = vmatpush1.msra.mxu0 0.0
    %3023 = vmatprep.subr.mxu0 0.0
    %3024 = vmatpush1.msra.mxu0 0.0
    %3025 = vmatprep.subr.mxu0 0.0
    %3026 = vmatpush1.msra.mxu0 0.0
    %3027 = vmatprep.subr.mxu0 0.0
    %3028 = vmatpush1.msra.mxu0 0.0
    %3029 = vmatprep.subr.mxu0 0.0
    %3030 = vmatpush1.msra.mxu0 0.0
    %3031 = vmatprep.subr.mxu0 0.0
    %3032 = vmatpush1.msra.mxu0 0.0
    %3033 = vmatprep.subr.mxu0 0.0
    %3034 = vmatpush1.msra.mxu0 0.0
    %3035 = vmatprep.subr.mxu0 0.0
    %3036 = vmatpush1.msra.mxu0 0.0
    %3037 = vmatprep.subr.mxu0 0.0
    %3038 = vmatpush1.msra.mxu0 0.0
    %3039 = vmatprep.subr.mxu0 0.0
    %3040 = vmatpush1.msra.mxu0 0.0
    %3041 = vmatprep.mubr.f32.mxu0 0.0
    %3042 = vmatmul.mubr.f32.gmra.mrb[0].mxu0 %v2975
    %v3043 = vpop.f32.mrb[0].mxu0
    %v3044 = vadd.f32 0.0, %v3043
    %v3045 = vpop.f32.mrb[0].mxu0
    %3046 = vdwg.mxu0
    %3047 = vrot.lane.b32.xlu0 %v504, 40
    %v3048 = vpop.permute.xlu0 %3047
    %v3051 = vsel %vm513, %v2893, 0
    %3053 = vmatprep.subr.mxu0 0.0
    %3054 = vmatpush1.msra.mxu0 %v3048
    %3055 = vmatprep.subr.mxu0 0.0
    %3056 = vmatpush1.msra.mxu0 0.0
    %3057 = vmatprep.subr.mxu0 0.0
    %3058 = vmatpush1.msra.mxu0 0.0
    %3059 = vmatprep.subr.mxu0 0.0
    %3060 = vmatpush1.msra.mxu0 0.0
    %3061 = vmatprep.subr.mxu0 0.0
    %3062 = vmatpush1.msra.mxu0 0.0
    %3063 = vmatprep.subr.mxu0 0.0
    %3064 = vmatpush1.msra.mxu0 0.0
    %3065 = vmatprep.subr.mxu0 0.0
    %3066 = vmatpush1.msra.mxu0 0.0
    %3067 = vmatprep.subr.mxu0 0.0
    %3068 = vmatpush1.msra.mxu0 0.0
    %3069 = vmatprep.subr.mxu0 0.0
    %3070 = vmatpush1.msra.mxu0 0.0
    %3071 = vmatprep.subr.mxu0 0.0
    %3072 = vmatpush1.msra.mxu0 0.0
    %3073 = vmatprep.subr.mxu0 0.0
    %3074 = vmatpush1.msra.mxu0 0.0
    %3075 = vmatprep.subr.mxu0 0.0
    %3076 = vmatpush1.msra.mxu0 0.0
    %3077 = vmatprep.subr.mxu0 0.0
    %3078 = vmatpush1.msra.mxu0 0.0
    %3079 = vmatprep.subr.mxu0 0.0
    %3080 = vmatpush1.msra.mxu0 0.0
    %3081 = vmatprep.subr.mxu0 0.0
    %3082 = vmatpush1.msra.mxu0 0.0
    %3083 = vmatprep.subr.mxu0 0.0
    %3084 = vmatpush1.msra.mxu0 0.0
    %3085 = vmatprep.subr.mxu0 0.0
    %3086 = vmatpush1.msra.mxu0 0.0
    %3087 = vmatprep.subr.mxu0 0.0
    %3088 = vmatpush1.msra.mxu0 0.0
    %3089 = vmatprep.subr.mxu0 0.0
    %3090 = vmatpush1.msra.mxu0 0.0
    %3091 = vmatprep.subr.mxu0 0.0
    %3092 = vmatpush1.msra.mxu0 0.0
    %3093 = vmatprep.subr.mxu0 0.0
    %3094 = vmatpush1.msra.mxu0 0.0
    %3095 = vmatprep.subr.mxu0 0.0
    %3096 = vmatpush1.msra.mxu0 0.0
    %3097 = vmatprep.subr.mxu0 0.0
    %3098 = vmatpush1.msra.mxu0 0.0
    %3099 = vmatprep.subr.mxu0 0.0
    %3100 = vmatpush1.msra.mxu0 0.0
    %3101 = vmatprep.subr.mxu0 0.0
    %3102 = vmatpush1.msra.mxu0 0.0
    %3103 = vmatprep.subr.mxu0 0.0
    %3104 = vmatpush1.msra.mxu0 0.0
    %3105 = vmatprep.subr.mxu0 0.0
    %3106 = vmatpush1.msra.mxu0 0.0
    %3107 = vmatprep.subr.mxu0 0.0
    %3108 = vmatpush1.msra.mxu0 0.0
    %3109 = vmatprep.subr.mxu0 0.0
    %3110 = vmatpush1.msra.mxu0 0.0
    %3111 = vmatprep.subr.mxu0 0.0
    %3112 = vmatpush1.msra.mxu0 0.0
    %3113 = vmatprep.subr.mxu0 0.0
    %3114 = vmatpush1.msra.mxu0 0.0
    %3115 = vmatprep.subr.mxu0 0.0
    %3116 = vmatpush1.msra.mxu0 0.0
    %3117 = vmatprep.mubr.f32.mxu0 0.0
    %3118 = vmatmul.mubr.f32.gmra.mrb[0].mxu0 %v3051
    %v3119 = vpop.f32.mrb[0].mxu0
    %v3120 = vadd.f32 0.0, %v3119
    %v3121 = vpop.f32.mrb[0].mxu0
    %3122 = vdwg.mxu0
    %3123 = vrot.lane.b32.xlu0 %v505, 40
    %v3124 = vpop.permute.xlu0 %3123
    %v3127 = vsel %vm513, %v2894, 0
    %3129 = vmatprep.subr.mxu0 0.0
    %3130 = vmatpush1.msra.mxu0 %v3124
    %3131 = vmatprep.subr.mxu0 0.0
    %3132 = vmatpush1.msra.mxu0 0.0
    %3133 = vmatprep.subr.mxu0 0.0
    %3134 = vmatpush1.msra.mxu0 0.0
    %3135 = vmatprep.subr.mxu0 0.0
    %3136 = vmatpush1.msra.mxu0 0.0
    %3137 = vmatprep.subr.mxu0 0.0
    %3138 = vmatpush1.msra.mxu0 0.0
    %3139 = vmatprep.subr.mxu0 0.0
    %3140 = vmatpush1.msra.mxu0 0.0
    %3141 = vmatprep.subr.mxu0 0.0
    %3142 = vmatpush1.msra.mxu0 0.0
    %3143 = vmatprep.subr.mxu0 0.0
    %3144 = vmatpush1.msra.mxu0 0.0
    %3145 = vmatprep.subr.mxu0 0.0
    %3146 = vmatpush1.msra.mxu0 0.0
    %3147 = vmatprep.subr.mxu0 0.0
    %3148 = vmatpush1.msra.mxu0 0.0
    %3149 = vmatprep.subr.mxu0 0.0
    %3150 = vmatpush1.msra.mxu0 0.0
    %3151 = vmatprep.subr.mxu0 0.0
    %3152 = vmatpush1.msra.mxu0 0.0
    %3153 = vmatprep.subr.mxu0 0.0
    %3154 = vmatpush1.msra.mxu0 0.0
    %3155 = vmatprep.subr.mxu0 0.0
    %3156 = vmatpush1.msra.mxu0 0.0
    %3157 = vmatprep.subr.mxu0 0.0
    %3158 = vmatpush1.msra.mxu0 0.0
    %3159 = vmatprep.subr.mxu0 0.0
    %3160 = vmatpush1.msra.mxu0 0.0
    %3161 = vmatprep.subr.mxu0 0.0
    %3162 = vmatpush1.msra.mxu0 0.0
    %3163 = vmatprep.subr.mxu0 0.0
    %3164 = vmatpush1.msra.mxu0 0.0
    %3165 = vmatprep.subr.mxu0 0.0
    %3166 = vmatpush1.msra.mxu0 0.0
    %3167 = vmatprep.subr.mxu0 0.0
    %3168 = vmatpush1.msra.mxu0 0.0
    %3169 = vmatprep.subr.mxu0 0.0
    %3170 = vmatpush1.msra.mxu0 0.0
    %3171 = vmatprep.subr.mxu0 0.0
    %3172 = vmatpush1.msra.mxu0 0.0
    %3173 = vmatprep.subr.mxu0 0.0
    %3174 = vmatpush1.msra.mxu0 0.0
    %3175 = vmatprep.subr.mxu0 0.0
    %3176 = vmatpush1.msra.mxu0 0.0
    %3177 = vmatprep.subr.mxu0 0.0
    %3178 = vmatpush1.msra.mxu0 0.0
    %3179 = vmatprep.subr.mxu0 0.0
    %3180 = vmatpush1.msra.mxu0 0.0
    %3181 = vmatprep.subr.mxu0 0.0
    %3182 = vmatpush1.msra.mxu0 0.0
    %3183 = vmatprep.subr.mxu0 0.0
    %3184 = vmatpush1.msra.mxu0 0.0
    %3185 = vmatprep.subr.mxu0 0.0
    %3186 = vmatpush1.msra.mxu0 0.0
    %3187 = vmatprep.subr.mxu0 0.0
    %3188 = vmatpush1.msra.mxu0 0.0
    %3189 = vmatprep.subr.mxu0 0.0
    %3190 = vmatpush1.msra.mxu0 0.0
    %3191 = vmatprep.subr.mxu0 0.0
    %3192 = vmatpush1.msra.mxu0 0.0
    %3193 = vmatprep.mubr.f32.mxu0 0.0
    %3194 = vmatmul.mubr.f32.gmra.mrb[0].mxu0 %v3127
    %v3195 = vpop.f32.mrb[0].mxu0
    %v3196 = vadd.f32 0.0, %v3195
    %v3197 = vpop.f32.mrb[0].mxu0
    %3198 = vdwg.mxu0
    %3203 = vrot.lane.b32.xlu0 %v1624, 8
    %v3204 = vpop.permute.xlu0 %3203
    %3205 = vrot.lane.b32.xlu0 %v1700, 8
    %v3206 = vpop.permute.xlu0 %3205
    %3207 = vrot.lane.b32.xlu0 %v1776, 8
    %v3208 = vpop.permute.xlu0 %3207
    %3209 = vrot.lane.b32.xlu0 %v1852, 8
    %v3210 = vpop.permute.xlu0 %3209
    %3219 = vrot.lane.b32.xlu0 %v2296, 16
    %v3220 = vpop.permute.xlu0 %3219
    %3221 = vrot.lane.b32.xlu0 %v2372, 16
    %v3222 = vpop.permute.xlu0 %3221
    %3223 = vrot.lane.b32.xlu0 %v2448, 16
    %v3224 = vpop.permute.xlu0 %3223
    %3225 = vrot.lane.b32.xlu0 %v2524, 16
    %v3226 = vpop.permute.xlu0 %3225
    %3235 = vrot.lane.b32.xlu0 %v2968, 24
    %v3236 = vpop.permute.xlu0 %3235
    %3237 = vrot.lane.b32.xlu0 %v3044, 24
    %v3238 = vpop.permute.xlu0 %3237
    %3239 = vrot.lane.b32.xlu0 %v3120, 24
    %v3240 = vpop.permute.xlu0 %3239
    %3241 = vrot.lane.b32.xlu0 %v3196, 24
    %v3242 = vpop.permute.xlu0 %3241
    %v3247 = vsel %vm513, %v952, %v3204
    %v3248 = vsel %vm513, %v1028, %v3206
    %v3249 = vsel %vm513, %v1104, %v3208
    %v3250 = vsel %vm513, %v1180, %v3210
    %v3251 = vsel %vm164, %v3247, %v3220
    %v3252 = vsel %vm164, %v3248, %v3222
    %v3253 = vsel %vm164, %v3249, %v3224
    %v3254 = vsel %vm164, %v3250, %v3226
    %vm3255 = vcmask 195584
    %v3256 = vsel %vm3255, %v3251, %v3236
    %v3257 = vsel %vm3255, %v3252, %v3238
    %v3258 = vsel %vm3255, %v3253, %v3240
    %v3259 = vsel %vm3255, %v3254, %v3242
    %v3260 = vadd.f32 %v3256, %v502
    %v3261 = vadd.f32 %v3257, %v503
    %v3262 = vadd.f32 %v3258, %v504
    %v3263 = vadd.f32 %v3259, %v505
    %v3264 = vsel %vm66, %v3260, 0.0
    %3265 = vadd.xlane.f32.xlu0 %v3264
    %v3266 = vpop.xlane.xlu0 %3265
    %v3267 = vsel %vm66, %v3261, 0.0
    %3268 = vadd.xlane.f32.xlu0 %v3267
    %v3269 = vpop.xlane.xlu0 %3268
    %v3270 = vsel %vm66, %v3262, 0.0
    %3271 = vadd.xlane.f32.xlu0 %v3270
    %v3272 = vpop.xlane.xlu0 %3271
    %v3273 = vsel %vm66, %v3263, 0.0
    %3274 = vadd.xlane.f32.xlu0 %v3273
    %v3275 = vpop.xlane.xlu0 %3274
    %v3276 = vrcp.pop 32.0
    %v3277 = vmul.f32 %v3266, %v3276
    %v3278 = vmul.f32 %v3269, %v3276
    %v3279 = vmul.f32 %v3272, %v3276
    %v3280 = vmul.f32 %v3275, %v3276
    %v3281 = vsub.f32 %v3260, %v3277
    %v3282 = vsub.f32 %v3261, %v3278
    %v3283 = vsub.f32 %v3262, %v3279
    %v3284 = vsub.f32 %v3263, %v3280
    %v3285 = vmul.f32 %v3281, %v3281
    %v3286 = vmul.f32 %v3282, %v3282
    %v3287 = vmul.f32 %v3283, %v3283
    %v3288 = vmul.f32 %v3284, %v3284
    %v3289 = vsel %vm66, %v3285, 0.0
    %3290 = vadd.xlane.f32.xlu0 %v3289
    %v3291 = vpop.xlane.xlu0 %3290
    %v3292 = vsel %vm66, %v3286, 0.0
    %3293 = vadd.xlane.f32.xlu0 %v3292
    %v3294 = vpop.xlane.xlu0 %3293
    %v3295 = vsel %vm66, %v3287, 0.0
    %3296 = vadd.xlane.f32.xlu0 %v3295
    %v3297 = vpop.xlane.xlu0 %3296
    %v3298 = vsel %vm66, %v3288, 0.0
    %3299 = vadd.xlane.f32.xlu0 %v3298
    %v3300 = vpop.xlane.xlu0 %3299
    %v3301 = vmul.f32 %v3291, %v3276
    %v3302 = vmul.f32 %v3294, %v3276
    %v3303 = vmul.f32 %v3297, %v3276
    %v3304 = vmul.f32 %v3300, %v3276
    %v3305 = vadd.f32 %v3301, 1e-05
    %v3306 = vadd.f32 %v3302, 1e-05
    %v3307 = vadd.f32 %v3303, 1e-05
    %v3308 = vadd.f32 %v3304, 1e-05
    %v3309 = vrsqrt.pop %v3305
    %v3310 = vrsqrt.pop %v3306
    %v3311 = vrsqrt.pop %v3307
    %v3312 = vrsqrt.pop %v3308
    %v3313 = vmul.f32 %v3281, %v3309
    %v3314 = vmul.f32 %v3282, %v3310
    %v3315 = vmul.f32 %v3283, %v3311
    %v3316 = vmul.f32 %v3284, %v3312
    %v3317 = vlaneseq
    %v3318 = vshrl.u32 %v3317, 7
    %v3319 = vsub.s32 4, %v3318
    %v3320 = vrot.slane %v58, %v3319
    %v3321 = vmul.f32 %v3313, %v3320
    %v3322 = vmul.f32 %v3314, %v3320
    %v3323 = vmul.f32 %v3315, %v3320
    %v3324 = vmul.f32 %v3316, %v3320
    %v3325 = vlaneseq
    %v3326 = vshrl.u32 %v3325, 7
    %v3327 = vsub.s32 5, %v3326
    %v3328 = vrot.slane %v58, %v3327
    %v3329 = vadd.f32 %v3321, %v3328
    %v3330 = vadd.f32 %v3322, %v3328
    %v3331 = vadd.f32 %v3323, %v3328
    %v3332 = vadd.f32 %v3324, %v3328
    %v3333 = vld [vmem:[%s6] sm:$0xff]
    %v3334 = vld [vmem:[%s6 + $0x8] sm:$0xff]
    %v3335 = vld [vmem:[%s6 + $0x10] sm:$0xff]
    %v3336 = vld [vmem:[%s6 + $0x18] sm:$0xff]
    %v3337 = vlaneseq
    %v3338 = vshrl.u32 %v3337, 7
    %v3339 = vsub.s32 2, %v3338
    %v3340 = vrot.slane %v58, %v3339
    %v3342 = vsel %vm66, %v3329, 0
    %v3345 = vsel %vm66, %v3330, 0
    %v3348 = vsel %vm66, %v3331, 0
    %v3351 = vsel %vm66, %v3332, 0
    %3353 = vmatprep.subr.mxu0 0.0
    %3354 = vmatpush1.msra.mxu0 %v3333
    %3355 = vmatprep.subr.mxu0 0.0
    %3356 = vmatpush1.msra.mxu0 %v3334
    %3357 = vmatprep.subr.mxu0 0.0
    %3358 = vmatpush1.msra.mxu0 %v3335
    %3359 = vmatprep.subr.mxu0 0.0
    %3360 = vmatpush1.msra.mxu0 %v3336
    %3361 = vmatprep.subr.mxu0 0.0
    %3362 = vmatpush1.msra.mxu0 0.0
    %3363 = vmatprep.subr.mxu0 0.0
    %3364 = vmatpush1.msra.mxu0 0.0
    %3365 = vmatprep.subr.mxu0 0.0
    %3366 = vmatpush1.msra.mxu0 0.0
    %3367 = vmatprep.subr.mxu0 0.0
    %3368 = vmatpush1.msra.mxu0 0.0
    %3369 = vmatprep.subr.mxu0 0.0
    %3370 = vmatpush1.msra.mxu0 0.0
    %3371 = vmatprep.subr.mxu0 0.0
    %3372 = vmatpush1.msra.mxu0 0.0
    %3373 = vmatprep.subr.mxu0 0.0
    %3374 = vmatpush1.msra.mxu0 0.0
    %3375 = vmatprep.subr.mxu0 0.0
    %3376 = vmatpush1.msra.mxu0 0.0
    %3377 = vmatprep.subr.mxu0 0.0
    %3378 = vmatpush1.msra.mxu0 0.0
    %3379 = vmatprep.subr.mxu0 0.0
    %3380 = vmatpush1.msra.mxu0 0.0
    %3381 = vmatprep.subr.mxu0 0.0
    %3382 = vmatpush1.msra.mxu0 0.0
    %3383 = vmatprep.subr.mxu0 0.0
    %3384 = vmatpush1.msra.mxu0 0.0
    %3385 = vmatprep.subr.mxu0 0.0
    %3386 = vmatpush1.msra.mxu0 0.0
    %3387 = vmatprep.subr.mxu0 0.0
    %3388 = vmatpush1.msra.mxu0 0.0
    %3389 = vmatprep.subr.mxu0 0.0
    %3390 = vmatpush1.msra.mxu0 0.0
    %3391 = vmatprep.subr.mxu0 0.0
    %3392 = vmatpush1.msra.mxu0 0.0
    %3393 = vmatprep.subr.mxu0 0.0
    %3394 = vmatpush1.msra.mxu0 0.0
    %3395 = vmatprep.subr.mxu0 0.0
    %3396 = vmatpush1.msra.mxu0 0.0
    %3397 = vmatprep.subr.mxu0 0.0
    %3398 = vmatpush1.msra.mxu0 0.0
    %3399 = vmatprep.subr.mxu0 0.0
    %3400 = vmatpush1.msra.mxu0 0.0
    %3401 = vmatprep.subr.mxu0 0.0
    %3402 = vmatpush1.msra.mxu0 0.0
    %3403 = vmatprep.subr.mxu0 0.0
    %3404 = vmatpush1.msra.mxu0 0.0
    %3405 = vmatprep.subr.mxu0 0.0
    %3406 = vmatpush1.msra.mxu0 0.0
    %3407 = vmatprep.subr.mxu0 0.0
    %3408 = vmatpush1.msra.mxu0 0.0
    %3409 = vmatprep.subr.mxu0 0.0
    %3410 = vmatpush1.msra.mxu0 0.0
    %3411 = vmatprep.subr.mxu0 0.0
    %3412 = vmatpush1.msra.mxu0 0.0
    %3413 = vmatprep.subr.mxu0 0.0
    %3414 = vmatpush1.msra.mxu0 0.0
    %3415 = vmatprep.subr.mxu0 0.0
    %3416 = vmatpush1.msra.mxu0 0.0
    %3417 = vmatprep.mubr.f32.mxu0 0.0
    %3418 = vmatmul.mubr.f32.gmra.mrb[0].mxu0 %v3342
    %v3419 = vpop.f32.mrb[0].mxu0
    %v3420 = vadd.f32 %v3340, %v3419
    %v3421 = vpop.f32.mrb[0].mxu0
    %3422 = vmatprep.mubr.f32.mxu0 0.0
    %3423 = vmatmul.mubr.f32.gmra.mrb[0].mxu0 %v3345
    %v3424 = vpop.f32.mrb[0].mxu0
    %v3425 = vadd.f32 %v3340, %v3424
    %v3426 = vpop.f32.mrb[0].mxu0
    %3427 = vmatprep.mubr.f32.mxu0 0.0
    %3428 = vmatmul.mubr.f32.gmra.mrb[0].mxu0 %v3348
    %v3429 = vpop.f32.mrb[0].mxu0
    %v3430 = vadd.f32 %v3340, %v3429
    %v3431 = vpop.f32.mrb[0].mxu0
    %3432 = vmatprep.mubr.f32.mxu0 0.0
    %3433 = vmatmul.mubr.f32.gmra.mrb[0].mxu0 %v3351
    %v3434 = vpop.f32.mrb[0].mxu0
    %v3435 = vadd.f32 %v3340, %v3434
    %v3436 = vpop.f32.mrb[0].mxu0
    %3437 = vdwg.mxu0
    %v3438 = vtanh.pop %v3420
    %v3439 = vtanh.pop %v3425
    %v3440 = vtanh.pop %v3430
    %v3441 = vtanh.pop %v3435
    %v3442 = vld [vmem:[%s7] sm:$0xff]
    %v3443 = vld [vmem:[%s7 + $0x8] sm:$0xff]
    %v3444 = vld [vmem:[%s7 + $0x10] sm:$0xff]
    %v3445 = vld [vmem:[%s7 + $0x18] sm:$0xff]
    %v3446 = vld [vmem:[%s7 + $0x20] sm:$0xff]
    %v3447 = vld [vmem:[%s7 + $0x28] sm:$0xff]
    %v3448 = vld [vmem:[%s7 + $0x30] sm:$0xff]
    %v3449 = vld [vmem:[%s7 + $0x38] sm:$0xff]
    %v3450 = vld [vmem:[%s7 + $0x40] sm:$0xff]
    %v3451 = vld [vmem:[%s7 + $0x48] sm:$0xff]
    %v3452 = vld [vmem:[%s7 + $0x50] sm:$0xff]
    %v3453 = vld [vmem:[%s7 + $0x58] sm:$0xff]
    %v3454 = vld [vmem:[%s7 + $0x60] sm:$0xff]
    %v3455 = vld [vmem:[%s7 + $0x68] sm:$0xff]
    %v3456 = vld [vmem:[%s7 + $0x70] sm:$0xff]
    %v3457 = vld [vmem:[%s7 + $0x78] sm:$0xff]
    %v3458 = vlaneseq
    %v3459 = vshrl.u32 %v3458, 7
    %v3460 = vsub.s32 3, %v3459
    %v3461 = vrot.slane %v58, %v3460
    %3462 = vmatprep.subr.mxu0 0.0
    %3463 = vmatpush1.msra.mxu0 %v3442
    %3464 = vmatprep.subr.mxu0 0.0
    %3465 = vmatpush1.msra.mxu0 %v3443
    %3466 = vmatprep.subr.mxu0 0.0
    %3467 = vmatpush1.msra.mxu0 %v3444
    %3468 = vmatprep.subr.mxu0 0.0
    %3469 = vmatpush1.msra.mxu0 %v3445
    %3470 = vmatprep.subr.mxu0 0.0
    %3471 = vmatpush1.msra.mxu0 %v3446
    %3472 = vmatprep.subr.mxu0 0.0
    %3473 = vmatpush1.msra.mxu0 %v3447
    %3474 = vmatprep.subr.mxu0 0.0
    %3475 = vmatpush1.msra.mxu0 %v3448
    %3476 = vmatprep.subr.mxu0 0.0
    %3477 = vmatpush1.msra.mxu0 %v3449
    %3478 = vmatprep.subr.mxu0 0.0
    %3479 = vmatpush1.msra.mxu0 %v3450
    %3480 = vmatprep.subr.mxu0 0.0
    %3481 = vmatpush1.msra.mxu0 %v3451
    %3482 = vmatprep.subr.mxu0 0.0
    %3483 = vmatpush1.msra.mxu0 %v3452
    %3484 = vmatprep.subr.mxu0 0.0
    %3485 = vmatpush1.msra.mxu0 %v3453
    %3486 = vmatprep.subr.mxu0 0.0
    %3487 = vmatpush1.msra.mxu0 %v3454
    %3488 = vmatprep.subr.mxu0 0.0
    %3489 = vmatpush1.msra.mxu0 %v3455
    %3490 = vmatprep.subr.mxu0 0.0
    %3491 = vmatpush1.msra.mxu0 %v3456
    %3492 = vmatprep.subr.mxu0 0.0
    %3493 = vmatpush1.msra.mxu0 %v3457
    %3494 = vmatprep.subr.mxu0 0.0
    %3495 = vmatpush1.msra.mxu0 0.0
    %3496 = vmatprep.subr.mxu0 0.0
    %3497 = vmatpush1.msra.mxu0 0.0
    %3498 = vmatprep.subr.mxu0 0.0
    %3499 = vmatpush1.msra.mxu0 0.0
    %3500 = vmatprep.subr.mxu0 0.0
    %3501 = vmatpush1.msra.mxu0 0.0
    %3502 = vmatprep.subr.mxu0 0.0
    %3503 = vmatpush1.msra.mxu0 0.0
    %3504 = vmatprep.subr.mxu0 0.0
    %3505 = vmatpush1.msra.mxu0 0.0
    %3506 = vmatprep.subr.mxu0 0.0
    %3507 = vmatpush1.msra.mxu0 0.0
    %3508 = vmatprep.subr.mxu0 0.0
    %3509 = vmatpush1.msra.mxu0 0.0
    %3510 = vmatprep.subr.mxu0 0.0
    %3511 = vmatpush1.msra.mxu0 0.0
    %3512 = vmatprep.subr.mxu0 0.0
    %3513 = vmatpush1.msra.mxu0 0.0
    %3514 = vmatprep.subr.mxu0 0.0
    %3515 = vmatpush1.msra.mxu0 0.0
    %3516 = vmatprep.subr.mxu0 0.0
    %3517 = vmatpush1.msra.mxu0 0.0
    %3518 = vmatprep.subr.mxu0 0.0
    %3519 = vmatpush1.msra.mxu0 0.0
    %3520 = vmatprep.subr.mxu0 0.0
    %3521 = vmatpush1.msra.mxu0 0.0
    %3522 = vmatprep.subr.mxu0 0.0
    %3523 = vmatpush1.msra.mxu0 0.0
    %3524 = vmatprep.subr.mxu0 0.0
    %3525 = vmatpush1.msra.mxu0 0.0
    %3526 = vmatprep.mubr.f32.mxu0 0.0
    %3527 = vmatmul.mubr.f32.gmra.mrb[0].mxu0 %v3438
    %v3528 = vpop.f32.mrb[0].mxu0
    %v3529 = vadd.f32 %v3461, %v3528
    %v3530 = vpop.f32.mrb[0].mxu0
    %3531 = vmatprep.mubr.f32.mxu0 0.0
    %3532 = vmatmul.mubr.f32.gmra.mrb[0].mxu0 %v3439
    %v3533 = vpop.f32.mrb[0].mxu0
    %v3534 = vadd.f32 %v3461, %v3533
    %v3535 = vpop.f32.mrb[0].mxu0
    %3536 = vmatprep.mubr.f32.mxu0 0.0
    %3537 = vmatmul.mubr.f32.gmra.mrb[0].mxu0 %v3440
    %v3538 = vpop.f32.mrb[0].mxu0
    %v3539 = vadd.f32 %v3461, %v3538
    %v3540 = vpop.f32.mrb[0].mxu0
    %3541 = vmatprep.mubr.f32.mxu0 0.0
    %3542 = vmatmul.mubr.f32.gmra.mrb[0].mxu0 %v3441
    %v3543 = vpop.f32.mrb[0].mxu0
    %v3544 = vadd.f32 %v3461, %v3543
    %v3545 = vpop.f32.mrb[0].mxu0
    %3546 = vdwg.mxu0
    %v3547 = vadd.f32 %v3529, %v3329
    %v3548 = vadd.f32 %v3534, %v3330
    %v3549 = vadd.f32 %v3539, %v3331
    %v3550 = vadd.f32 %v3544, %v3332
    %v3551 = vsel %vm66, %v3547, 0.0
    %3552 = vadd.xlane.f32.xlu0 %v3551
    %v3553 = vpop.xlane.xlu0 %3552
    %v3554 = vsel %vm66, %v3548, 0.0
    %3555 = vadd.xlane.f32.xlu0 %v3554
    %v3556 = vpop.xlane.xlu0 %3555
    %v3557 = vsel %vm66, %v3549, 0.0
    %3558 = vadd.xlane.f32.xlu0 %v3557
    %v3559 = vpop.xlane.xlu0 %3558
    %v3560 = vsel %vm66, %v3550, 0.0
    %3561 = vadd.xlane.f32.xlu0 %v3560
    %v3562 = vpop.xlane.xlu0 %3561
    %v3563 = vmul.f32 %v3553, %v3276
    %v3564 = vmul.f32 %v3556, %v3276
    %v3565 = vmul.f32 %v3559, %v3276
    %v3566 = vmul.f32 %v3562, %v3276
    %v3567 = vsub.f32 %v3547, %v3563
    %v3568 = vsub.f32 %v3548, %v3564
    %v3569 = vsub.f32 %v3549, %v3565
    %v3570 = vsub.f32 %v3550, %v3566
    %v3571 = vmul.f32 %v3567, %v3567
    %v3572 = vmul.f32 %v3568, %v3568
    %v3573 = vmul.f32 %v3569, %v3569
    %v3574 = vmul.f32 %v3570, %v3570
    %v3575 = vsel %vm66, %v3571, 0.0
    %3576 = vadd.xlane.f32.xlu0 %v3575
    %v3577 = vpop.xlane.xlu0 %3576
    %v3578 = vsel %vm66, %v3572, 0.0
    %3579 = vadd.xlane.f32.xlu0 %v3578
    %v3580 = vpop.xlane.xlu0 %3579
    %v3581 = vsel %vm66, %v3573, 0.0
    %3582 = vadd.xlane.f32.xlu0 %v3581
    %v3583 = vpop.xlane.xlu0 %3582
    %v3584 = vsel %vm66, %v3574, 0.0
    %3585 = vadd.xlane.f32.xlu0 %v3584
    %v3586 = vpop.xlane.xlu0 %3585
    %v3587 = vmul.f32 %v3577, %v3276
    %v3588 = vmul.f32 %v3580, %v3276
    %v3589 = vmul.f32 %v3583, %v3276
    %v3590 = vmul.f32 %v3586, %v3276
    %v3591 = vadd.f32 %v3587, 1e-05
    %v3592 = vadd.f32 %v3588, 1e-05
    %v3593 = vadd.f32 %v3589, 1e-05
    %v3594 = vadd.f32 %v3590, 1e-05
    %v3595 = vrsqrt.pop %v3591
    %v3596 = vrsqrt.pop %v3592
    %v3597 = vrsqrt.pop %v3593
    %v3598 = vrsqrt.pop %v3594
    %v3599 = vmul.f32 %v3567, %v3595
    %v3600 = vmul.f32 %v3568, %v3596
    %v3601 = vmul.f32 %v3569, %v3597
    %v3602 = vmul.f32 %v3570, %v3598
    %v3603 = vlaneseq
    %v3604 = vshrl.u32 %v3603, 7
    %v3605 = vsub.s32 6, %v3604
    %v3606 = vrot.slane %v58, %v3605
    %v3607 = vmul.f32 %v3599, %v3606
    %v3608 = vmul.f32 %v3600, %v3606
    %v3609 = vmul.f32 %v3601, %v3606
    %v3610 = vmul.f32 %v3602, %v3606
    %v3611 = vlaneseq
    %v3612 = vshrl.u32 %v3611, 7
    %v3613 = vsub.s32 7, %v3612
    %v3614 = vrot.slane %v58, %v3613
    %v3615 = vadd.f32 %v3607, %v3614
    %v3616 = vadd.f32 %v3608, %v3614
    %v3617 = vadd.f32 %v3609, %v3614
    %v3618 = vadd.f32 %v3610, %v3614
    %v3619 = vld [vmem:[%s8] sm:$0xff]
    %v3620 = vld [vmem:[%s8 + $0x8] sm:$0xff]
    %v3621 = vld [vmem:[%s8 + $0x10] sm:$0xff]
    %v3622 = vld [vmem:[%s8 + $0x18] sm:$0xff]
    %v3623 = vlaneseq
    %v3624 = vshrl.u32 %v3623, 7
    %v3625 = vsub.s32 0, %v3624
    %v3626 = vrot.slane %v59, %v3625
    %v3628 = vsel %vm66, %v3615, 0
    %v3631 = vsel %vm66, %v3616, 0
    %v3634 = vsel %vm66, %v3617, 0
    %v3637 = vsel %vm66, %v3618, 0
    %3639 = vmatprep.subr.mxu0 0.0
    %3640 = vmatpush1.msra.mxu0 %v3619
    %3641 = vmatprep.subr.mxu0 0.0
    %3642 = vmatpush1.msra.mxu0 %v3620
    %3643 = vmatprep.subr.mxu0 0.0
    %3644 = vmatpush1.msra.mxu0 %v3621
    %3645 = vmatprep.subr.mxu0 0.0
    %3646 = vmatpush1.msra.mxu0 %v3622
    %3647 = vmatprep.subr.mxu0 0.0
    %3648 = vmatpush1.msra.mxu0 0.0
    %3649 = vmatprep.subr.mxu0 0.0
    %3650 = vmatpush1.msra.mxu0 0.0
    %3651 = vmatprep.subr.mxu0 0.0
    %3652 = vmatpush1.msra.mxu0 0.0
    %3653 = vmatprep.subr.mxu0 0.0
    %3654 = vmatpush1.msra.mxu0 0.0
    %3655 = vmatprep.subr.mxu0 0.0
    %3656 = vmatpush1.msra.mxu0 0.0
    %3657 = vmatprep.subr.mxu0 0.0
    %3658 = vmatpush1.msra.mxu0 0.0
    %3659 = vmatprep.subr.mxu0 0.0
    %3660 = vmatpush1.msra.mxu0 0.0
    %3661 = vmatprep.subr.mxu0 0.0
    %3662 = vmatpush1.msra.mxu0 0.0
    %3663 = vmatprep.subr.mxu0 0.0
    %3664 = vmatpush1.msra.mxu0 0.0
    %3665 = vmatprep.subr.mxu0 0.0
    %3666 = vmatpush1.msra.mxu0 0.0
    %3667 = vmatprep.subr.mxu0 0.0
    %3668 = vmatpush1.msra.mxu0 0.0
    %3669 = vmatprep.subr.mxu0 0.0
    %3670 = vmatpush1.msra.mxu0 0.0
    %3671 = vmatprep.subr.mxu0 0.0
    %3672 = vmatpush1.msra.mxu0 0.0
    %3673 = vmatprep.subr.mxu0 0.0
    %3674 = vmatpush1.msra.mxu0 0.0
    %3675 = vmatprep.subr.mxu0 0.0
    %3676 = vmatpush1.msra.mxu0 0.0
    %3677 = vmatprep.subr.mxu0 0.0
    %3678 = vmatpush1.msra.mxu0 0.0
    %3679 = vmatprep.subr.mxu0 0.0
    %3680 = vmatpush1.msra.mxu0 0.0
    %3681 = vmatprep.subr.mxu0 0.0
    %3682 = vmatpush1.msra.mxu0 0.0
    %3683 = vmatprep.subr.mxu0 0.0
    %3684 = vmatpush1.msra.mxu0 0.0
    %3685 = vmatprep.subr.mxu0 0.0
    %3686 = vmatpush1.msra.mxu0 0.0
    %3687 = vmatprep.subr.mxu0 0.0
    %3688 = vmatpush1.msra.mxu0 0.0
    %3689 = vmatprep.subr.mxu0 0.0
    %3690 = vmatpush1.msra.mxu0 0.0
    %3691 = vmatprep.subr.mxu0 0.0
    %3692 = vmatpush1.msra.mxu0 0.0
    %3693 = vmatprep.subr.mxu0 0.0
    %3694 = vmatpush1.msra.mxu0 0.0
    %3695 = vmatprep.subr.mxu0 0.0
    %3696 = vmatpush1.msra.mxu0 0.0
    %3697 = vmatprep.subr.mxu0 0.0
    %3698 = vmatpush1.msra.mxu0 0.0
    %3699 = vmatprep.subr.mxu0 0.0
    %3700 = vmatpush1.msra.mxu0 0.0
    %3701 = vmatprep.subr.mxu0 0.0
    %3702 = vmatpush1.msra.mxu0 0.0
    %3703 = vmatprep.mubr.f32.mxu0 0.0
    %3704 = vmatmul.mubr.f32.gmra.mrb[0].mxu0 %v3628
    %v3705 = vpop.f32.mrb[0].mxu0
    %v3706 = vadd.f32 %v3626, %v3705
    %v3707 = vpop.f32.mrb[0].mxu0
    %3708 = vmatprep.mubr.f32.mxu0 0.0
    %3709 = vmatmul.mubr.f32.gmra.mrb[0].mxu0 %v3631
    %v3710 = vpop.f32.mrb[0].mxu0
    %v3711 = vadd.f32 %v3626, %v3710
    %v3712 = vpop.f32.mrb[0].mxu0
    %3713 = vmatprep.mubr.f32.mxu0 0.0
    %3714 = vmatmul.mubr.f32.gmra.mrb[0].mxu0 %v3634
    %v3715 = vpop.f32.mrb[0].mxu0
    %v3716 = vadd.f32 %v3626, %v3715
    %v3717 = vpop.f32.mrb[0].mxu0
    %3718 = vmatprep.mubr.f32.mxu0 0.0
    %3719 = vmatmul.mubr.f32.gmra.mrb[0].mxu0 %v3637
    %v3720 = vpop.f32.mrb[0].mxu0
    %v3721 = vadd.f32 %v3626, %v3720
    %v3722 = vpop.f32.mrb[0].mxu0
    %3723 = vdwg.mxu0
    %v3724 = vtanh.pop %v3706
    %v3725 = vtanh.pop %v3711
    %v3726 = vtanh.pop %v3716
    %v3727 = vtanh.pop %v3721
    %v3728 = vsub.f32 1.0, %v282
    %v3729 = vsub.f32 1.0, %v283
    %v3730 = vsub.f32 1.0, %v284
    %v3731 = vsub.f32 1.0, %v285
    %v3732 = vmul.f32 %v3728, %v54
    %v3733 = vmul.f32 %v3729, %v55
    %v3734 = vmul.f32 %v3730, %v56
    %v3735 = vmul.f32 %v3731, %v57
    %v3736 = vmul.f32 %v282, %v3724
    %v3737 = vmul.f32 %v283, %v3725
    %v3738 = vmul.f32 %v284, %v3726
    %v3739 = vmul.f32 %v285, %v3727
    %v3740 = vadd.f32 %v3732, %v3736
    %v3741 = vadd.f32 %v3733, %v3737
    %v3742 = vadd.f32 %v3734, %v3738
    %v3743 = vadd.f32 %v3735, %v3739
    %3744 = vst.msk [vmem:[#allocation5] sm:$0xff] %vm66, %v3740
    %3745 = vst.msk [vmem:[#allocation5 + $0x8] sm:$0xff] %vm66, %v3741
    %3746 = vst.msk [vmem:[#allocation5 + $0x10] sm:$0xff] %vm66, %v3742
    %3747 = vst.msk [vmem:[#allocation5 + $0x18] sm:$0xff] %vm66, %v3743
    // Predicated region
    $region46: #{tpu_custom_call.1} parent=1 // pred_check
      _
    $region47: #{tpu_custom_call.1} parent=1 // pred_check_branch
      %3749 = sbr.rel (0) target = $region49
    $region48: #{tpu_custom_call.1} parent=1 // pred_region
      %s3751 = ssub.s32 512, 512
      %3752 = vsyncadd [#allocation4], %s3751
      %s3753 = sshll.u32 [#allocation5], 4
      %s3754 = int_to_ptr.vmem [resolvable:$true] %s3753
      %3759 = dma.vmem_to_hbm [thread:$0]  %s3754, 512, %s10, [#allocation4], 128, 128, 8
    $region49: #{tpu_custom_call.1} parent=1 // pred_fallthru
      _
    // Predicated region
    $region50: #{tpu_custom_call.1} parent=1 // pred_check
      _
    $region51: #{tpu_custom_call.1} parent=1 // pred_check_branch
      %3761 = sbr.rel (0) target = $region53
    $region52: #{tpu_custom_call.1} parent=1 // pred_region
      %3762 = dma.done [#allocation4], 512
    $region53: #{tpu_custom_call.1} parent=1 // pred_fallthru
      _
    %3763 = vsyncpa [#allocation3], 1
    %3764 = vsyncpa [#allocation4], 1

</llo_original>
